<compile_context>
chip_gen: v6e
topology: v6e:2x2x1
jax: 0.10.0
libtpu: 0.0.40
codegen_flags: <defaults>
</compile_context>

<pallas_src>
import functools
import math

import jax
import jax.numpy as jnp
from jax.experimental import pallas as pl
from jax.experimental.pallas import tpu as pltpu

DP = 128  # padded model width (lane-dense)
_VMEM = pl.BlockSpec(memory_space=pltpu.MemorySpace.VMEM)


# ----------------------------------------------------------------------------
# Pallas kernels
# ----------------------------------------------------------------------------

def _stable_softplus(y):
    # numerically stable softplus (+eps for strict positivity)
    return jnp.where(y > 20.0, y, jnp.log1p(jnp.exp(jnp.minimum(y, 20.0)))) + 1e-6


def _transformer_kernel(
        xe_ref, xd_ref,
        we_enc, be_enc, we_dec, be_dec,
        w_qkv, b_qkv, w_os, b_os,
        w_qc, b_qc, w_kvc, b_kvc, w_oc, b_oc,
        w_f1, b_f1, w_f2, b_f2,
        w_h, b_h,
        out_ref, *, c_out):
    """Fused transformer block. All tensors are 128-lane padded.

    xe [B,Ls,128], xd [B,Lt,128]; output [B,Lt,128] with cols [0,c_out)=mu,
    [c_out,2*c_out)=sigma (softplus applied), remaining columns zero.
    """
    B, Ls, D = xe_ref.shape
    _, Lt, _ = xd_ref.shape

    xe = xe_ref[...].reshape(B * Ls, D)
    xd = xd_ref[...].reshape(B * Lt, D)

    enc = jnp.dot(xe, we_enc[...], preferred_element_type=jnp.float32) + be_enc[...]
    dec = jnp.dot(xd, we_dec[...], preferred_element_type=jnp.float32) + be_dec[...]

    def _softmax_attn(q, k, v):
        s = jnp.einsum("bqd,bkd->bqk", q, k, preferred_element_type=jnp.float32)
        m = s.max(axis=-1, keepdims=True)
        p = jnp.exp(s - m)
        p = p * pl.reciprocal(p.sum(axis=-1, keepdims=True), approx=True)
        return jnp.einsum("bqk,bkd->bqd", p, v, preferred_element_type=jnp.float32)

    # --- encoder self-attention + residual (scale folded into q slice of w_qkv) ---
    qkv = jnp.dot(enc, w_qkv[...], preferred_element_type=jnp.float32) + b_qkv[...]
    q = qkv[:, 0:D].reshape(B, Ls, D)
    k = qkv[:, D:2 * D].reshape(B, Ls, D)
    v = qkv[:, 2 * D:3 * D].reshape(B, Ls, D)
    attn = _softmax_attn(q, k, v).reshape(B * Ls, D)
    enc = enc + jnp.dot(attn, w_os[...], preferred_element_type=jnp.float32) + b_os[...]

    # --- decoder cross-attention + residual ---
    qc = (jnp.dot(dec, w_qc[...], preferred_element_type=jnp.float32)
          + b_qc[...]).reshape(B, Lt, D)
    kv = jnp.dot(enc, w_kvc[...], preferred_element_type=jnp.float32) + b_kvc[...]
    kc = kv[:, 0:D].reshape(B, Ls, D)
    vc = kv[:, D:2 * D].reshape(B, Ls, D)
    attn = _softmax_attn(qc, kc, vc).reshape(B * Lt, D)
    h = dec + jnp.dot(attn, w_oc[...], preferred_element_type=jnp.float32) + b_oc[...]

    # --- feed-forward + residual ---
    ff = jnp.maximum(
        jnp.dot(h, w_f1[...], preferred_element_type=jnp.float32) + b_f1[...], 0.0)
    h = h + jnp.dot(ff, w_f2[...], preferred_element_type=jnp.float32) + b_f2[...]

    # --- packed distribution heads (mu | sigma) with masked softplus epilogue ---
    y = jnp.dot(h, w_h[...], preferred_element_type=jnp.float32) + b_h[...]
    col = jax.lax.broadcasted_iota(jnp.int32, y.shape, 1)
    sig_mask = (col >= c_out) & (col < 2 * c_out)
    y = jnp.where(sig_mask, _stable_softplus(y), y)
    out_ref[...] = y.reshape(B, Lt, D).astype(out_ref.dtype)


def _generative_kernel(
        feat_ref, eps_ref,
        w_e1, b_e1, w_mu, b_mu, w_lv, b_lv,
        w_d1, b_d1, w_tr, b_tr, w_se, b_se,
        mu_ref, lv_ref, trend_ref, season_ref, seq_ref):
    """Fused VAE: encoder -> mu/logvar -> reparameterize -> decoder -> trend/season/sum.

    feat [Bp,128] (cols < feat_dim valid), eps [Bp,128] (cols < latent_dim valid,
    rest zero).  Outputs are 128-wide slabs; valid columns are sliced by the wrapper.
    """
    feat = feat_ref[...]
    h = jnp.maximum(
        jnp.dot(feat, w_e1[...], preferred_element_type=jnp.float32) + b_e1[...], 0.0)
    mu = jnp.dot(h, w_mu[...], preferred_element_type=jnp.float32) + b_mu[...]
    lv = jnp.dot(h, w_lv[...], preferred_element_type=jnp.float32) + b_lv[...]
    # reparameterization epilogue (padded cols: lv=0, eps=0, mu=0 -> z=0, exact)
    z = mu + jnp.exp(0.5 * lv) * eps_ref[...]
    h2 = jnp.maximum(
        jnp.dot(z, w_d1[...], preferred_element_type=jnp.float32) + b_d1[...], 0.0)
    trend = jnp.dot(h2, w_tr[...], preferred_element_type=jnp.float32) + b_tr[...]
    season = jnp.dot(h2, w_se[...], preferred_element_type=jnp.float32) + b_se[...]
    mu_ref[...] = mu
    lv_ref[...] = lv
    trend_ref[...] = trend
    season_ref[...] = season
    seq_ref[...] = trend + season  # recon_seq epilogue


# ----------------------------------------------------------------------------
# Model config, parameter init & packing
# ----------------------------------------------------------------------------

class Params:
    seq_len = 8          # length of src
    label_len = 4
    pred_len = 4         # tgt length = label_len + pred_len = 8
    enc_in = 4           # input channels
    mark_in = 4          # temporal-mark channels
    c_out = 4            # output channels of transformer heads
    d_model = 32
    d_ff = 64
    latent_dim = 16
    alpha = 0.5


def _dense_init(key, k_in, k_out, scale=0.1):
    kw, kb = jax.random.split(key)
    w = scale * jax.random.normal(kw, (k_in, k_out), dtype=jnp.float32)
    b = scale * jax.random.normal(kb, (k_out,), dtype=jnp.float32)
    return w, b


def init_model_params(key, p: Params):
    keys = jax.random.split(key, 20)
    params = {}
    params["enc_emb"] = _dense_init(keys[0], p.enc_in + p.mark_in, p.d_model)
    params["dec_emb"] = _dense_init(keys[1], p.enc_in + p.mark_in, p.d_model)
    params["self_q"] = _dense_init(keys[2], p.d_model, p.d_model)
    params["self_k"] = _dense_init(keys[3], p.d_model, p.d_model)
    params["self_v"] = _dense_init(keys[4], p.d_model, p.d_model)
    params["self_o"] = _dense_init(keys[5], p.d_model, p.d_model)
    params["cross_q"] = _dense_init(keys[6], p.d_model, p.d_model)
    params["cross_k"] = _dense_init(keys[7], p.d_model, p.d_model)
    params["cross_v"] = _dense_init(keys[8], p.d_model, p.d_model)
    params["cross_o"] = _dense_init(keys[9], p.d_model, p.d_model)
    params["ffn1"] = _dense_init(keys[10], p.d_model, p.d_ff)
    params["ffn2"] = _dense_init(keys[11], p.d_ff, p.d_model)
    params["head_mu"] = _dense_init(keys[12], p.d_model, p.c_out)
    params["head_sigma"] = _dense_init(keys[13], p.d_model, p.c_out)

    tgt_len = p.label_len + p.pred_len
    feat_dim = p.seq_len * p.enc_in + 2 * tgt_len * p.c_out
    params["gen_enc1"] = _dense_init(keys[14], feat_dim, p.d_model)
    params["gen_mu"] = _dense_init(keys[15], p.d_model, p.latent_dim)
    params["gen_logvar"] = _dense_init(keys[16], p.d_model, p.latent_dim)
    params["gen_dec1"] = _dense_init(keys[17], p.latent_dim, p.d_model)
    params["gen_trend"] = _dense_init(keys[18], p.d_model, p.seq_len * p.enc_in)
    params["gen_season"] = _dense_init(keys[19], p.d_model, p.seq_len * p.enc_in)
    return params


def _padw(w, kp=DP, np_=DP):
    K, N = w.shape
    return jnp.zeros((kp, np_), jnp.float32).at[:K, :N].set(w.astype(jnp.float32))


def _padb(b, np_=DP):
    N = b.shape[0]
    return jnp.zeros((1, np_), jnp.float32).at[0, :N].set(b.astype(jnp.float32))


def pack_params(params, p: Params):
    """Zero-pad / pack raw weights into 128-lane-dense, MXU-friendly slabs."""
    scale = 1.0 / math.sqrt(p.d_model)   # fold attention scale into W_q / b_q
    pk = {}
    pk["emb_enc_w"], pk["emb_enc_b"] = _padw(params["enc_emb"][0]), _padb(params["enc_emb"][1])
    pk["emb_dec_w"], pk["emb_dec_b"] = _padw(params["dec_emb"][0]), _padb(params["dec_emb"][1])

    wq, bq = params["self_q"]
    wk, bk = params["self_k"]
    wv, bv = params["self_v"]
    pk["qkv_self_w"] = jnp.concatenate([_padw(wq * scale), _padw(wk), _padw(wv)], axis=1)
    pk["qkv_self_b"] = jnp.concatenate([_padb(bq * scale), _padb(bk), _padb(bv)], axis=1)
    pk["o_self_w"], pk["o_self_b"] = _padw(params["self_o"][0]), _padb(params["self_o"][1])

    wq, bq = params["cross_q"]
    pk["q_cross_w"], pk["q_cross_b"] = _padw(wq * scale), _padb(bq * scale)
    wk, bk = params["cross_k"]
    wv, bv = params["cross_v"]
    pk["kv_cross_w"] = jnp.concatenate([_padw(wk), _padw(wv)], axis=1)
    pk["kv_cross_b"] = jnp.concatenate([_padb(bk), _padb(bv)], axis=1)
    pk["o_cross_w"], pk["o_cross_b"] = _padw(params["cross_o"][0]), _padb(params["cross_o"][1])

    pk["ffn1_w"], pk["ffn1_b"] = _padw(params["ffn1"][0]), _padb(params["ffn1"][1])
    pk["ffn2_w"], pk["ffn2_b"] = _padw(params["ffn2"][0]), _padb(params["ffn2"][1])

    w_mu, b_mu = params["head_mu"]
    w_sig, b_sig = params["head_sigma"]
    pk["heads_w"] = _padw(jnp.concatenate([w_mu, w_sig], axis=1))
    pk["heads_b"] = _padb(jnp.concatenate([b_mu, b_sig], axis=0))

    pk["gen_e1_w"], pk["gen_e1_b"] = _padw(params["gen_enc1"][0]), _padb(params["gen_enc1"][1])
    pk["gen_mu_w"], pk["gen_mu_b"] = _padw(params["gen_mu"][0]), _padb(params["gen_mu"][1])
    pk["gen_lv_w"], pk["gen_lv_b"] = _padw(params["gen_logvar"][0]), _padb(params["gen_logvar"][1])
    pk["gen_d1_w"], pk["gen_d1_b"] = _padw(params["gen_dec1"][0]), _padb(params["gen_dec1"][1])
    pk["gen_tr_w"], pk["gen_tr_b"] = _padw(params["gen_trend"][0]), _padb(params["gen_trend"][1])
    pk["gen_se_w"], pk["gen_se_b"] = _padw(params["gen_season"][0]), _padb(params["gen_season"][1])
    return pk


# ----------------------------------------------------------------------------
# Forward pass (2 pallas_calls total)
# ----------------------------------------------------------------------------

def model_forward(pk, src, src_mark, tgt, tgt_mark, eps, *, p: Params):
    B = src.shape[0]
    Lt = p.label_len + p.pred_len
    c_out = p.c_out

    # --- kernel 1: fused transformer block ---
    x_enc = jnp.concatenate([src, src_mark], axis=-1)
    x_dec = jnp.concatenate([tgt, tgt_mark], axis=-1)
    x_enc = jnp.pad(x_enc, ((0, 0), (0, 0), (0, DP - x_enc.shape[-1]))).astype(jnp.float32)
    x_dec = jnp.pad(x_dec, ((0, 0), (0, 0), (0, DP - x_dec.shape[-1]))).astype(jnp.float32)

    trans_args = [
        x_enc, x_dec,
        pk["emb_enc_w"], pk["emb_enc_b"], pk["emb_dec_w"], pk["emb_dec_b"],
        pk["qkv_self_w"], pk["qkv_self_b"], pk["o_self_w"], pk["o_self_b"],
        pk["q_cross_w"], pk["q_cross_b"], pk["kv_cross_w"], pk["kv_cross_b"],
        pk["o_cross_w"], pk["o_cross_b"],
        pk["ffn1_w"], pk["ffn1_b"], pk["ffn2_w"], pk["ffn2_b"],
        pk["heads_w"], pk["heads_b"],
    ]
    heads = pl.pallas_call(
        functools.partial(_transformer_kernel, c_out=c_out),
        out_shape=jax.ShapeDtypeStruct((B, Lt, DP), jnp.float32),
        in_specs=[_VMEM] * len(trans_args),
        out_specs=_VMEM,
    )(*trans_args)

    trans_mu = heads[..., :c_out]                    # [B, Lt, c_out]
    trans_sigma = heads[..., c_out:2 * c_out]        # [B, Lt, c_out]

    # --- kernel 2: fused generative VAE path ---
    Bp = 8  # pad tiny batch to a full sublane tile
    feat = jnp.concatenate(
        [src.reshape(B, -1), trans_mu.reshape(B, -1), trans_sigma.reshape(B, -1)], axis=-1)
    feat = jnp.pad(feat, ((0, Bp - B), (0, DP - feat.shape[-1]))).astype(jnp.float32)
    eps_p = jnp.pad(eps, ((0, Bp - B), (0, DP - eps.shape[-1]))).astype(jnp.float32)

    gen_args = [
        feat, eps_p,
        pk["gen_e1_w"], pk["gen_e1_b"], pk["gen_mu_w"], pk["gen_mu_b"],
        pk["gen_lv_w"], pk["gen_lv_b"], pk["gen_d1_w"], pk["gen_d1_b"],
        pk["gen_tr_w"], pk["gen_tr_b"], pk["gen_se_w"], pk["gen_se_b"],
    ]
    slab = jax.ShapeDtypeStruct((Bp, DP), jnp.float32)
    mu_s, lv_s, tr_s, se_s, seq_s = pl.pallas_call(
        _generative_kernel,
        out_shape=(slab, slab, slab, slab, slab),
        in_specs=[_VMEM] * len(gen_args),
        out_specs=(_VMEM, _VMEM, _VMEM, _VMEM, _VMEM),
    )(*gen_args)

    SE = p.seq_len * p.enc_in
    gen_mu = mu_s[:B, :p.latent_dim]
    gen_logvar = lv_s[:B, :p.latent_dim]
    recon_trend = tr_s[:B, :SE].reshape(src.shape)
    recon_season = se_s[:B, :SE].reshape(src.shape)
    recon_seq = seq_s[:B, :SE].reshape(src.shape)
    return (recon_seq, recon_trend, recon_season, trans_mu, trans_sigma, gen_mu, gen_logvar)


# ----------------------------------------------------------------------------
# main
# ----------------------------------------------------------------------------

if __name__ == "__main__":
    p = Params()
    key = jax.random.PRNGKey(0)
    k_params, k_src, k_srcm, k_tgt, k_tgtm, k_eps = jax.random.split(key, 6)

    raw_params = init_model_params(k_params, p)
    packed = pack_params(raw_params, p)

    B = 2
    Lt = p.label_len + p.pred_len
    src = jax.random.normal(k_src, (B, p.seq_len, p.enc_in), dtype=jnp.float32)
    src_mark = jax.random.normal(k_srcm, (B, p.seq_len, p.mark_in), dtype=jnp.float32)
    tgt = jax.random.normal(k_tgt, (B, Lt, p.enc_in), dtype=jnp.float32)
    tgt_mark = jax.random.normal(k_tgtm, (B, Lt, p.mark_in), dtype=jnp.float32)
    # deterministic reparameterization noise (torch's randn_like replaced by explicit eps)
    eps = jax.random.normal(k_eps, (B, p.latent_dim), dtype=jnp.float32)

    fwd = jax.jit(functools.partial(model_forward, p=p))
    outs = fwd(packed, src, src_mark, tgt, tgt_mark, eps)
    outs = jax.block_until_ready(outs)

    (recon_seq, recon_trend, recon_season, trans_mu, trans_sigma, gen_mu, gen_logvar) = outs
    assert recon_seq.shape == (B, p.seq_len, p.enc_in)
    assert recon_trend.shape == (B, p.seq_len, p.enc_in)
    assert recon_season.shape == (B, p.seq_len, p.enc_in)
    assert trans_mu.shape == (B, Lt, p.c_out)
    assert trans_sigma.shape == (B, Lt, p.c_out)
    assert bool(jnp.all(trans_sigma > 0.0))
    assert gen_mu.shape == (B, p.latent_dim)
    assert gen_logvar.shape == (B, p.latent_dim)
    assert all(bool(jnp.all(jnp.isfinite(o))) for o in outs)
    # recon_seq must equal trend + season (add is fused inside the kernel epilogue)
    assert bool(jnp.allclose(recon_seq, recon_trend + recon_season, atol=1e-5))

    # TODO(synk): TransformerModel / GenerativeModel definitions were not included in the
    # provided source; this reimplements the standard VarFormer structure deterministically.
    print("KERNEL_OK")
</pallas_src>

<mosaic_0001>
module attributes {stable_mosaic.version = 11 : i64} {
  func.func @_transformer_kernel(%arg0: memref<2x8x128xf32, #tpu.memory_space<vmem>>, %arg1: memref<2x8x128xf32, #tpu.memory_space<vmem>>, %arg2: memref<128x128xf32, #tpu.memory_space<vmem>>, %arg3: memref<1x128xf32, #tpu.memory_space<vmem>>, %arg4: memref<128x128xf32, #tpu.memory_space<vmem>>, %arg5: memref<1x128xf32, #tpu.memory_space<vmem>>, %arg6: memref<128x384xf32, #tpu.memory_space<vmem>>, %arg7: memref<1x384xf32, #tpu.memory_space<vmem>>, %arg8: memref<128x128xf32, #tpu.memory_space<vmem>>, %arg9: memref<1x128xf32, #tpu.memory_space<vmem>>, %arg10: memref<128x128xf32, #tpu.memory_space<vmem>>, %arg11: memref<1x128xf32, #tpu.memory_space<vmem>>, %arg12: memref<128x256xf32, #tpu.memory_space<vmem>>, %arg13: memref<1x256xf32, #tpu.memory_space<vmem>>, %arg14: memref<128x128xf32, #tpu.memory_space<vmem>>, %arg15: memref<1x128xf32, #tpu.memory_space<vmem>>, %arg16: memref<128x128xf32, #tpu.memory_space<vmem>>, %arg17: memref<1x128xf32, #tpu.memory_space<vmem>>, %arg18: memref<128x128xf32, #tpu.memory_space<vmem>>, %arg19: memref<1x128xf32, #tpu.memory_space<vmem>>, %arg20: memref<128x128xf32, #tpu.memory_space<vmem>>, %arg21: memref<1x128xf32, #tpu.memory_space<vmem>>, %arg22: memref<2x8x128xf32, #tpu.memory_space<vmem>>) attributes {dimension_semantics = [], scalar_prefetch = 0 : i64, scratch_operands = 0 : i64, tpu.core_type = #tpu.core_type<tc>} {
    %c0 = arith.constant 0 : index
    %c0_0 = arith.constant 0 : index
    %c0_1 = arith.constant 0 : index
    %0 = vector.load %arg0[%c0, %c0_0, %c0_1] : memref<2x8x128xf32, #tpu.memory_space<vmem>>, vector<2x8x128xf32>
    %1 = vector.shape_cast %0 : vector<2x8x128xf32> to vector<16x128xf32>
    %c0_2 = arith.constant 0 : index
    %c0_3 = arith.constant 0 : index
    %c0_4 = arith.constant 0 : index
    %2 = vector.load %arg1[%c0_2, %c0_3, %c0_4] : memref<2x8x128xf32, #tpu.memory_space<vmem>>, vector<2x8x128xf32>
    %3 = vector.shape_cast %2 : vector<2x8x128xf32> to vector<16x128xf32>
    %c0_5 = arith.constant 0 : index
    %c0_6 = arith.constant 0 : index
    %4 = vector.load %arg2[%c0_5, %c0_6] : memref<128x128xf32, #tpu.memory_space<vmem>>, vector<128x128xf32>
    %cst = arith.constant dense<0.000000e+00> : vector<16x128xf32>
    %5 = tpu.matmul %1, %4, %cst {dimension_numbers = #tpu.dot_dimension_numbers<[1], [0], [0], [1], [0, 0, 1, 1], [], []>} : vector<16x128xf32>, vector<128x128xf32>, vector<16x128xf32> -> vector<16x128xf32>
    %c0_7 = arith.constant 0 : index
    %c0_8 = arith.constant 0 : index
    %6 = vector.load %arg3[%c0_7, %c0_8] : memref<1x128xf32, #tpu.memory_space<vmem>>, vector<1x128xf32>
    %7 = vector.broadcast %6 : vector<1x128xf32> to vector<16x128xf32>
    %8 = arith.addf %5, %7 : vector<16x128xf32>
    %c0_9 = arith.constant 0 : index
    %c0_10 = arith.constant 0 : index
    %9 = vector.load %arg4[%c0_9, %c0_10] : memref<128x128xf32, #tpu.memory_space<vmem>>, vector<128x128xf32>
    %cst_11 = arith.constant dense<0.000000e+00> : vector<16x128xf32>
    %10 = tpu.matmul %3, %9, %cst_11 {dimension_numbers = #tpu.dot_dimension_numbers<[1], [0], [0], [1], [0, 0, 1, 1], [], []>} : vector<16x128xf32>, vector<128x128xf32>, vector<16x128xf32> -> vector<16x128xf32>
    %c0_12 = arith.constant 0 : index
    %c0_13 = arith.constant 0 : index
    %11 = vector.load %arg5[%c0_12, %c0_13] : memref<1x128xf32, #tpu.memory_space<vmem>>, vector<1x128xf32>
    %12 = vector.broadcast %11 : vector<1x128xf32> to vector<16x128xf32>
    %13 = arith.addf %10, %12 : vector<16x128xf32>
    %c0_14 = arith.constant 0 : index
    %c0_15 = arith.constant 0 : index
    %14 = vector.load %arg6[%c0_14, %c0_15] : memref<128x384xf32, #tpu.memory_space<vmem>>, vector<128x384xf32>
    %cst_16 = arith.constant dense<0.000000e+00> : vector<16x384xf32>
    %15 = tpu.matmul %8, %14, %cst_16 {dimension_numbers = #tpu.dot_dimension_numbers<[1], [0], [0], [1], [0, 0, 1, 1], [], []>} : vector<16x128xf32>, vector<128x384xf32>, vector<16x384xf32> -> vector<16x384xf32>
    %c0_17 = arith.constant 0 : index
    %c0_18 = arith.constant 0 : index
    %16 = vector.load %arg7[%c0_17, %c0_18] : memref<1x384xf32, #tpu.memory_space<vmem>>, vector<1x384xf32>
    %17 = vector.broadcast %16 : vector<1x384xf32> to vector<16x384xf32>
    %18 = arith.addf %15, %17 : vector<16x384xf32>
    %19 = vector.extract_strided_slice %18 {offsets = [0, 0], sizes = [16, 128], strides = [1, 1]} : vector<16x384xf32> to vector<16x128xf32>
    %20 = vector.shape_cast %19 : vector<16x128xf32> to vector<2x8x128xf32>
    %21 = vector.extract_strided_slice %18 {offsets = [0, 128], sizes = [16, 128], strides = [1, 1]} : vector<16x384xf32> to vector<16x128xf32>
    %22 = vector.shape_cast %21 : vector<16x128xf32> to vector<2x8x128xf32>
    %23 = vector.extract_strided_slice %18 {offsets = [0, 256], sizes = [16, 128], strides = [1, 1]} : vector<16x384xf32> to vector<16x128xf32>
    %24 = vector.shape_cast %23 : vector<16x128xf32> to vector<2x8x128xf32>
    "tpu.trace_start"() <{level = 10 : i32, message = "bqd,bkd->bqk"}> : () -> ()
    %cst_19 = arith.constant dense<0.000000e+00> : vector<2x8x8xf32>
    %25 = tpu.matmul %20, %22, %cst_19 {dimension_numbers = #tpu.dot_dimension_numbers<[2], [2], [1], [1], [0, 0, 0, 1, 1, 1], [0], [0]>} : vector<2x8x128xf32>, vector<2x8x128xf32>, vector<2x8x8xf32> -> vector<2x8x8xf32>
    "tpu.trace_stop"() : () -> ()
    %cst_20 = arith.constant dense<0xFF800000> : vector<2x8xf32>
    %26 = vector.multi_reduction <maximumf>, %25, %cst_20 [2] : vector<2x8x8xf32> to vector<2x8xf32>
    %27 = vector.shape_cast %26 : vector<2x8xf32> to vector<2x8x1xf32>
    %28 = vector.broadcast %27 : vector<2x8x1xf32> to vector<2x8x8xf32>
    %29 = arith.subf %25, %28 : vector<2x8x8xf32>
    %30 = math.exp %29 : vector<2x8x8xf32>
    %cst_21 = arith.constant dense<0.000000e+00> : vector<2x8xf32>
    %31 = vector.multi_reduction <add>, %30, %cst_21 [2] : vector<2x8x8xf32> to vector<2x8xf32>
    %32 = vector.shape_cast %31 : vector<2x8xf32> to vector<2x8x1xf32>
    %33 = tpu.reciprocal %32 {approx = true} : vector<2x8x1xf32> -> vector<2x8x1xf32>
    %34 = vector.broadcast %33 : vector<2x8x1xf32> to vector<2x8x8xf32>
    %35 = arith.mulf %30, %34 : vector<2x8x8xf32>
    "tpu.trace_start"() <{level = 10 : i32, message = "bqk,bkd->bqd"}> : () -> ()
    %cst_22 = arith.constant dense<0.000000e+00> : vector<2x8x128xf32>
    %36 = tpu.matmul %35, %24, %cst_22 {dimension_numbers = #tpu.dot_dimension_numbers<[2], [1], [1], [2], [0, 0, 0, 1, 1, 2], [0], [0]>} : vector<2x8x8xf32>, vector<2x8x128xf32>, vector<2x8x128xf32> -> vector<2x8x128xf32>
    "tpu.trace_stop"() : () -> ()
    %37 = vector.shape_cast %36 : vector<2x8x128xf32> to vector<16x128xf32>
    %c0_23 = arith.constant 0 : index
    %c0_24 = arith.constant 0 : index
    %38 = vector.load %arg8[%c0_23, %c0_24] : memref<128x128xf32, #tpu.memory_space<vmem>>, vector<128x128xf32>
    %cst_25 = arith.constant dense<0.000000e+00> : vector<16x128xf32>
    %39 = tpu.matmul %37, %38, %cst_25 {dimension_numbers = #tpu.dot_dimension_numbers<[1], [0], [0], [1], [0, 0, 1, 1], [], []>} : vector<16x128xf32>, vector<128x128xf32>, vector<16x128xf32> -> vector<16x128xf32>
    %40 = arith.addf %8, %39 : vector<16x128xf32>
    %c0_26 = arith.constant 0 : index
    %c0_27 = arith.constant 0 : index
    %41 = vector.load %arg9[%c0_26, %c0_27] : memref<1x128xf32, #tpu.memory_space<vmem>>, vector<1x128xf32>
    %42 = vector.broadcast %41 : vector<1x128xf32> to vector<16x128xf32>
    %43 = arith.addf %40, %42 : vector<16x128xf32>
    %c0_28 = arith.constant 0 : index
    %c0_29 = arith.constant 0 : index
    %44 = vector.load %arg10[%c0_28, %c0_29] : memref<128x128xf32, #tpu.memory_space<vmem>>, vector<128x128xf32>
    %cst_30 = arith.constant dense<0.000000e+00> : vector<16x128xf32>
    %45 = tpu.matmul %13, %44, %cst_30 {dimension_numbers = #tpu.dot_dimension_numbers<[1], [0], [0], [1], [0, 0, 1, 1], [], []>} : vector<16x128xf32>, vector<128x128xf32>, vector<16x128xf32> -> vector<16x128xf32>
    %c0_31 = arith.constant 0 : index
    %c0_32 = arith.constant 0 : index
    %46 = vector.load %arg11[%c0_31, %c0_32] : memref<1x128xf32, #tpu.memory_space<vmem>>, vector<1x128xf32>
    %47 = vector.broadcast %46 : vector<1x128xf32> to vector<16x128xf32>
    %48 = arith.addf %45, %47 : vector<16x128xf32>
    %49 = vector.shape_cast %48 : vector<16x128xf32> to vector<2x8x128xf32>
    %c0_33 = arith.constant 0 : index
    %c0_34 = arith.constant 0 : index
    %50 = vector.load %arg12[%c0_33, %c0_34] : memref<128x256xf32, #tpu.memory_space<vmem>>, vector<128x256xf32>
    %cst_35 = arith.constant dense<0.000000e+00> : vector<16x256xf32>
    %51 = tpu.matmul %43, %50, %cst_35 {dimension_numbers = #tpu.dot_dimension_numbers<[1], [0], [0], [1], [0, 0, 1, 1], [], []>} : vector<16x128xf32>, vector<128x256xf32>, vector<16x256xf32> -> vector<16x256xf32>
    %c0_36 = arith.constant 0 : index
    %c0_37 = arith.constant 0 : index
    %52 = vector.load %arg13[%c0_36, %c0_37] : memref<1x256xf32, #tpu.memory_space<vmem>>, vector<1x256xf32>
    %53 = vector.broadcast %52 : vector<1x256xf32> to vector<16x256xf32>
    %54 = arith.addf %51, %53 : vector<16x256xf32>
    %55 = vector.extract_strided_slice %54 {offsets = [0, 0], sizes = [16, 128], strides = [1, 1]} : vector<16x256xf32> to vector<16x128xf32>
    %56 = vector.shape_cast %55 : vector<16x128xf32> to vector<2x8x128xf32>
    %57 = vector.extract_strided_slice %54 {offsets = [0, 128], sizes = [16, 128], strides = [1, 1]} : vector<16x256xf32> to vector<16x128xf32>
    %58 = vector.shape_cast %57 : vector<16x128xf32> to vector<2x8x128xf32>
    "tpu.trace_start"() <{level = 10 : i32, message = "bqd,bkd->bqk"}> : () -> ()
    %cst_38 = arith.constant dense<0.000000e+00> : vector<2x8x8xf32>
    %59 = tpu.matmul %49, %56, %cst_38 {dimension_numbers = #tpu.dot_dimension_numbers<[2], [2], [1], [1], [0, 0, 0, 1, 1, 1], [0], [0]>} : vector<2x8x128xf32>, vector<2x8x128xf32>, vector<2x8x8xf32> -> vector<2x8x8xf32>
    "tpu.trace_stop"() : () -> ()
    %cst_39 = arith.constant dense<0xFF800000> : vector<2x8xf32>
    %60 = vector.multi_reduction <maximumf>, %59, %cst_39 [2] : vector<2x8x8xf32> to vector<2x8xf32>
    %61 = vector.shape_cast %60 : vector<2x8xf32> to vector<2x8x1xf32>
    %62 = vector.broadcast %61 : vector<2x8x1xf32> to vector<2x8x8xf32>
    %63 = arith.subf %59, %62 : vector<2x8x8xf32>
    %64 = math.exp %63 : vector<2x8x8xf32>
    %cst_40 = arith.constant dense<0.000000e+00> : vector<2x8xf32>
    %65 = vector.multi_reduction <add>, %64, %cst_40 [2] : vector<2x8x8xf32> to vector<2x8xf32>
    %66 = vector.shape_cast %65 : vector<2x8xf32> to vector<2x8x1xf32>
    %67 = tpu.reciprocal %66 {approx = true} : vector<2x8x1xf32> -> vector<2x8x1xf32>
    %68 = vector.broadcast %67 : vector<2x8x1xf32> to vector<2x8x8xf32>
    %69 = arith.mulf %64, %68 : vector<2x8x8xf32>
    "tpu.trace_start"() <{level = 10 : i32, message = "bqk,bkd->bqd"}> : () -> ()
    %cst_41 = arith.constant dense<0.000000e+00> : vector<2x8x128xf32>
    %70 = tpu.matmul %69, %58, %cst_41 {dimension_numbers = #tpu.dot_dimension_numbers<[2], [1], [1], [2], [0, 0, 0, 1, 1, 2], [0], [0]>} : vector<2x8x8xf32>, vector<2x8x128xf32>, vector<2x8x128xf32> -> vector<2x8x128xf32>
    "tpu.trace_stop"() : () -> ()
    %71 = vector.shape_cast %70 : vector<2x8x128xf32> to vector<16x128xf32>
    %c0_42 = arith.constant 0 : index
    %c0_43 = arith.constant 0 : index
    %72 = vector.load %arg14[%c0_42, %c0_43] : memref<128x128xf32, #tpu.memory_space<vmem>>, vector<128x128xf32>
    %cst_44 = arith.constant dense<0.000000e+00> : vector<16x128xf32>
    %73 = tpu.matmul %71, %72, %cst_44 {dimension_numbers = #tpu.dot_dimension_numbers<[1], [0], [0], [1], [0, 0, 1, 1], [], []>} : vector<16x128xf32>, vector<128x128xf32>, vector<16x128xf32> -> vector<16x128xf32>
    %74 = arith.addf %13, %73 : vector<16x128xf32>
    %c0_45 = arith.constant 0 : index
    %c0_46 = arith.constant 0 : index
    %75 = vector.load %arg15[%c0_45, %c0_46] : memref<1x128xf32, #tpu.memory_space<vmem>>, vector<1x128xf32>
    %76 = vector.broadcast %75 : vector<1x128xf32> to vector<16x128xf32>
    %77 = arith.addf %74, %76 : vector<16x128xf32>
    %c0_47 = arith.constant 0 : index
    %c0_48 = arith.constant 0 : index
    %78 = vector.load %arg16[%c0_47, %c0_48] : memref<128x128xf32, #tpu.memory_space<vmem>>, vector<128x128xf32>
    %cst_49 = arith.constant dense<0.000000e+00> : vector<16x128xf32>
    %79 = tpu.matmul %77, %78, %cst_49 {dimension_numbers = #tpu.dot_dimension_numbers<[1], [0], [0], [1], [0, 0, 1, 1], [], []>} : vector<16x128xf32>, vector<128x128xf32>, vector<16x128xf32> -> vector<16x128xf32>
    %c0_50 = arith.constant 0 : index
    %c0_51 = arith.constant 0 : index
    %80 = vector.load %arg17[%c0_50, %c0_51] : memref<1x128xf32, #tpu.memory_space<vmem>>, vector<1x128xf32>
    %81 = vector.broadcast %80 : vector<1x128xf32> to vector<16x128xf32>
    %82 = arith.addf %79, %81 : vector<16x128xf32>
    %cst_52 = arith.constant 0.000000e+00 : f32
    %83 = vector.broadcast %cst_52 : f32 to vector<16x128xf32>
    %84 = arith.maximumf %82, %83 : vector<16x128xf32>
    %c0_53 = arith.constant 0 : index
    %c0_54 = arith.constant 0 : index
    %85 = vector.load %arg18[%c0_53, %c0_54] : memref<128x128xf32, #tpu.memory_space<vmem>>, vector<128x128xf32>
    %cst_55 = arith.constant dense<0.000000e+00> : vector<16x128xf32>
    %86 = tpu.matmul %84, %85, %cst_55 {dimension_numbers = #tpu.dot_dimension_numbers<[1], [0], [0], [1], [0, 0, 1, 1], [], []>} : vector<16x128xf32>, vector<128x128xf32>, vector<16x128xf32> -> vector<16x128xf32>
    %87 = arith.addf %77, %86 : vector<16x128xf32>
    %c0_56 = arith.constant 0 : index
    %c0_57 = arith.constant 0 : index
    %88 = vector.load %arg19[%c0_56, %c0_57] : memref<1x128xf32, #tpu.memory_space<vmem>>, vector<1x128xf32>
    %89 = vector.broadcast %88 : vector<1x128xf32> to vector<16x128xf32>
    %90 = arith.addf %87, %89 : vector<16x128xf32>
    %c0_58 = arith.constant 0 : index
    %c0_59 = arith.constant 0 : index
    %91 = vector.load %arg20[%c0_58, %c0_59] : memref<128x128xf32, #tpu.memory_space<vmem>>, vector<128x128xf32>
    %cst_60 = arith.constant dense<0.000000e+00> : vector<16x128xf32>
    %92 = tpu.matmul %90, %91, %cst_60 {dimension_numbers = #tpu.dot_dimension_numbers<[1], [0], [0], [1], [0, 0, 1, 1], [], []>} : vector<16x128xf32>, vector<128x128xf32>, vector<16x128xf32> -> vector<16x128xf32>
    %c0_61 = arith.constant 0 : index
    %c0_62 = arith.constant 0 : index
    %93 = vector.load %arg21[%c0_61, %c0_62] : memref<1x128xf32, #tpu.memory_space<vmem>>, vector<1x128xf32>
    %94 = vector.broadcast %93 : vector<1x128xf32> to vector<16x128xf32>
    %95 = arith.addf %92, %94 : vector<16x128xf32>
    %96 = tpu.iota {dimensions = array<i32: 1>} : vector<16x128xi32>
    %c4_i32 = arith.constant 4 : i32
    %97 = vector.broadcast %c4_i32 : i32 to vector<16x128xi32>
    %98 = arith.cmpi sge, %96, %97 : vector<16x128xi32>
    %c8_i32 = arith.constant 8 : i32
    %99 = vector.broadcast %c8_i32 : i32 to vector<16x128xi32>
    %100 = arith.cmpi slt, %96, %99 : vector<16x128xi32>
    %101 = arith.andi %98, %100 : vector<16x128xi1>
    %cst_63 = arith.constant 2.000000e+01 : f32
    %102 = vector.broadcast %cst_63 : f32 to vector<16x128xf32>
    %103 = arith.cmpf ogt, %95, %102 : vector<16x128xf32>
    %cst_64 = arith.constant 2.000000e+01 : f32
    %104 = vector.broadcast %cst_64 : f32 to vector<16x128xf32>
    %105 = arith.minimumf %95, %104 : vector<16x128xf32>
    %106 = math.exp %105 : vector<16x128xf32>
    %107 = math.log1p %106 : vector<16x128xf32>
    %108 = arith.select %103, %95, %107 : vector<16x128xi1>, vector<16x128xf32>
    %cst_65 = arith.constant 9.99999997E-7 : f32
    %109 = vector.broadcast %cst_65 : f32 to vector<16x128xf32>
    %110 = arith.addf %108, %109 : vector<16x128xf32>
    %111 = arith.select %101, %110, %95 : vector<16x128xi1>, vector<16x128xf32>
    %112 = vector.shape_cast %111 : vector<16x128xf32> to vector<2x8x128xf32>
    %c0_66 = arith.constant 0 : index
    %c0_67 = arith.constant 0 : index
    %c0_68 = arith.constant 0 : index
    %113 = vector.load %arg22[%c0_66, %c0_67, %c0_68] : memref<2x8x128xf32, #tpu.memory_space<vmem>>, vector<2x8x128xf32>
    tpu.vector_store %arg22[%c0_66, %c0_67, %c0_68], %112 {strides = array<i32>} : memref<2x8x128xf32, #tpu.memory_space<vmem>>, vector<2x8x128xf32>,
    return
  }
}

module attributes {stable_mosaic.version = 11 : i64} {
  func.func @_generative_kernel(%arg0: memref<8x128xf32, #tpu.memory_space<vmem>>, %arg1: memref<8x128xf32, #tpu.memory_space<vmem>>, %arg2: memref<128x128xf32, #tpu.memory_space<vmem>>, %arg3: memref<1x128xf32, #tpu.memory_space<vmem>>, %arg4: memref<128x128xf32, #tpu.memory_space<vmem>>, %arg5: memref<1x128xf32, #tpu.memory_space<vmem>>, %arg6: memref<128x128xf32, #tpu.memory_space<vmem>>, %arg7: memref<1x128xf32, #tpu.memory_space<vmem>>, %arg8: memref<128x128xf32, #tpu.memory_space<vmem>>, %arg9: memref<1x128xf32, #tpu.memory_space<vmem>>, %arg10: memref<128x128xf32, #tpu.memory_space<vmem>>, %arg11: memref<1x128xf32, #tpu.memory_space<vmem>>, %arg12: memref<128x128xf32, #tpu.memory_space<vmem>>, %arg13: memref<1x128xf32, #tpu.memory_space<vmem>>, %arg14: memref<8x128xf32, #tpu.memory_space<vmem>>, %arg15: memref<8x128xf32, #tpu.memory_space<vmem>>, %arg16: memref<8x128xf32, #tpu.memory_space<vmem>>, %arg17: memref<8x128xf32, #tpu.memory_space<vmem>>, %arg18: memref<8x128xf32, #tpu.memory_space<vmem>>) attributes {dimension_semantics = [], scalar_prefetch = 0 : i64, scratch_operands = 0 : i64, tpu.core_type = #tpu.core_type<tc>} {
    %c0 = arith.constant 0 : index
    %c0_0 = arith.constant 0 : index
    %0 = vector.load %arg0[%c0, %c0_0] : memref<8x128xf32, #tpu.memory_space<vmem>>, vector<8x128xf32>
    %c0_1 = arith.constant 0 : index
    %c0_2 = arith.constant 0 : index
    %1 = vector.load %arg2[%c0_1, %c0_2] : memref<128x128xf32, #tpu.memory_space<vmem>>, vector<128x128xf32>
    %cst = arith.constant dense<0.000000e+00> : vector<8x128xf32>
    %2 = tpu.matmul %0, %1, %cst {dimension_numbers = #tpu.dot_dimension_numbers<[1], [0], [0], [1], [0, 0, 1, 1], [], []>} : vector<8x128xf32>, vector<128x128xf32>, vector<8x128xf32> -> vector<8x128xf32>
    %c0_3 = arith.constant 0 : index
    %c0_4 = arith.constant 0 : index
    %3 = vector.load %arg3[%c0_3, %c0_4] : memref<1x128xf32, #tpu.memory_space<vmem>>, vector<1x128xf32>
    %4 = vector.broadcast %3 : vector<1x128xf32> to vector<8x128xf32>
    %5 = arith.addf %2, %4 : vector<8x128xf32>
    %cst_5 = arith.constant 0.000000e+00 : f32
    %6 = vector.broadcast %cst_5 : f32 to vector<8x128xf32>
    %7 = arith.maximumf %5, %6 : vector<8x128xf32>
    %c0_6 = arith.constant 0 : index
    %c0_7 = arith.constant 0 : index
    %8 = vector.load %arg4[%c0_6, %c0_7] : memref<128x128xf32, #tpu.memory_space<vmem>>, vector<128x128xf32>
    %cst_8 = arith.constant dense<0.000000e+00> : vector<8x128xf32>
    %9 = tpu.matmul %7, %8, %cst_8 {dimension_numbers = #tpu.dot_dimension_numbers<[1], [0], [0], [1], [0, 0, 1, 1], [], []>} : vector<8x128xf32>, vector<128x128xf32>, vector<8x128xf32> -> vector<8x128xf32>
    %c0_9 = arith.constant 0 : index
    %c0_10 = arith.constant 0 : index
    %10 = vector.load %arg5[%c0_9, %c0_10] : memref<1x128xf32, #tpu.memory_space<vmem>>, vector<1x128xf32>
    %11 = vector.broadcast %10 : vector<1x128xf32> to vector<8x128xf32>
    %12 = arith.addf %9, %11 : vector<8x128xf32>
    %c0_11 = arith.constant 0 : index
    %c0_12 = arith.constant 0 : index
    %13 = vector.load %arg6[%c0_11, %c0_12] : memref<128x128xf32, #tpu.memory_space<vmem>>, vector<128x128xf32>
    %cst_13 = arith.constant dense<0.000000e+00> : vector<8x128xf32>
    %14 = tpu.matmul %7, %13, %cst_13 {dimension_numbers = #tpu.dot_dimension_numbers<[1], [0], [0], [1], [0, 0, 1, 1], [], []>} : vector<8x128xf32>, vector<128x128xf32>, vector<8x128xf32> -> vector<8x128xf32>
    %c0_14 = arith.constant 0 : index
    %c0_15 = arith.constant 0 : index
    %15 = vector.load %arg7[%c0_14, %c0_15] : memref<1x128xf32, #tpu.memory_space<vmem>>, vector<1x128xf32>
    %16 = vector.broadcast %15 : vector<1x128xf32> to vector<8x128xf32>
    %17 = arith.addf %14, %16 : vector<8x128xf32>
    %cst_16 = arith.constant 5.000000e-01 : f32
    %18 = vector.broadcast %cst_16 : f32 to vector<8x128xf32>
    %19 = arith.mulf %18, %17 : vector<8x128xf32>
    %20 = math.exp %19 : vector<8x128xf32>
    %c0_17 = arith.constant 0 : index
    %c0_18 = arith.constant 0 : index
    %21 = vector.load %arg1[%c0_17, %c0_18] : memref<8x128xf32, #tpu.memory_space<vmem>>, vector<8x128xf32>
    %22 = arith.mulf %20, %21 : vector<8x128xf32>
    %23 = arith.addf %12, %22 : vector<8x128xf32>
    %c0_19 = arith.constant 0 : index
    %c0_20 = arith.constant 0 : index
    %24 = vector.load %arg8[%c0_19, %c0_20] : memref<128x128xf32, #tpu.memory_space<vmem>>, vector<128x128xf32>
    %cst_21 = arith.constant dense<0.000000e+00> : vector<8x128xf32>
    %25 = tpu.matmul %23, %24, %cst_21 {dimension_numbers = #tpu.dot_dimension_numbers<[1], [0], [0], [1], [0, 0, 1, 1], [], []>} : vector<8x128xf32>, vector<128x128xf32>, vector<8x128xf32> -> vector<8x128xf32>
    %c0_22 = arith.constant 0 : index
    %c0_23 = arith.constant 0 : index
    %26 = vector.load %arg9[%c0_22, %c0_23] : memref<1x128xf32, #tpu.memory_space<vmem>>, vector<1x128xf32>
    %27 = vector.broadcast %26 : vector<1x128xf32> to vector<8x128xf32>
    %28 = arith.addf %25, %27 : vector<8x128xf32>
    %cst_24 = arith.constant 0.000000e+00 : f32
    %29 = vector.broadcast %cst_24 : f32 to vector<8x128xf32>
    %30 = arith.maximumf %28, %29 : vector<8x128xf32>
    %c0_25 = arith.constant 0 : index
    %c0_26 = arith.constant 0 : index
    %31 = vector.load %arg10[%c0_25, %c0_26] : memref<128x128xf32, #tpu.memory_space<vmem>>, vector<128x128xf32>
    %cst_27 = arith.constant dense<0.000000e+00> : vector<8x128xf32>
    %32 = tpu.matmul %30, %31, %cst_27 {dimension_numbers = #tpu.dot_dimension_numbers<[1], [0], [0], [1], [0, 0, 1, 1], [], []>} : vector<8x128xf32>, vector<128x128xf32>, vector<8x128xf32> -> vector<8x128xf32>
    %c0_28 = arith.constant 0 : index
    %c0_29 = arith.constant 0 : index
    %33 = vector.load %arg11[%c0_28, %c0_29] : memref<1x128xf32, #tpu.memory_space<vmem>>, vector<1x128xf32>
    %34 = vector.broadcast %33 : vector<1x128xf32> to vector<8x128xf32>
    %35 = arith.addf %32, %34 : vector<8x128xf32>
    %c0_30 = arith.constant 0 : index
    %c0_31 = arith.constant 0 : index
    %36 = vector.load %arg12[%c0_30, %c0_31] : memref<128x128xf32, #tpu.memory_space<vmem>>, vector<128x128xf32>
    %cst_32 = arith.constant dense<0.000000e+00> : vector<8x128xf32>
    %37 = tpu.matmul %30, %36, %cst_32 {dimension_numbers = #tpu.dot_dimension_numbers<[1], [0], [0], [1], [0, 0, 1, 1], [], []>} : vector<8x128xf32>, vector<128x128xf32>, vector<8x128xf32> -> vector<8x128xf32>
    %c0_33 = arith.constant 0 : index
    %c0_34 = arith.constant 0 : index
    %38 = vector.load %arg13[%c0_33, %c0_34] : memref<1x128xf32, #tpu.memory_space<vmem>>, vector<1x128xf32>
    %39 = vector.broadcast %38 : vector<1x128xf32> to vector<8x128xf32>
    %40 = arith.addf %37, %39 : vector<8x128xf32>
    %c0_35 = arith.constant 0 : index
    %c0_36 = arith.constant 0 : index
    %41 = vector.load %arg14[%c0_35, %c0_36] : memref<8x128xf32, #tpu.memory_space<vmem>>, vector<8x128xf32>
    tpu.vector_store %arg14[%c0_35, %c0_36], %12 {strides = array<i32>} : memref<8x128xf32, #tpu.memory_space<vmem>>, vector<8x128xf32>,
    %c0_37 = arith.constant 0 : index
    %c0_38 = arith.constant 0 : index
    %42 = vector.load %arg15[%c0_37, %c0_38] : memref<8x128xf32, #tpu.memory_space<vmem>>, vector<8x128xf32>
    tpu.vector_store %arg15[%c0_37, %c0_38], %17 {strides = array<i32>} : memref<8x128xf32, #tpu.memory_space<vmem>>, vector<8x128xf32>,
    %c0_39 = arith.constant 0 : index
    %c0_40 = arith.constant 0 : index
    %43 = vector.load %arg16[%c0_39, %c0_40] : memref<8x128xf32, #tpu.memory_space<vmem>>, vector<8x128xf32>
    tpu.vector_store %arg16[%c0_39, %c0_40], %35 {strides = array<i32>} : memref<8x128xf32, #tpu.memory_space<vmem>>, vector<8x128xf32>,
    %c0_41 = arith.constant 0 : index
    %c0_42 = arith.constant 0 : index
    %44 = vector.load %arg17[%c0_41, %c0_42] : memref<8x128xf32, #tpu.memory_space<vmem>>, vector<8x128xf32>
    tpu.vector_store %arg17[%c0_41, %c0_42], %40 {strides = array<i32>} : memref<8x128xf32, #tpu.memory_space<vmem>>, vector<8x128xf32>,
    %45 = arith.addf %35, %40 : vector<8x128xf32>
    %c0_43 = arith.constant 0 : index
    %c0_44 = arith.constant 0 : index
    %46 = vector.load %arg18[%c0_43, %c0_44] : memref<8x128xf32, #tpu.memory_space<vmem>>, vector<8x128xf32>
    tpu.vector_store %arg18[%c0_43, %c0_44], %45 {strides = array<i32>} : memref<8x128xf32, #tpu.memory_space<vmem>>, vector<8x128xf32>,
    return
  }
}

</mosaic_0001>

<llo_original>
// kernel: model_forward.3
$region0: #{model_forward.3}
  #allocation0 [shape = 'u32[]', space=smem, size = 0x4, offset = 0x4, fixed_abs, tag = 'smem constant byte address 0x4 - core index']
  #allocation1 [shape = 'u32[144,128]{1,0:T(1,128)}', space=vmem, size = 0x12000, scoped, tag = 'internal scratch']
  %s0 = inlined_call_operand.vmem [shape: f32[8,128], index: 0, kind: input, shape index: {}]
  %s1 = inlined_call_operand.vmem [shape: f32[8,128], index: 1, kind: input, shape index: {}]
  %s2 = inlined_call_operand.vmem [shape: f32[128,128], index: 2, kind: input, shape index: {}]
  %s3 = inlined_call_operand.vmem [shape: f32[1,128], index: 3, kind: input, shape index: {}]
  %s4 = inlined_call_operand.vmem [shape: f32[128,128], index: 4, kind: input, shape index: {}]
  %s5 = inlined_call_operand.vmem [shape: f32[1,128], index: 5, kind: input, shape index: {}]
  %s6 = inlined_call_operand.vmem [shape: f32[128,128], index: 6, kind: input, shape index: {}]
  %s7 = inlined_call_operand.vmem [shape: f32[1,128], index: 7, kind: input, shape index: {}]
  %s8 = inlined_call_operand.vmem [shape: f32[128,128], index: 8, kind: input, shape index: {}]
  %s9 = inlined_call_operand.vmem [shape: f32[1,128], index: 9, kind: input, shape index: {}]
  %s10 = inlined_call_operand.vmem [shape: f32[128,128], index: 10, kind: input, shape index: {}]
  %s11 = inlined_call_operand.vmem [shape: f32[1,128], index: 11, kind: input, shape index: {}]
  %s12 = inlined_call_operand.vmem [shape: f32[128,128], index: 12, kind: input, shape index: {}]
  %s13 = inlined_call_operand.vmem [shape: f32[1,128], index: 13, kind: input, shape index: {}]
  %s14 = inlined_call_operand.vmem [shape: f32[8,128], index: 14, kind: output, shape index: {0}]
  %s15 = inlined_call_operand.vmem [shape: f32[8,128], index: 15, kind: output, shape index: {1}]
  %s16 = inlined_call_operand.vmem [shape: f32[8,128], index: 16, kind: output, shape index: {2}]
  %s17 = inlined_call_operand.vmem [shape: f32[8,128], index: 17, kind: output, shape index: {3}]
  %s18 = inlined_call_operand.vmem [shape: f32[8,128], index: 18, kind: output, shape index: {4}]
  %19 = xla_tuple %s14, %s15, %s16, %s17, %s18
  %s20 = sld [smem:[#allocation0]]
  $region98: #{model_forward.3} parent=0
    _
  %s22 = ssub.s32 1, %s20
  %s23 = scalar_select 0, %s22, %s20
  // Predicated region
  $region2: #{model_forward.3} parent=0 // pred_check
    _
  $region3: #{model_forward.3} parent=0 // pred_check_branch
    %25 = sbr.rel (0) target = $region5
  $region4: #{model_forward.3} parent=0 // pred_region
    _
  $region5: #{model_forward.3} parent=0 // pred_fallthru
    _
  // Predicated region
  $region6: #{model_forward.3} parent=0 // pred_check
    _
  $region7: #{model_forward.3} parent=0 // pred_check_branch
    %27 = sbr.rel (0) target = $region9
  $region8: #{model_forward.3} parent=0 // pred_region
    _
  $region9: #{model_forward.3} parent=0 // pred_fallthru
    _
  // Predicated region
  $region10: #{model_forward.3} parent=0 // pred_check
    _
  $region11: #{model_forward.3} parent=0 // pred_check_branch
    %29 = sbr.rel (0) target = $region13
  $region12: #{model_forward.3} parent=0 // pred_region
    _
  $region13: #{model_forward.3} parent=0 // pred_fallthru
    _
  // Predicated region
  $region14: #{model_forward.3} parent=0 // pred_check
    _
  $region15: #{model_forward.3} parent=0 // pred_check_branch
    %31 = sbr.rel (0) target = $region17
  $region16: #{model_forward.3} parent=0 // pred_region
    _
  $region17: #{model_forward.3} parent=0 // pred_fallthru
    _
  // Predicated region
  $region18: #{model_forward.3} parent=0 // pred_check
    _
  $region19: #{model_forward.3} parent=0 // pred_check_branch
    %33 = sbr.rel (0) target = $region21
  $region20: #{model_forward.3} parent=0 // pred_region
    _
  $region21: #{model_forward.3} parent=0 // pred_fallthru
    _
  // Predicated region
  $region22: #{model_forward.3} parent=0 // pred_check
    _
  $region23: #{model_forward.3} parent=0 // pred_check_branch
    %35 = sbr.rel (0) target = $region25
  $region24: #{model_forward.3} parent=0 // pred_region
    _
  $region25: #{model_forward.3} parent=0 // pred_fallthru
    _
  // Predicated region
  $region26: #{model_forward.3} parent=0 // pred_check
    _
  $region27: #{model_forward.3} parent=0 // pred_check_branch
    %37 = sbr.rel (0) target = $region29
  $region28: #{model_forward.3} parent=0 // pred_region
    _
  $region29: #{model_forward.3} parent=0 // pred_fallthru
    _
  // Predicated region
  $region30: #{model_forward.3} parent=0 // pred_check
    _
  $region31: #{model_forward.3} parent=0 // pred_check_branch
    %39 = sbr.rel (0) target = $region33
  $region32: #{model_forward.3} parent=0 // pred_region
    _
  $region33: #{model_forward.3} parent=0 // pred_fallthru
    _
  // Predicated region
  $region34: #{model_forward.3} parent=0 // pred_check
    _
  $region35: #{model_forward.3} parent=0 // pred_check_branch
    %41 = sbr.rel (0) target = $region37
  $region36: #{model_forward.3} parent=0 // pred_region
    _
  $region37: #{model_forward.3} parent=0 // pred_fallthru
    _
  // Predicated region
  $region38: #{model_forward.3} parent=0 // pred_check
    _
  $region39: #{model_forward.3} parent=0 // pred_check_branch
    %43 = sbr.rel (0) target = $region41
  $region40: #{model_forward.3} parent=0 // pred_region
    _
  $region41: #{model_forward.3} parent=0 // pred_fallthru
    _
  // Predicated region
  $region42: #{model_forward.3} parent=0 // pred_check
    _
  $region43: #{model_forward.3} parent=0 // pred_check_branch
    %45 = sbr.rel (0) target = $region45
  $region44: #{model_forward.3} parent=0 // pred_region
    _
  $region45: #{model_forward.3} parent=0 // pred_fallthru
    _
  // Predicated region
  $region46: #{model_forward.3} parent=0 // pred_check
    _
  $region47: #{model_forward.3} parent=0 // pred_check_branch
    %47 = sbr.rel (0) target = $region49
  $region48: #{model_forward.3} parent=0 // pred_region
    _
  $region49: #{model_forward.3} parent=0 // pred_fallthru
    _
  // Predicated region
  $region50: #{model_forward.3} parent=0 // pred_check
    _
  $region51: #{model_forward.3} parent=0 // pred_check_branch
    %49 = sbr.rel (0) target = $region53
  $region52: #{model_forward.3} parent=0 // pred_region
    _
  $region53: #{model_forward.3} parent=0 // pred_fallthru
    _
  // Predicated region
  $region54: #{model_forward.3} parent=0 // pred_check
    _
  $region55: #{model_forward.3} parent=0 // pred_check_branch
    %51 = sbr.rel (0) target = $region57
  $region56: #{model_forward.3} parent=0 // pred_region
    _
  $region57: #{model_forward.3} parent=0 // pred_fallthru
    _
  %v52 = vld [vmem:[%s0] sm:$0xff]
  %v53 = vld [vmem:[%s2] sm:$0xff]
  %v54 = vld [vmem:[%s2 + $0x8] sm:$0xff]
  %v55 = vld [vmem:[%s2 + $0x10] sm:$0xff]
  %v56 = vld [vmem:[%s2 + $0x18] sm:$0xff]
  %v57 = vld [vmem:[%s2 + $0x20] sm:$0xff]
  %v58 = vld [vmem:[%s2 + $0x28] sm:$0xff]
  %v59 = vld [vmem:[%s2 + $0x30] sm:$0xff]
  %v60 = vld [vmem:[%s2 + $0x38] sm:$0xff]
  %v61 = vld [vmem:[%s2 + $0x40] sm:$0xff]
  %v62 = vld [vmem:[%s2 + $0x48] sm:$0xff]
  %v63 = vld [vmem:[%s2 + $0x50] sm:$0xff]
  %v64 = vld [vmem:[%s2 + $0x58] sm:$0xff]
  %v65 = vld [vmem:[%s2 + $0x60] sm:$0xff]
  %v66 = vld [vmem:[%s2 + $0x68] sm:$0xff]
  %v67 = vld [vmem:[%s2 + $0x70] sm:$0xff]
  %v68 = vld [vmem:[%s2 + $0x78] sm:$0xff]
  %v69 = vld [vmem:[%s3] sm:$0x1]
  %v71 = vlaneseq
  %v72 = vshrl.u32 %v71, 7
  %v73 = vsub.s32 0, %v72
  %v74 = vrot.slane %v69, %v73
  %76 = vmatprep.subr.mxu0 0.0
  %77 = vmatpush1.msra.mxu0 %v68
  %78 = vmatprep.subr.mxu0 0.0
  %79 = vmatpush1.msra.mxu0 %v67
  %80 = vmatprep.subr.mxu0 0.0
  %81 = vmatpush1.msra.mxu0 %v66
  %82 = vmatprep.subr.mxu0 0.0
  %83 = vmatpush1.msra.mxu0 %v65
  %84 = vmatprep.subr.mxu0 0.0
  %85 = vmatpush1.msra.mxu0 %v64
  %86 = vmatprep.subr.mxu0 0.0
  %87 = vmatpush1.msra.mxu0 %v63
  %88 = vmatprep.subr.mxu0 0.0
  %89 = vmatpush1.msra.mxu0 %v62
  %90 = vmatprep.subr.mxu0 0.0
  %91 = vmatpush1.msra.mxu0 %v61
  %92 = vmatprep.subr.mxu0 0.0
  %93 = vmatpush1.msra.mxu0 %v60
  %94 = vmatprep.subr.mxu0 0.0
  %95 = vmatpush1.msra.mxu0 %v59
  %96 = vmatprep.subr.mxu0 0.0
  %97 = vmatpush1.msra.mxu0 %v58
  %98 = vmatprep.subr.mxu0 0.0
  %99 = vmatpush1.msra.mxu0 %v57
  %100 = vmatprep.subr.mxu0 0.0
  %101 = vmatpush1.msra.mxu0 %v56
  %102 = vmatprep.subr.mxu0 0.0
  %103 = vmatpush1.msra.mxu0 %v55
  %104 = vmatprep.subr.mxu0 0.0
  %105 = vmatpush1.msra.mxu0 %v54
  %106 = vmatprep.subr.mxu0 0.0
  %107 = vmatpush1.msra.mxu0 %v53
  %108 = vmatprep.subr.mxu0 0.0
  %109 = vmatpush2.msra.mxu0 0.0
  %110 = vmatprep.subr.mxu0 0.0
  %111 = vmatpush2.msra.mxu0 0.0
  %112 = vmatprep.subr.mxu0 0.0
  %113 = vmatpush2.msra.mxu0 0.0
  %114 = vmatprep.subr.mxu0 0.0
  %115 = vmatpush2.msra.mxu0 0.0
  %116 = vmatprep.subr.mxu0 0.0
  %117 = vmatpush2.msra.mxu0 0.0
  %118 = vmatprep.subr.mxu0 0.0
  %119 = vmatpush2.msra.mxu0 0.0
  %120 = vmatprep.subr.mxu0 0.0
  %121 = vmatpush2.msra.mxu0 0.0
  %122 = vmatprep.subr.mxu0 0.0
  %123 = vmatpush2.msra.mxu0 0.0
  %124 = vmatprep.subr.mxu0 0.0
  %125 = vmatpush2.msra.mxu0 0.0
  %126 = vmatprep.subr.mxu0 0.0
  %127 = vmatpush2.msra.mxu0 0.0
  %128 = vmatprep.subr.mxu0 0.0
  %129 = vmatpush2.msra.mxu0 0.0
  %130 = vmatprep.subr.mxu0 0.0
  %131 = vmatpush2.msra.mxu0 0.0
  %132 = vmatprep.subr.mxu0 0.0
  %133 = vmatpush2.msra.mxu0 0.0
  %134 = vmatprep.subr.mxu0 0.0
  %135 = vmatpush2.msra.mxu0 0.0
  %136 = vmatprep.subr.mxu0 0.0
  %137 = vmatpush2.msra.mxu0 0.0
  %138 = vmatprep.subr.mxu0 0.0
  %139 = vmatpush2.msra.mxu0 0.0
  %140 = vmatprep.mubr.f32.mxu0 0.0
  %141 = vmatmul.mubr.f32.gmra.mxu0 %v52
  %v142 = vpop.f32.mrf.mxu0
  %v143 = vadd.f32 %v74, %v142
  %v144 = vpop.f32.mrf.mxu0
  %145 = vdwg.mxu0
  %v146 = vmax.f32 %v143, 0.0
  %v147 = vld [vmem:[%s4] sm:$0xff]
  %v148 = vld [vmem:[%s4 + $0x8] sm:$0xff]
  %v149 = vld [vmem:[%s4 + $0x10] sm:$0xff]
  %v150 = vld [vmem:[%s4 + $0x18] sm:$0xff]
  %v151 = vld [vmem:[%s4 + $0x20] sm:$0xff]
  %v152 = vld [vmem:[%s4 + $0x28] sm:$0xff]
  %v153 = vld [vmem:[%s4 + $0x30] sm:$0xff]
  %v154 = vld [vmem:[%s4 + $0x38] sm:$0xff]
  %v155 = vld [vmem:[%s4 + $0x40] sm:$0xff]
  %v156 = vld [vmem:[%s4 + $0x48] sm:$0xff]
  %v157 = vld [vmem:[%s4 + $0x50] sm:$0xff]
  %v158 = vld [vmem:[%s4 + $0x58] sm:$0xff]
  %v159 = vld [vmem:[%s4 + $0x60] sm:$0xff]
  %v160 = vld [vmem:[%s4 + $0x68] sm:$0xff]
  %v161 = vld [vmem:[%s4 + $0x70] sm:$0xff]
  %v162 = vld [vmem:[%s4 + $0x78] sm:$0xff]
  %v163 = vld [vmem:[%s5] sm:$0x1]
  %v165 = vlaneseq
  %v166 = vshrl.u32 %v165, 7
  %v167 = vsub.s32 0, %v166
  %v168 = vrot.slane %v163, %v167
  %170 = vmatprep.subr.mxu0 0.0
  %171 = vmatpush1.msra.mxu0 %v162
  %172 = vmatprep.subr.mxu0 0.0
  %173 = vmatpush1.msra.mxu0 %v161
  %174 = vmatprep.subr.mxu0 0.0
  %175 = vmatpush1.msra.mxu0 %v160
  %176 = vmatprep.subr.mxu0 0.0
  %177 = vmatpush1.msra.mxu0 %v159
  %178 = vmatprep.subr.mxu0 0.0
  %179 = vmatpush1.msra.mxu0 %v158
  %180 = vmatprep.subr.mxu0 0.0
  %181 = vmatpush1.msra.mxu0 %v157
  %182 = vmatprep.subr.mxu0 0.0
  %183 = vmatpush1.msra.mxu0 %v156
  %184 = vmatprep.subr.mxu0 0.0
  %185 = vmatpush1.msra.mxu0 %v155
  %186 = vmatprep.subr.mxu0 0.0
  %187 = vmatpush1.msra.mxu0 %v154
  %188 = vmatprep.subr.mxu0 0.0
  %189 = vmatpush1.msra.mxu0 %v153
  %190 = vmatprep.subr.mxu0 0.0
  %191 = vmatpush1.msra.mxu0 %v152
  %192 = vmatprep.subr.mxu0 0.0
  %193 = vmatpush1.msra.mxu0 %v151
  %194 = vmatprep.subr.mxu0 0.0
  %195 = vmatpush1.msra.mxu0 %v150
  %196 = vmatprep.subr.mxu0 0.0
  %197 = vmatpush1.msra.mxu0 %v149
  %198 = vmatprep.subr.mxu0 0.0
  %199 = vmatpush1.msra.mxu0 %v148
  %200 = vmatprep.subr.mxu0 0.0
  %201 = vmatpush1.msra.mxu0 %v147
  %202 = vmatprep.subr.mxu0 0.0
  %203 = vmatpush2.msra.mxu0 0.0
  %204 = vmatprep.subr.mxu0 0.0
  %205 = vmatpush2.msra.mxu0 0.0
  %206 = vmatprep.subr.mxu0 0.0
  %207 = vmatpush2.msra.mxu0 0.0
  %208 = vmatprep.subr.mxu0 0.0
  %209 = vmatpush2.msra.mxu0 0.0
  %210 = vmatprep.subr.mxu0 0.0
  %211 = vmatpush2.msra.mxu0 0.0
  %212 = vmatprep.subr.mxu0 0.0
  %213 = vmatpush2.msra.mxu0 0.0
  %214 = vmatprep.subr.mxu0 0.0
  %215 = vmatpush2.msra.mxu0 0.0
  %216 = vmatprep.subr.mxu0 0.0
  %217 = vmatpush2.msra.mxu0 0.0
  %218 = vmatprep.subr.mxu0 0.0
  %219 = vmatpush2.msra.mxu0 0.0
  %220 = vmatprep.subr.mxu0 0.0
  %221 = vmatpush2.msra.mxu0 0.0
  %222 = vmatprep.subr.mxu0 0.0
  %223 = vmatpush2.msra.mxu0 0.0
  %224 = vmatprep.subr.mxu0 0.0
  %225 = vmatpush2.msra.mxu0 0.0
  %226 = vmatprep.subr.mxu0 0.0
  %227 = vmatpush2.msra.mxu0 0.0
  %228 = vmatprep.subr.mxu0 0.0
  %229 = vmatpush2.msra.mxu0 0.0
  %230 = vmatprep.subr.mxu0 0.0
  %231 = vmatpush2.msra.mxu0 0.0
  %232 = vmatprep.subr.mxu0 0.0
  %233 = vmatpush2.msra.mxu0 0.0
  %234 = vmatprep.mubr.f32.mxu0 0.0
  %235 = vmatmul.mubr.f32.gmra.mxu0 %v146
  %v236 = vpop.f32.mrf.mxu0
  %v237 = vadd.f32 %v168, %v236
  %v238 = vpop.f32.mrf.mxu0
  %239 = vdwg.mxu0
  %v240 = vld [vmem:[%s6] sm:$0xff]
  %v241 = vld [vmem:[%s6 + $0x8] sm:$0xff]
  %v242 = vld [vmem:[%s6 + $0x10] sm:$0xff]
  %v243 = vld [vmem:[%s6 + $0x18] sm:$0xff]
  %v244 = vld [vmem:[%s6 + $0x20] sm:$0xff]
  %v245 = vld [vmem:[%s6 + $0x28] sm:$0xff]
  %v246 = vld [vmem:[%s6 + $0x30] sm:$0xff]
  %v247 = vld [vmem:[%s6 + $0x38] sm:$0xff]
  %v248 = vld [vmem:[%s6 + $0x40] sm:$0xff]
  %v249 = vld [vmem:[%s6 + $0x48] sm:$0xff]
  %v250 = vld [vmem:[%s6 + $0x50] sm:$0xff]
  %v251 = vld [vmem:[%s6 + $0x58] sm:$0xff]
  %v252 = vld [vmem:[%s6 + $0x60] sm:$0xff]
  %v253 = vld [vmem:[%s6 + $0x68] sm:$0xff]
  %v254 = vld [vmem:[%s6 + $0x70] sm:$0xff]
  %v255 = vld [vmem:[%s6 + $0x78] sm:$0xff]
  %v256 = vld [vmem:[%s7] sm:$0x1]
  %v258 = vlaneseq
  %v259 = vshrl.u32 %v258, 7
  %v260 = vsub.s32 0, %v259
  %v261 = vrot.slane %v256, %v260
  %263 = vmatprep.subr.mxu0 0.0
  %264 = vmatpush1.msra.mxu0 %v255
  %265 = vmatprep.subr.mxu0 0.0
  %266 = vmatpush1.msra.mxu0 %v254
  %267 = vmatprep.subr.mxu0 0.0
  %268 = vmatpush1.msra.mxu0 %v253
  %269 = vmatprep.subr.mxu0 0.0
  %270 = vmatpush1.msra.mxu0 %v252
  %271 = vmatprep.subr.mxu0 0.0
  %272 = vmatpush1.msra.mxu0 %v251
  %273 = vmatprep.subr.mxu0 0.0
  %274 = vmatpush1.msra.mxu0 %v250
  %275 = vmatprep.subr.mxu0 0.0
  %276 = vmatpush1.msra.mxu0 %v249
  %277 = vmatprep.subr.mxu0 0.0
  %278 = vmatpush1.msra.mxu0 %v248
  %279 = vmatprep.subr.mxu0 0.0
  %280 = vmatpush1.msra.mxu0 %v247
  %281 = vmatprep.subr.mxu0 0.0
  %282 = vmatpush1.msra.mxu0 %v246
  %283 = vmatprep.subr.mxu0 0.0
  %284 = vmatpush1.msra.mxu0 %v245
  %285 = vmatprep.subr.mxu0 0.0
  %286 = vmatpush1.msra.mxu0 %v244
  %287 = vmatprep.subr.mxu0 0.0
  %288 = vmatpush1.msra.mxu0 %v243
  %289 = vmatprep.subr.mxu0 0.0
  %290 = vmatpush1.msra.mxu0 %v242
  %291 = vmatprep.subr.mxu0 0.0
  %292 = vmatpush1.msra.mxu0 %v241
  %293 = vmatprep.subr.mxu0 0.0
  %294 = vmatpush1.msra.mxu0 %v240
  %295 = vmatprep.subr.mxu0 0.0
  %296 = vmatpush2.msra.mxu0 0.0
  %297 = vmatprep.subr.mxu0 0.0
  %298 = vmatpush2.msra.mxu0 0.0
  %299 = vmatprep.subr.mxu0 0.0
  %300 = vmatpush2.msra.mxu0 0.0
  %301 = vmatprep.subr.mxu0 0.0
  %302 = vmatpush2.msra.mxu0 0.0
  %303 = vmatprep.subr.mxu0 0.0
  %304 = vmatpush2.msra.mxu0 0.0
  %305 = vmatprep.subr.mxu0 0.0
  %306 = vmatpush2.msra.mxu0 0.0
  %307 = vmatprep.subr.mxu0 0.0
  %308 = vmatpush2.msra.mxu0 0.0
  %309 = vmatprep.subr.mxu0 0.0
  %310 = vmatpush2.msra.mxu0 0.0
  %311 = vmatprep.subr.mxu0 0.0
  %312 = vmatpush2.msra.mxu0 0.0
  %313 = vmatprep.subr.mxu0 0.0
  %314 = vmatpush2.msra.mxu0 0.0
  %315 = vmatprep.subr.mxu0 0.0
  %316 = vmatpush2.msra.mxu0 0.0
  %317 = vmatprep.subr.mxu0 0.0
  %318 = vmatpush2.msra.mxu0 0.0
  %319 = vmatprep.subr.mxu0 0.0
  %320 = vmatpush2.msra.mxu0 0.0
  %321 = vmatprep.subr.mxu0 0.0
  %322 = vmatpush2.msra.mxu0 0.0
  %323 = vmatprep.subr.mxu0 0.0
  %324 = vmatpush2.msra.mxu0 0.0
  %325 = vmatprep.subr.mxu0 0.0
  %326 = vmatpush2.msra.mxu0 0.0
  %327 = vmatprep.mubr.f32.mxu0 0.0
  %328 = vmatmul.mubr.f32.gmra.mxu0 %v146
  %v329 = vpop.f32.mrf.mxu0
  %v330 = vadd.f32 %v261, %v329
  %v331 = vpop.f32.mrf.mxu0
  %332 = vdwg.mxu0
  %v333 = vmul.f32 %v330, 0.5
  %v334 = vmul.f32 %v333, 1.442695
  %v335 = vpow.pop %v334
  %v336 = vld [vmem:[%s1] sm:$0xff]
  %v337 = vmul.f32 %v335, %v336
  %v338 = vadd.f32 %v237, %v337
  %v339 = vld [vmem:[%s8] sm:$0xff]
  %v340 = vld [vmem:[%s8 + $0x8] sm:$0xff]
  %v341 = vld [vmem:[%s8 + $0x10] sm:$0xff]
  %v342 = vld [vmem:[%s8 + $0x18] sm:$0xff]
  %v343 = vld [vmem:[%s8 + $0x20] sm:$0xff]
  %v344 = vld [vmem:[%s8 + $0x28] sm:$0xff]
  %v345 = vld [vmem:[%s8 + $0x30] sm:$0xff]
  %v346 = vld [vmem:[%s8 + $0x38] sm:$0xff]
  %v347 = vld [vmem:[%s8 + $0x40] sm:$0xff]
  %v348 = vld [vmem:[%s8 + $0x48] sm:$0xff]
  %v349 = vld [vmem:[%s8 + $0x50] sm:$0xff]
  %v350 = vld [vmem:[%s8 + $0x58] sm:$0xff]
  %v351 = vld [vmem:[%s8 + $0x60] sm:$0xff]
  %v352 = vld [vmem:[%s8 + $0x68] sm:$0xff]
  %v353 = vld [vmem:[%s8 + $0x70] sm:$0xff]
  %v354 = vld [vmem:[%s8 + $0x78] sm:$0xff]
  %v355 = vld [vmem:[%s9] sm:$0x1]
  %v357 = vlaneseq
  %v358 = vshrl.u32 %v357, 7
  %v359 = vsub.s32 0, %v358
  %v360 = vrot.slane %v355, %v359
  %362 = vmatprep.subr.mxu0 0.0
  %363 = vmatpush1.msra.mxu0 %v354
  %364 = vmatprep.subr.mxu0 0.0
  %365 = vmatpush1.msra.mxu0 %v353
  %366 = vmatprep.subr.mxu0 0.0
  %367 = vmatpush1.msra.mxu0 %v352
  %368 = vmatprep.subr.mxu0 0.0
  %369 = vmatpush1.msra.mxu0 %v351
  %370 = vmatprep.subr.mxu0 0.0
  %371 = vmatpush1.msra.mxu0 %v350
  %372 = vmatprep.subr.mxu0 0.0
  %373 = vmatpush1.msra.mxu0 %v349
  %374 = vmatprep.subr.mxu0 0.0
  %375 = vmatpush1.msra.mxu0 %v348
  %376 = vmatprep.subr.mxu0 0.0
  %377 = vmatpush1.msra.mxu0 %v347
  %378 = vmatprep.subr.mxu0 0.0
  %379 = vmatpush1.msra.mxu0 %v346
  %380 = vmatprep.subr.mxu0 0.0
  %381 = vmatpush1.msra.mxu0 %v345
  %382 = vmatprep.subr.mxu0 0.0
  %383 = vmatpush1.msra.mxu0 %v344
  %384 = vmatprep.subr.mxu0 0.0
  %385 = vmatpush1.msra.mxu0 %v343
  %386 = vmatprep.subr.mxu0 0.0
  %387 = vmatpush1.msra.mxu0 %v342
  %388 = vmatprep.subr.mxu0 0.0
  %389 = vmatpush1.msra.mxu0 %v341
  %390 = vmatprep.subr.mxu0 0.0
  %391 = vmatpush1.msra.mxu0 %v340
  %392 = vmatprep.subr.mxu0 0.0
  %393 = vmatpush1.msra.mxu0 %v339
  %394 = vmatprep.subr.mxu0 0.0
  %395 = vmatpush2.msra.mxu0 0.0
  %396 = vmatprep.subr.mxu0 0.0
  %397 = vmatpush2.msra.mxu0 0.0
  %398 = vmatprep.subr.mxu0 0.0
  %399 = vmatpush2.msra.mxu0 0.0
  %400 = vmatprep.subr.mxu0 0.0
  %401 = vmatpush2.msra.mxu0 0.0
  %402 = vmatprep.subr.mxu0 0.0
  %403 = vmatpush2.msra.mxu0 0.0
  %404 = vmatprep.subr.mxu0 0.0
  %405 = vmatpush2.msra.mxu0 0.0
  %406 = vmatprep.subr.mxu0 0.0
  %407 = vmatpush2.msra.mxu0 0.0
  %408 = vmatprep.subr.mxu0 0.0
  %409 = vmatpush2.msra.mxu0 0.0
  %410 = vmatprep.subr.mxu0 0.0
  %411 = vmatpush2.msra.mxu0 0.0
  %412 = vmatprep.subr.mxu0 0.0
  %413 = vmatpush2.msra.mxu0 0.0
  %414 = vmatprep.subr.mxu0 0.0
  %415 = vmatpush2.msra.mxu0 0.0
  %416 = vmatprep.subr.mxu0 0.0
  %417 = vmatpush2.msra.mxu0 0.0
  %418 = vmatprep.subr.mxu0 0.0
  %419 = vmatpush2.msra.mxu0 0.0
  %420 = vmatprep.subr.mxu0 0.0
  %421 = vmatpush2.msra.mxu0 0.0
  %422 = vmatprep.subr.mxu0 0.0
  %423 = vmatpush2.msra.mxu0 0.0
  %424 = vmatprep.subr.mxu0 0.0
  %425 = vmatpush2.msra.mxu0 0.0
  %426 = vmatprep.mubr.f32.mxu0 0.0
  %427 = vmatmul.mubr.f32.gmra.mxu0 %v338
  %v428 = vpop.f32.mrf.mxu0
  %v429 = vadd.f32 %v360, %v428
  %v430 = vpop.f32.mrf.mxu0
  %431 = vdwg.mxu0
  %v432 = vmax.f32 %v429, 0.0
  %v433 = vld [vmem:[%s10] sm:$0xff]
  %v434 = vld [vmem:[%s10 + $0x8] sm:$0xff]
  %v435 = vld [vmem:[%s10 + $0x10] sm:$0xff]
  %v436 = vld [vmem:[%s10 + $0x18] sm:$0xff]
  %v437 = vld [vmem:[%s10 + $0x20] sm:$0xff]
  %v438 = vld [vmem:[%s10 + $0x28] sm:$0xff]
  %v439 = vld [vmem:[%s10 + $0x30] sm:$0xff]
  %v440 = vld [vmem:[%s10 + $0x38] sm:$0xff]
  %v441 = vld [vmem:[%s10 + $0x40] sm:$0xff]
  %v442 = vld [vmem:[%s10 + $0x48] sm:$0xff]
  %v443 = vld [vmem:[%s10 + $0x50] sm:$0xff]
  %v444 = vld [vmem:[%s10 + $0x58] sm:$0xff]
  %v445 = vld [vmem:[%s10 + $0x60] sm:$0xff]
  %v446 = vld [vmem:[%s10 + $0x68] sm:$0xff]
  %v447 = vld [vmem:[%s10 + $0x70] sm:$0xff]
  %v448 = vld [vmem:[%s10 + $0x78] sm:$0xff]
  %v449 = vld [vmem:[%s11] sm:$0x1]
  %v451 = vlaneseq
  %v452 = vshrl.u32 %v451, 7
  %v453 = vsub.s32 0, %v452
  %v454 = vrot.slane %v449, %v453
  %456 = vmatprep.subr.mxu0 0.0
  %457 = vmatpush1.msra.mxu0 %v448
  %458 = vmatprep.subr.mxu0 0.0
  %459 = vmatpush1.msra.mxu0 %v447
  %460 = vmatprep.subr.mxu0 0.0
  %461 = vmatpush1.msra.mxu0 %v446
  %462 = vmatprep.subr.mxu0 0.0
  %463 = vmatpush1.msra.mxu0 %v445
  %464 = vmatprep.subr.mxu0 0.0
  %465 = vmatpush1.msra.mxu0 %v444
  %466 = vmatprep.subr.mxu0 0.0
  %467 = vmatpush1.msra.mxu0 %v443
  %468 = vmatprep.subr.mxu0 0.0
  %469 = vmatpush1.msra.mxu0 %v442
  %470 = vmatprep.subr.mxu0 0.0
  %471 = vmatpush1.msra.mxu0 %v441
  %472 = vmatprep.subr.mxu0 0.0
  %473 = vmatpush1.msra.mxu0 %v440
  %474 = vmatprep.subr.mxu0 0.0
  %475 = vmatpush1.msra.mxu0 %v439
  %476 = vmatprep.subr.mxu0 0.0
  %477 = vmatpush1.msra.mxu0 %v438
  %478 = vmatprep.subr.mxu0 0.0
  %479 = vmatpush1.msra.mxu0 %v437
  %480 = vmatprep.subr.mxu0 0.0
  %481 = vmatpush1.msra.mxu0 %v436
  %482 = vmatprep.subr.mxu0 0.0
  %483 = vmatpush1.msra.mxu0 %v435
  %484 = vmatprep.subr.mxu0 0.0
  %485 = vmatpush1.msra.mxu0 %v434
  %486 = vmatprep.subr.mxu0 0.0
  %487 = vmatpush1.msra.mxu0 %v433
  %488 = vmatprep.subr.mxu0 0.0
  %489 = vmatpush2.msra.mxu0 0.0
  %490 = vmatprep.subr.mxu0 0.0
  %491 = vmatpush2.msra.mxu0 0.0
  %492 = vmatprep.subr.mxu0 0.0
  %493 = vmatpush2.msra.mxu0 0.0
  %494 = vmatprep.subr.mxu0 0.0
  %495 = vmatpush2.msra.mxu0 0.0
  %496 = vmatprep.subr.mxu0 0.0
  %497 = vmatpush2.msra.mxu0 0.0
  %498 = vmatprep.subr.mxu0 0.0
  %499 = vmatpush2.msra.mxu0 0.0
  %500 = vmatprep.subr.mxu0 0.0
  %501 = vmatpush2.msra.mxu0 0.0
  %502 = vmatprep.subr.mxu0 0.0
  %503 = vmatpush2.msra.mxu0 0.0
  %504 = vmatprep.subr.mxu0 0.0
  %505 = vmatpush2.msra.mxu0 0.0
  %506 = vmatprep.subr.mxu0 0.0
  %507 = vmatpush2.msra.mxu0 0.0
  %508 = vmatprep.subr.mxu0 0.0
  %509 = vmatpush2.msra.mxu0 0.0
  %510 = vmatprep.subr.mxu0 0.0
  %511 = vmatpush2.msra.mxu0 0.0
  %512 = vmatprep.subr.mxu0 0.0
  %513 = vmatpush2.msra.mxu0 0.0
  %514 = vmatprep.subr.mxu0 0.0
  %515 = vmatpush2.msra.mxu0 0.0
  %516 = vmatprep.subr.mxu0 0.0
  %517 = vmatpush2.msra.mxu0 0.0
  %518 = vmatprep.subr.mxu0 0.0
  %519 = vmatpush2.msra.mxu0 0.0
  %520 = vmatprep.mubr.f32.mxu0 0.0
  %521 = vmatmul.mubr.f32.gmra.mxu0 %v432
  %v522 = vpop.f32.mrf.mxu0
  %v523 = vadd.f32 %v454, %v522
  %v524 = vpop.f32.mrf.mxu0
  %525 = vdwg.mxu0
  %v526 = vld [vmem:[%s12] sm:$0xff]
  %v527 = vld [vmem:[%s12 + $0x8] sm:$0xff]
  %v528 = vld [vmem:[%s12 + $0x10] sm:$0xff]
  %v529 = vld [vmem:[%s12 + $0x18] sm:$0xff]
  %v530 = vld [vmem:[%s12 + $0x20] sm:$0xff]
  %v531 = vld [vmem:[%s12 + $0x28] sm:$0xff]
  %v532 = vld [vmem:[%s12 + $0x30] sm:$0xff]
  %v533 = vld [vmem:[%s12 + $0x38] sm:$0xff]
  %v534 = vld [vmem:[%s12 + $0x40] sm:$0xff]
  %v535 = vld [vmem:[%s12 + $0x48] sm:$0xff]
  %v536 = vld [vmem:[%s12 + $0x50] sm:$0xff]
  %v537 = vld [vmem:[%s12 + $0x58] sm:$0xff]
  %v538 = vld [vmem:[%s12 + $0x60] sm:$0xff]
  %v539 = vld [vmem:[%s12 + $0x68] sm:$0xff]
  %v540 = vld [vmem:[%s12 + $0x70] sm:$0xff]
  %v541 = vld [vmem:[%s12 + $0x78] sm:$0xff]
  %v542 = vld [vmem:[%s13] sm:$0x1]
  %v544 = vlaneseq
  %v545 = vshrl.u32 %v544, 7
  %v546 = vsub.s32 0, %v545
  %v547 = vrot.slane %v542, %v546
  %549 = vmatprep.subr.mxu0 0.0
  %550 = vmatpush1.msra.mxu0 %v541
  %551 = vmatprep.subr.mxu0 0.0
  %552 = vmatpush1.msra.mxu0 %v540
  %553 = vmatprep.subr.mxu0 0.0
  %554 = vmatpush1.msra.mxu0 %v539
  %555 = vmatprep.subr.mxu0 0.0
  %556 = vmatpush1.msra.mxu0 %v538
  %557 = vmatprep.subr.mxu0 0.0
  %558 = vmatpush1.msra.mxu0 %v537
  %559 = vmatprep.subr.mxu0 0.0
  %560 = vmatpush1.msra.mxu0 %v536
  %561 = vmatprep.subr.mxu0 0.0
  %562 = vmatpush1.msra.mxu0 %v535
  %563 = vmatprep.subr.mxu0 0.0
  %564 = vmatpush1.msra.mxu0 %v534
  %565 = vmatprep.subr.mxu0 0.0
  %566 = vmatpush1.msra.mxu0 %v533
  %567 = vmatprep.subr.mxu0 0.0
  %568 = vmatpush1.msra.mxu0 %v532
  %569 = vmatprep.subr.mxu0 0.0
  %570 = vmatpush1.msra.mxu0 %v531
  %571 = vmatprep.subr.mxu0 0.0
  %572 = vmatpush1.msra.mxu0 %v530
  %573 = vmatprep.subr.mxu0 0.0
  %574 = vmatpush1.msra.mxu0 %v529
  %575 = vmatprep.subr.mxu0 0.0
  %576 = vmatpush1.msra.mxu0 %v528
  %577 = vmatprep.subr.mxu0 0.0
  %578 = vmatpush1.msra.mxu0 %v527
  %579 = vmatprep.subr.mxu0 0.0
  %580 = vmatpush1.msra.mxu0 %v526
  %581 = vmatprep.subr.mxu0 0.0
  %582 = vmatpush2.msra.mxu0 0.0
  %583 = vmatprep.subr.mxu0 0.0
  %584 = vmatpush2.msra.mxu0 0.0
  %585 = vmatprep.subr.mxu0 0.0
  %586 = vmatpush2.msra.mxu0 0.0
  %587 = vmatprep.subr.mxu0 0.0
  %588 = vmatpush2.msra.mxu0 0.0
  %589 = vmatprep.subr.mxu0 0.0
  %590 = vmatpush2.msra.mxu0 0.0
  %591 = vmatprep.subr.mxu0 0.0
  %592 = vmatpush2.msra.mxu0 0.0
  %593 = vmatprep.subr.mxu0 0.0
  %594 = vmatpush2.msra.mxu0 0.0
  %595 = vmatprep.subr.mxu0 0.0
  %596 = vmatpush2.msra.mxu0 0.0
  %597 = vmatprep.subr.mxu0 0.0
  %598 = vmatpush2.msra.mxu0 0.0
  %599 = vmatprep.subr.mxu0 0.0
  %600 = vmatpush2.msra.mxu0 0.0
  %601 = vmatprep.subr.mxu0 0.0
  %602 = vmatpush2.msra.mxu0 0.0
  %603 = vmatprep.subr.mxu0 0.0
  %604 = vmatpush2.msra.mxu0 0.0
  %605 = vmatprep.subr.mxu0 0.0
  %606 = vmatpush2.msra.mxu0 0.0
  %607 = vmatprep.subr.mxu0 0.0
  %608 = vmatpush2.msra.mxu0 0.0
  %609 = vmatprep.subr.mxu0 0.0
  %610 = vmatpush2.msra.mxu0 0.0
  %611 = vmatprep.subr.mxu0 0.0
  %612 = vmatpush2.msra.mxu0 0.0
  %613 = vmatprep.mubr.f32.mxu0 0.0
  %614 = vmatmul.mubr.f32.gmra.mxu0 %v432
  %v615 = vpop.f32.mrf.mxu0
  %v616 = vadd.f32 %v547, %v615
  %v617 = vpop.f32.mrf.mxu0
  %618 = vdwg.mxu0
  %619 = vst [vmem:[%s14] sm:$0xff] %v237
  %620 = vst [vmem:[%s15] sm:$0xff] %v330
  %621 = vst [vmem:[%s16] sm:$0xff] %v523
  %622 = vst [vmem:[%s17] sm:$0xff] %v616
  %v623 = vadd.f32 %v523, %v616
  %624 = vst [vmem:[%s18] sm:$0xff] %v623
  // Predicated region
  $region58: #{model_forward.3} parent=0 // pred_check
    _
  $region59: #{model_forward.3} parent=0 // pred_check_branch
    %626 = sbr.rel (0) target = $region61
  $region60: #{model_forward.3} parent=0 // pred_region
    _
  $region61: #{model_forward.3} parent=0 // pred_fallthru
    _
  // Predicated region
  $region62: #{model_forward.3} parent=0 // pred_check
    _
  $region63: #{model_forward.3} parent=0 // pred_check_branch
    %628 = sbr.rel (0) target = $region65
  $region64: #{model_forward.3} parent=0 // pred_region
    _
  $region65: #{model_forward.3} parent=0 // pred_fallthru
    _
  // Predicated region
  $region66: #{model_forward.3} parent=0 // pred_check
    _
  $region67: #{model_forward.3} parent=0 // pred_check_branch
    %630 = sbr.rel (0) target = $region69
  $region68: #{model_forward.3} parent=0 // pred_region
    _
  $region69: #{model_forward.3} parent=0 // pred_fallthru
    _
  // Predicated region
  $region70: #{model_forward.3} parent=0 // pred_check
    _
  $region71: #{model_forward.3} parent=0 // pred_check_branch
    %632 = sbr.rel (0) target = $region73
  $region72: #{model_forward.3} parent=0 // pred_region
    _
  $region73: #{model_forward.3} parent=0 // pred_fallthru
    _
  // Predicated region
  $region74: #{model_forward.3} parent=0 // pred_check
    _
  $region75: #{model_forward.3} parent=0 // pred_check_branch
    %634 = sbr.rel (0) target = $region77
  $region76: #{model_forward.3} parent=0 // pred_region
    _
  $region77: #{model_forward.3} parent=0 // pred_fallthru
    _
  // Predicated region
  $region78: #{model_forward.3} parent=0 // pred_check
    _
  $region79: #{model_forward.3} parent=0 // pred_check_branch
    %636 = sbr.rel (0) target = $region81
  $region80: #{model_forward.3} parent=0 // pred_region
    _
  $region81: #{model_forward.3} parent=0 // pred_fallthru
    _
  // Predicated region
  $region82: #{model_forward.3} parent=0 // pred_check
    _
  $region83: #{model_forward.3} parent=0 // pred_check_branch
    %638 = sbr.rel (0) target = $region85
  $region84: #{model_forward.3} parent=0 // pred_region
    _
  $region85: #{model_forward.3} parent=0 // pred_fallthru
    _
  // Predicated region
  $region86: #{model_forward.3} parent=0 // pred_check
    _
  $region87: #{model_forward.3} parent=0 // pred_check_branch
    %640 = sbr.rel (0) target = $region89
  $region88: #{model_forward.3} parent=0 // pred_region
    _
  $region89: #{model_forward.3} parent=0 // pred_fallthru
    _
  // Predicated region
  $region90: #{model_forward.3} parent=0 // pred_check
    _
  $region91: #{model_forward.3} parent=0 // pred_check_branch
    %642 = sbr.rel (0) target = $region93
  $region92: #{model_forward.3} parent=0 // pred_region
    _
  $region93: #{model_forward.3} parent=0 // pred_fallthru
    _
  // Predicated region
  $region94: #{model_forward.3} parent=0 // pred_check
    _
  $region95: #{model_forward.3} parent=0 // pred_check_branch
    %644 = sbr.rel (0) target = $region97
  $region96: #{model_forward.3} parent=0 // pred_region
    _
  $region97: #{model_forward.3} parent=0 // pred_fallthru
    _

// kernel: model_forward.2
$region0: #{model_forward.2}
  #allocation0 [shape = 'u32[]', space=smem, size = 0x4, offset = 0x4, fixed_abs, tag = 'smem constant byte address 0x4 - core index']
  #allocation1 [shape = 'u32[144,128]{1,0:T(1,128)}', space=vmem, size = 0x12000, scoped, tag = 'internal scratch']
  %s0 = inlined_call_operand.vmem [shape: f32[2,8,128], index: 0, kind: input, shape index: {}]
  %s1 = inlined_call_operand.vmem [shape: f32[2,8,128], index: 1, kind: input, shape index: {}]
  %s2 = inlined_call_operand.vmem [shape: f32[128,128], index: 2, kind: input, shape index: {}]
  %s3 = inlined_call_operand.vmem [shape: f32[1,128], index: 3, kind: input, shape index: {}]
  %s4 = inlined_call_operand.hbm [shape: f32[128,128], index: 4, kind: input, shape index: {}]
  %s5 = inlined_call_operand.vmem [shape: f32[1,128], index: 5, kind: input, shape index: {}]
  %s6 = inlined_call_operand.hbm [shape: f32[128,384], index: 6, kind: input, shape index: {}]
  %s7 = inlined_call_operand.vmem [shape: f32[1,384], index: 7, kind: input, shape index: {}]
  %s8 = inlined_call_operand.hbm [shape: f32[128,128], index: 8, kind: input, shape index: {}]
  %s9 = inlined_call_operand.vmem [shape: f32[1,128], index: 9, kind: input, shape index: {}]
  %s10 = inlined_call_operand.hbm [shape: f32[128,128], index: 10, kind: input, shape index: {}]
  %s11 = inlined_call_operand.vmem [shape: f32[1,128], index: 11, kind: input, shape index: {}]
  %s12 = inlined_call_operand.hbm [shape: f32[128,256], index: 12, kind: input, shape index: {}]
  %s13 = inlined_call_operand.vmem [shape: f32[1,256], index: 13, kind: input, shape index: {}]
  %s14 = inlined_call_operand.hbm [shape: f32[128,128], index: 14, kind: input, shape index: {}]
  %s15 = inlined_call_operand.vmem [shape: f32[1,128], index: 15, kind: input, shape index: {}]
  %s16 = inlined_call_operand.hbm [shape: f32[128,128], index: 16, kind: input, shape index: {}]
  %s17 = inlined_call_operand.vmem [shape: f32[1,128], index: 17, kind: input, shape index: {}]
  %s18 = inlined_call_operand.hbm [shape: f32[128,128], index: 18, kind: input, shape index: {}]
  %s19 = inlined_call_operand.vmem [shape: f32[1,128], index: 19, kind: input, shape index: {}]
  %s20 = inlined_call_operand.hbm [shape: f32[128,128], index: 20, kind: input, shape index: {}]
  %s21 = inlined_call_operand.vmem [shape: f32[1,128], index: 21, kind: input, shape index: {}]
  %s22 = inlined_call_operand.vmem [shape: f32[2,8,128], index: 22, kind: output, shape index: {}]
  %s23 = sld [smem:[#allocation0]]
  $region134: #{model_forward.2} parent=0
    _
  %s25 = ssub.s32 1, %s23
  %s26 = scalar_select 0, %s25, %s23
  $region1: #{model_forward.2} parent=0
    #allocation2 [shape = 'u8[65536]{0}', space=vmem, size = 0x10000, scoped, tag = 'input window, operand 4, single buffered']
    #allocation3 [shape = 's32[1]{0}', space=sflag, size = 0x4, scoped, tag = 'scoped memory for model_forward.2']
    #allocation4 [shape = 'u8[196608]{0}', space=vmem, size = 0x30000, scoped, tag = 'input window, operand 6, single buffered']
    #allocation5 [shape = 's32[1]{0}', space=sflag, size = 0x4, scoped, tag = 'scoped memory for model_forward.2']
    #allocation6 [shape = 'u8[65536]{0}', space=vmem, size = 0x10000, scoped, tag = 'input window, operand 8, single buffered']
    #allocation7 [shape = 'u8[65536]{0}', space=vmem, size = 0x10000, scoped, tag = 'input window, operand 10, single buffered']
    #allocation8 [shape = 's32[1]{0}', space=sflag, size = 0x4, scoped, tag = 'scoped memory for model_forward.2']
    #allocation9 [shape = 'u8[131072]{0}', space=vmem, size = 0x20000, scoped, tag = 'input window, operand 12, single buffered']
    #allocation10 [shape = 'u8[65536]{0}', space=vmem, size = 0x10000, scoped, tag = 'input window, operand 14, single buffered']
    #allocation11 [shape = 's32[1]{0}', space=sflag, size = 0x4, scoped, tag = 'scoped memory for model_forward.2']
    #allocation12 [shape = 'u8[65536]{0}', space=vmem, size = 0x10000, scoped, tag = 'input window, operand 16, single buffered']
    #allocation13 [shape = 'u8[65536]{0}', space=vmem, size = 0x10000, scoped, tag = 'input window, operand 18, single buffered']
    #allocation14 [shape = 's32[1]{0}', space=sflag, size = 0x4, scoped, tag = 'scoped memory for model_forward.2']
    #allocation15 [shape = 'u8[65536]{0}', space=vmem, size = 0x10000, scoped, tag = 'input window, operand 20, single buffered']
    %27 = vsyncpa [#allocation3], 0
    %28 = vsyncpa [#allocation5], 0
    %29 = vsyncpa [#allocation8], 0
    %30 = vsyncpa [#allocation11], 0
    %31 = vsyncpa [#allocation14], 0
    // Predicated region
    $region2: #{model_forward.2} parent=1 // pred_check
      _
    $region3: #{model_forward.2} parent=1 // pred_check_branch
      %33 = sbr.rel (0) target = $region5
    $region4: #{model_forward.2} parent=1 // pred_region
      _
    $region5: #{model_forward.2} parent=1 // pred_fallthru
      _
    // Predicated region
    $region6: #{model_forward.2} parent=1 // pred_check
      _
    $region7: #{model_forward.2} parent=1 // pred_check_branch
      %35 = sbr.rel (0) target = $region9
    $region8: #{model_forward.2} parent=1 // pred_region
      _
    $region9: #{model_forward.2} parent=1 // pred_fallthru
      _
    // Predicated region
    $region10: #{model_forward.2} parent=1 // pred_check
      _
    $region11: #{model_forward.2} parent=1 // pred_check_branch
      %37 = sbr.rel (0) target = $region13
    $region12: #{model_forward.2} parent=1 // pred_region
      _
    $region13: #{model_forward.2} parent=1 // pred_fallthru
      _
    // Predicated region
    $region14: #{model_forward.2} parent=1 // pred_check
      _
    $region15: #{model_forward.2} parent=1 // pred_check_branch
      %39 = sbr.rel (0) target = $region17
    $region16: #{model_forward.2} parent=1 // pred_region
      _
    $region17: #{model_forward.2} parent=1 // pred_fallthru
      _
    // Predicated region
    $region18: #{model_forward.2} parent=1 // pred_check
      _
    $region19: #{model_forward.2} parent=1 // pred_check_branch
      %41 = sbr.rel (0) target = $region21
    $region20: #{model_forward.2} parent=1 // pred_region
      %s43 = ssub.s32 2048, 2048
      %44 = vsyncadd [#allocation3], %s43
      %s45 = sshll.u32 [#allocation2], 4
      %s46 = int_to_ptr.vmem [resolvable:$true] %s45
      %51 = dma.hbm_to_vmem [thread:$0]  %s4, 2048, %s46, [#allocation3], 128, 128, 8
    $region21: #{model_forward.2} parent=1 // pred_fallthru
      _
    // Predicated region
    $region22: #{model_forward.2} parent=1 // pred_check
      _
    $region23: #{model_forward.2} parent=1 // pred_check_branch
      %53 = sbr.rel (0) target = $region25
    $region24: #{model_forward.2} parent=1 // pred_region
      _
    $region25: #{model_forward.2} parent=1 // pred_fallthru
      _
    // Predicated region
    $region26: #{model_forward.2} parent=1 // pred_check
      _
    $region27: #{model_forward.2} parent=1 // pred_check_branch
      %55 = sbr.rel (0) target = $region29
    $region28: #{model_forward.2} parent=1 // pred_region
      %s57 = ssub.s32 6144, 6144
      %58 = vsyncadd [#allocation5], %s57
      %s59 = sshll.u32 [#allocation4], 4
      %s60 = int_to_ptr.vmem [resolvable:$true] %s59
      %65 = dma.hbm_to_vmem [thread:$0]  %s6, 6144, %s60, [#allocation5], 384, 384, 24
    $region29: #{model_forward.2} parent=1 // pred_fallthru
      _
    // Predicated region
    $region30: #{model_forward.2} parent=1 // pred_check
      _
    $region31: #{model_forward.2} parent=1 // pred_check_branch
      %67 = sbr.rel (0) target = $region33
    $region32: #{model_forward.2} parent=1 // pred_region
      _
    $region33: #{model_forward.2} parent=1 // pred_fallthru
      _
    // Predicated region
    $region34: #{model_forward.2} parent=1 // pred_check
      _
    $region35: #{model_forward.2} parent=1 // pred_check_branch
      %69 = sbr.rel (0) target = $region37
    $region36: #{model_forward.2} parent=1 // pred_region
      %s71 = ssub.s32 2048, 2048
      %72 = vsyncadd [#allocation5], %s71
      %s73 = sshll.u32 [#allocation6], 4
      %s74 = int_to_ptr.vmem [resolvable:$true] %s73
      %79 = dma.hbm_to_vmem [thread:$0]  %s8, 2048, %s74, [#allocation5], 128, 128, 8
    $region37: #{model_forward.2} parent=1 // pred_fallthru
      _
    // Predicated region
    $region38: #{model_forward.2} parent=1 // pred_check
      _
    $region39: #{model_forward.2} parent=1 // pred_check_branch
      %81 = sbr.rel (0) target = $region41
    $region40: #{model_forward.2} parent=1 // pred_region
      _
    $region41: #{model_forward.2} parent=1 // pred_fallthru
      _
    // Predicated region
    $region42: #{model_forward.2} parent=1 // pred_check
      _
    $region43: #{model_forward.2} parent=1 // pred_check_branch
      %83 = sbr.rel (0) target = $region45
    $region44: #{model_forward.2} parent=1 // pred_region
      %s85 = ssub.s32 2048, 2048
      %86 = vsyncadd [#allocation8], %s85
      %s87 = sshll.u32 [#allocation7], 4
      %s88 = int_to_ptr.vmem [resolvable:$true] %s87
      %93 = dma.hbm_to_vmem [thread:$0]  %s10, 2048, %s88, [#allocation8], 128, 128, 8
    $region45: #{model_forward.2} parent=1 // pred_fallthru
      _
    // Predicated region
    $region46: #{model_forward.2} parent=1 // pred_check
      _
    $region47: #{model_forward.2} parent=1 // pred_check_branch
      %95 = sbr.rel (0) target = $region49
    $region48: #{model_forward.2} parent=1 // pred_region
      _
    $region49: #{model_forward.2} parent=1 // pred_fallthru
      _
    // Predicated region
    $region50: #{model_forward.2} parent=1 // pred_check
      _
    $region51: #{model_forward.2} parent=1 // pred_check_branch
      %97 = sbr.rel (0) target = $region53
    $region52: #{model_forward.2} parent=1 // pred_region
      %s99 = ssub.s32 4096, 4096
      %100 = vsyncadd [#allocation8], %s99
      %s101 = sshll.u32 [#allocation9], 4
      %s102 = int_to_ptr.vmem [resolvable:$true] %s101
      %107 = dma.hbm_to_vmem [thread:$0]  %s12, 4096, %s102, [#allocation8], 256, 256, 16
    $region53: #{model_forward.2} parent=1 // pred_fallthru
      _
    // Predicated region
    $region54: #{model_forward.2} parent=1 // pred_check
      _
    $region55: #{model_forward.2} parent=1 // pred_check_branch
      %109 = sbr.rel (0) target = $region57
    $region56: #{model_forward.2} parent=1 // pred_region
      _
    $region57: #{model_forward.2} parent=1 // pred_fallthru
      _
    // Predicated region
    $region58: #{model_forward.2} parent=1 // pred_check
      _
    $region59: #{model_forward.2} parent=1 // pred_check_branch
      %111 = sbr.rel (0) target = $region61
    $region60: #{model_forward.2} parent=1 // pred_region
      %s113 = ssub.s32 2048, 2048
      %114 = vsyncadd [#allocation11], %s113
      %s115 = sshll.u32 [#allocation10], 4
      %s116 = int_to_ptr.vmem [resolvable:$true] %s115
      %121 = dma.hbm_to_vmem [thread:$0]  %s14, 2048, %s116, [#allocation11], 128, 128, 8
    $region61: #{model_forward.2} parent=1 // pred_fallthru
      _
    // Predicated region
    $region62: #{model_forward.2} parent=1 // pred_check
      _
    $region63: #{model_forward.2} parent=1 // pred_check_branch
      %123 = sbr.rel (0) target = $region65
    $region64: #{model_forward.2} parent=1 // pred_region
      _
    $region65: #{model_forward.2} parent=1 // pred_fallthru
      _
    // Predicated region
    $region66: #{model_forward.2} parent=1 // pred_check
      _
    $region67: #{model_forward.2} parent=1 // pred_check_branch
      %125 = sbr.rel (0) target = $region69
    $region68: #{model_forward.2} parent=1 // pred_region
      %s127 = ssub.s32 2048, 2048
      %128 = vsyncadd [#allocation11], %s127
      %s129 = sshll.u32 [#allocation12], 4
      %s130 = int_to_ptr.vmem [resolvable:$true] %s129
      %135 = dma.hbm_to_vmem [thread:$0]  %s16, 2048, %s130, [#allocation11], 128, 128, 8
    $region69: #{model_forward.2} parent=1 // pred_fallthru
      _
    // Predicated region
    $region70: #{model_forward.2} parent=1 // pred_check
      _
    $region71: #{model_forward.2} parent=1 // pred_check_branch
      %137 = sbr.rel (0) target = $region73
    $region72: #{model_forward.2} parent=1 // pred_region
      _
    $region73: #{model_forward.2} parent=1 // pred_fallthru
      _
    // Predicated region
    $region74: #{model_forward.2} parent=1 // pred_check
      _
    $region75: #{model_forward.2} parent=1 // pred_check_branch
      %139 = sbr.rel (0) target = $region77
    $region76: #{model_forward.2} parent=1 // pred_region
      %s141 = ssub.s32 2048, 2048
      %142 = vsyncadd [#allocation14], %s141
      %s143 = sshll.u32 [#allocation13], 4
      %s144 = int_to_ptr.vmem [resolvable:$true] %s143
      %149 = dma.hbm_to_vmem [thread:$0]  %s18, 2048, %s144, [#allocation14], 128, 128, 8
    $region77: #{model_forward.2} parent=1 // pred_fallthru
      _
    // Predicated region
    $region78: #{model_forward.2} parent=1 // pred_check
      _
    $region79: #{model_forward.2} parent=1 // pred_check_branch
      %151 = sbr.rel (0) target = $region81
    $region80: #{model_forward.2} parent=1 // pred_region
      _
    $region81: #{model_forward.2} parent=1 // pred_fallthru
      _
    // Predicated region
    $region82: #{model_forward.2} parent=1 // pred_check
      _
    $region83: #{model_forward.2} parent=1 // pred_check_branch
      %153 = sbr.rel (0) target = $region85
    $region84: #{model_forward.2} parent=1 // pred_region
      %s155 = ssub.s32 2048, 2048
      %156 = vsyncadd [#allocation14], %s155
      %s157 = sshll.u32 [#allocation15], 4
      %s158 = int_to_ptr.vmem [resolvable:$true] %s157
      %163 = dma.hbm_to_vmem [thread:$0]  %s20, 2048, %s158, [#allocation14], 128, 128, 8
    $region85: #{model_forward.2} parent=1 // pred_fallthru
      _
    // Predicated region
    $region86: #{model_forward.2} parent=1 // pred_check
      _
    $region87: #{model_forward.2} parent=1 // pred_check_branch
      %165 = sbr.rel (0) target = $region89
    $region88: #{model_forward.2} parent=1 // pred_region
      _
    $region89: #{model_forward.2} parent=1 // pred_fallthru
      _
    // Predicated region
    $region90: #{model_forward.2} parent=1 // pred_check
      _
    $region91: #{model_forward.2} parent=1 // pred_check_branch
      %167 = sbr.rel (0) target = $region93
    $region92: #{model_forward.2} parent=1 // pred_region
      %168 = dma.done [#allocation3], 2048
    $region93: #{model_forward.2} parent=1 // pred_fallthru
      _
    // Predicated region
    $region94: #{model_forward.2} parent=1 // pred_check
      _
    $region95: #{model_forward.2} parent=1 // pred_check_branch
      %170 = sbr.rel (0) target = $region97
    $region96: #{model_forward.2} parent=1 // pred_region
      %171 = dma.done [#allocation5], 6144
    $region97: #{model_forward.2} parent=1 // pred_fallthru
      _
    // Predicated region
    $region98: #{model_forward.2} parent=1 // pred_check
      _
    $region99: #{model_forward.2} parent=1 // pred_check_branch
      %173 = sbr.rel (0) target = $region101
    $region100: #{model_forward.2} parent=1 // pred_region
      %174 = dma.done [#allocation5], 2048
    $region101: #{model_forward.2} parent=1 // pred_fallthru
      _
    // Predicated region
    $region102: #{model_forward.2} parent=1 // pred_check
      _
    $region103: #{model_forward.2} parent=1 // pred_check_branch
      %176 = sbr.rel (0) target = $region105
    $region104: #{model_forward.2} parent=1 // pred_region
      %177 = dma.done [#allocation8], 2048
    $region105: #{model_forward.2} parent=1 // pred_fallthru
      _
    // Predicated region
    $region106: #{model_forward.2} parent=1 // pred_check
      _
    $region107: #{model_forward.2} parent=1 // pred_check_branch
      %179 = sbr.rel (0) target = $region109
    $region108: #{model_forward.2} parent=1 // pred_region
      %180 = dma.done [#allocation8], 4096
    $region109: #{model_forward.2} parent=1 // pred_fallthru
      _
    // Predicated region
    $region110: #{model_forward.2} parent=1 // pred_check
      _
    $region111: #{model_forward.2} parent=1 // pred_check_branch
      %182 = sbr.rel (0) target = $region113
    $region112: #{model_forward.2} parent=1 // pred_region
      %183 = dma.done [#allocation11], 2048
    $region113: #{model_forward.2} parent=1 // pred_fallthru
      _
    // Predicated region
    $region114: #{model_forward.2} parent=1 // pred_check
      _
    $region115: #{model_forward.2} parent=1 // pred_check_branch
      %185 = sbr.rel (0) target = $region117
    $region116: #{model_forward.2} parent=1 // pred_region
      %186 = dma.done [#allocation11], 2048
    $region117: #{model_forward.2} parent=1 // pred_fallthru
      _
    // Predicated region
    $region118: #{model_forward.2} parent=1 // pred_check
      _
    $region119: #{model_forward.2} parent=1 // pred_check_branch
      %188 = sbr.rel (0) target = $region121
    $region120: #{model_forward.2} parent=1 // pred_region
      %189 = dma.done [#allocation14], 2048
    $region121: #{model_forward.2} parent=1 // pred_fallthru
      _
    // Predicated region
    $region122: #{model_forward.2} parent=1 // pred_check
      _
    $region123: #{model_forward.2} parent=1 // pred_check_branch
      %191 = sbr.rel (0) target = $region125
    $region124: #{model_forward.2} parent=1 // pred_region
      %192 = dma.done [#allocation14], 2048
    $region125: #{model_forward.2} parent=1 // pred_fallthru
      _
    %v193 = vld [vmem:[%s0] sm:$0xff]
    %v194 = vld [vmem:[%s0 + $0x8] sm:$0xff]
    %v195 = vld [vmem:[%s1] sm:$0xff]
    %v196 = vld [vmem:[%s1 + $0x8] sm:$0xff]
    %v197 = vld [vmem:[%s2] sm:$0xff]
    %v198 = vld [vmem:[%s2 + $0x8] sm:$0xff]
    %v199 = vld [vmem:[%s2 + $0x10] sm:$0xff]
    %v200 = vld [vmem:[%s2 + $0x18] sm:$0xff]
    %v201 = vld [vmem:[%s2 + $0x20] sm:$0xff]
    %v202 = vld [vmem:[%s2 + $0x28] sm:$0xff]
    %v203 = vld [vmem:[%s2 + $0x30] sm:$0xff]
    %v204 = vld [vmem:[%s2 + $0x38] sm:$0xff]
    %v205 = vld [vmem:[%s2 + $0x40] sm:$0xff]
    %v206 = vld [vmem:[%s2 + $0x48] sm:$0xff]
    %v207 = vld [vmem:[%s2 + $0x50] sm:$0xff]
    %v208 = vld [vmem:[%s2 + $0x58] sm:$0xff]
    %v209 = vld [vmem:[%s2 + $0x60] sm:$0xff]
    %v210 = vld [vmem:[%s2 + $0x68] sm:$0xff]
    %v211 = vld [vmem:[%s2 + $0x70] sm:$0xff]
    %v212 = vld [vmem:[%s2 + $0x78] sm:$0xff]
    %v213 = vld [vmem:[%s3] sm:$0x1]
    %v215 = vlaneseq
    %v216 = vshrl.u32 %v215, 7
    %v217 = vsub.s32 0, %v216
    %v218 = vrot.slane %v213, %v217
    %220 = vmatprep.subr.mxu0 0.0
    %221 = vmatpush1.msra.mxu0 %v212
    %222 = vmatprep.subr.mxu0 0.0
    %223 = vmatpush1.msra.mxu0 %v211
    %224 = vmatprep.subr.mxu0 0.0
    %225 = vmatpush1.msra.mxu0 %v210
    %226 = vmatprep.subr.mxu0 0.0
    %227 = vmatpush1.msra.mxu0 %v209
    %228 = vmatprep.subr.mxu0 0.0
    %229 = vmatpush1.msra.mxu0 %v208
    %230 = vmatprep.subr.mxu0 0.0
    %231 = vmatpush1.msra.mxu0 %v207
    %232 = vmatprep.subr.mxu0 0.0
    %233 = vmatpush1.msra.mxu0 %v206
    %234 = vmatprep.subr.mxu0 0.0
    %235 = vmatpush1.msra.mxu0 %v205
    %236 = vmatprep.subr.mxu0 0.0
    %237 = vmatpush1.msra.mxu0 %v204
    %238 = vmatprep.subr.mxu0 0.0
    %239 = vmatpush1.msra.mxu0 %v203
    %240 = vmatprep.subr.mxu0 0.0
    %241 = vmatpush1.msra.mxu0 %v202
    %242 = vmatprep.subr.mxu0 0.0
    %243 = vmatpush1.msra.mxu0 %v201
    %244 = vmatprep.subr.mxu0 0.0
    %245 = vmatpush1.msra.mxu0 %v200
    %246 = vmatprep.subr.mxu0 0.0
    %247 = vmatpush1.msra.mxu0 %v199
    %248 = vmatprep.subr.mxu0 0.0
    %249 = vmatpush1.msra.mxu0 %v198
    %250 = vmatprep.subr.mxu0 0.0
    %251 = vmatpush1.msra.mxu0 %v197
    %252 = vmatprep.subr.mxu0 0.0
    %253 = vmatpush2.msra.mxu0 0.0
    %254 = vmatprep.subr.mxu0 0.0
    %255 = vmatpush2.msra.mxu0 0.0
    %256 = vmatprep.subr.mxu0 0.0
    %257 = vmatpush2.msra.mxu0 0.0
    %258 = vmatprep.subr.mxu0 0.0
    %259 = vmatpush2.msra.mxu0 0.0
    %260 = vmatprep.subr.mxu0 0.0
    %261 = vmatpush2.msra.mxu0 0.0
    %262 = vmatprep.subr.mxu0 0.0
    %263 = vmatpush2.msra.mxu0 0.0
    %264 = vmatprep.subr.mxu0 0.0
    %265 = vmatpush2.msra.mxu0 0.0
    %266 = vmatprep.subr.mxu0 0.0
    %267 = vmatpush2.msra.mxu0 0.0
    %268 = vmatprep.subr.mxu0 0.0
    %269 = vmatpush2.msra.mxu0 0.0
    %270 = vmatprep.subr.mxu0 0.0
    %271 = vmatpush2.msra.mxu0 0.0
    %272 = vmatprep.subr.mxu0 0.0
    %273 = vmatpush2.msra.mxu0 0.0
    %274 = vmatprep.subr.mxu0 0.0
    %275 = vmatpush2.msra.mxu0 0.0
    %276 = vmatprep.subr.mxu0 0.0
    %277 = vmatpush2.msra.mxu0 0.0
    %278 = vmatprep.subr.mxu0 0.0
    %279 = vmatpush2.msra.mxu0 0.0
    %280 = vmatprep.subr.mxu0 0.0
    %281 = vmatpush2.msra.mxu0 0.0
    %282 = vmatprep.subr.mxu0 0.0
    %283 = vmatpush2.msra.mxu0 0.0
    %284 = vmatprep.mubr.f32.mxu0 0.0
    %285 = vmatmul.mubr.f32.gmra.mxu0 %v193
    %v286 = vpop.f32.mrf.mxu0
    %v287 = vadd.f32 %v218, %v286
    %v288 = vpop.f32.mrf.mxu0
    %289 = vmatprep.mubr.f32.mxu0 0.0
    %290 = vmatmul.mubr.f32.gmra.mxu0 %v194
    %v291 = vpop.f32.mrf.mxu0
    %v292 = vadd.f32 %v218, %v291
    %v293 = vpop.f32.mrf.mxu0
    %294 = vdwg.mxu0
    %v295 = vld [vmem:[#allocation2] sm:$0xff]
    %v296 = vld [vmem:[#allocation2 + $0x8] sm:$0xff]
    %v297 = vld [vmem:[#allocation2 + $0x10] sm:$0xff]
    %v298 = vld [vmem:[#allocation2 + $0x18] sm:$0xff]
    %v299 = vld [vmem:[#allocation2 + $0x20] sm:$0xff]
    %v300 = vld [vmem:[#allocation2 + $0x28] sm:$0xff]
    %v301 = vld [vmem:[#allocation2 + $0x30] sm:$0xff]
    %v302 = vld [vmem:[#allocation2 + $0x38] sm:$0xff]
    %v303 = vld [vmem:[#allocation2 + $0x40] sm:$0xff]
    %v304 = vld [vmem:[#allocation2 + $0x48] sm:$0xff]
    %v305 = vld [vmem:[#allocation2 + $0x50] sm:$0xff]
    %v306 = vld [vmem:[#allocation2 + $0x58] sm:$0xff]
    %v307 = vld [vmem:[#allocation2 + $0x60] sm:$0xff]
    %v308 = vld [vmem:[#allocation2 + $0x68] sm:$0xff]
    %v309 = vld [vmem:[#allocation2 + $0x70] sm:$0xff]
    %v310 = vld [vmem:[#allocation2 + $0x78] sm:$0xff]
    %v311 = vld [vmem:[%s5] sm:$0x1]
    %v313 = vlaneseq
    %v314 = vshrl.u32 %v313, 7
    %v315 = vsub.s32 0, %v314
    %v316 = vrot.slane %v311, %v315
    %318 = vmatprep.subr.mxu0 0.0
    %319 = vmatpush1.msra.mxu0 %v310
    %320 = vmatprep.subr.mxu0 0.0
    %321 = vmatpush1.msra.mxu0 %v309
    %322 = vmatprep.subr.mxu0 0.0
    %323 = vmatpush1.msra.mxu0 %v308
    %324 = vmatprep.subr.mxu0 0.0
    %325 = vmatpush1.msra.mxu0 %v307
    %326 = vmatprep.subr.mxu0 0.0
    %327 = vmatpush1.msra.mxu0 %v306
    %328 = vmatprep.subr.mxu0 0.0
    %329 = vmatpush1.msra.mxu0 %v305
    %330 = vmatprep.subr.mxu0 0.0
    %331 = vmatpush1.msra.mxu0 %v304
    %332 = vmatprep.subr.mxu0 0.0
    %333 = vmatpush1.msra.mxu0 %v303
    %334 = vmatprep.subr.mxu0 0.0
    %335 = vmatpush1.msra.mxu0 %v302
    %336 = vmatprep.subr.mxu0 0.0
    %337 = vmatpush1.msra.mxu0 %v301
    %338 = vmatprep.subr.mxu0 0.0
    %339 = vmatpush1.msra.mxu0 %v300
    %340 = vmatprep.subr.mxu0 0.0
    %341 = vmatpush1.msra.mxu0 %v299
    %342 = vmatprep.subr.mxu0 0.0
    %343 = vmatpush1.msra.mxu0 %v298
    %344 = vmatprep.subr.mxu0 0.0
    %345 = vmatpush1.msra.mxu0 %v297
    %346 = vmatprep.subr.mxu0 0.0
    %347 = vmatpush1.msra.mxu0 %v296
    %348 = vmatprep.subr.mxu0 0.0
    %349 = vmatpush1.msra.mxu0 %v295
    %350 = vmatprep.subr.mxu0 0.0
    %351 = vmatpush2.msra.mxu0 0.0
    %352 = vmatprep.subr.mxu0 0.0
    %353 = vmatpush2.msra.mxu0 0.0
    %354 = vmatprep.subr.mxu0 0.0
    %355 = vmatpush2.msra.mxu0 0.0
    %356 = vmatprep.subr.mxu0 0.0
    %357 = vmatpush2.msra.mxu0 0.0
    %358 = vmatprep.subr.mxu0 0.0
    %359 = vmatpush2.msra.mxu0 0.0
    %360 = vmatprep.subr.mxu0 0.0
    %361 = vmatpush2.msra.mxu0 0.0
    %362 = vmatprep.subr.mxu0 0.0
    %363 = vmatpush2.msra.mxu0 0.0
    %364 = vmatprep.subr.mxu0 0.0
    %365 = vmatpush2.msra.mxu0 0.0
    %366 = vmatprep.subr.mxu0 0.0
    %367 = vmatpush2.msra.mxu0 0.0
    %368 = vmatprep.subr.mxu0 0.0
    %369 = vmatpush2.msra.mxu0 0.0
    %370 = vmatprep.subr.mxu0 0.0
    %371 = vmatpush2.msra.mxu0 0.0
    %372 = vmatprep.subr.mxu0 0.0
    %373 = vmatpush2.msra.mxu0 0.0
    %374 = vmatprep.subr.mxu0 0.0
    %375 = vmatpush2.msra.mxu0 0.0
    %376 = vmatprep.subr.mxu0 0.0
    %377 = vmatpush2.msra.mxu0 0.0
    %378 = vmatprep.subr.mxu0 0.0
    %379 = vmatpush2.msra.mxu0 0.0
    %380 = vmatprep.subr.mxu0 0.0
    %381 = vmatpush2.msra.mxu0 0.0
    %382 = vmatprep.mubr.f32.mxu0 0.0
    %383 = vmatmul.mubr.f32.gmra.mxu0 %v195
    %v384 = vpop.f32.mrf.mxu0
    %v385 = vadd.f32 %v316, %v384
    %v386 = vpop.f32.mrf.mxu0
    %387 = vmatprep.mubr.f32.mxu0 0.0
    %388 = vmatmul.mubr.f32.gmra.mxu0 %v196
    %v389 = vpop.f32.mrf.mxu0
    %v390 = vadd.f32 %v316, %v389
    %v391 = vpop.f32.mrf.mxu0
    %392 = vdwg.mxu0
    %v393 = vld [vmem:[#allocation4] sm:$0xff]
    %v394 = vld [vmem:[#allocation4 + $0x8] sm:$0xff]
    %v395 = vld [vmem:[#allocation4 + $0x10] sm:$0xff]
    %v396 = vld [vmem:[#allocation4 + $0x18] sm:$0xff]
    %v397 = vld [vmem:[#allocation4 + $0x20] sm:$0xff]
    %v398 = vld [vmem:[#allocation4 + $0x28] sm:$0xff]
    %v399 = vld [vmem:[#allocation4 + $0x30] sm:$0xff]
    %v400 = vld [vmem:[#allocation4 + $0x38] sm:$0xff]
    %v401 = vld [vmem:[#allocation4 + $0x40] sm:$0xff]
    %v402 = vld [vmem:[#allocation4 + $0x48] sm:$0xff]
    %v403 = vld [vmem:[#allocation4 + $0x50] sm:$0xff]
    %v404 = vld [vmem:[#allocation4 + $0x58] sm:$0xff]
    %v405 = vld [vmem:[#allocation4 + $0x60] sm:$0xff]
    %v406 = vld [vmem:[#allocation4 + $0x68] sm:$0xff]
    %v407 = vld [vmem:[#allocation4 + $0x70] sm:$0xff]
    %v408 = vld [vmem:[#allocation4 + $0x78] sm:$0xff]
    %v409 = vld [vmem:[#allocation4 + $0x80] sm:$0xff]
    %v410 = vld [vmem:[#allocation4 + $0x88] sm:$0xff]
    %v411 = vld [vmem:[#allocation4 + $0x90] sm:$0xff]
    %v412 = vld [vmem:[#allocation4 + $0x98] sm:$0xff]
    %v413 = vld [vmem:[#allocation4 + $0xa0] sm:$0xff]
    %v414 = vld [vmem:[#allocation4 + $0xa8] sm:$0xff]
    %v415 = vld [vmem:[#allocation4 + $0xb0] sm:$0xff]
    %v416 = vld [vmem:[#allocation4 + $0xb8] sm:$0xff]
    %v417 = vld [vmem:[#allocation4 + $0xc0] sm:$0xff]
    %v418 = vld [vmem:[#allocation4 + $0xc8] sm:$0xff]
    %v419 = vld [vmem:[#allocation4 + $0xd0] sm:$0xff]
    %v420 = vld [vmem:[#allocation4 + $0xd8] sm:$0xff]
    %v421 = vld [vmem:[#allocation4 + $0xe0] sm:$0xff]
    %v422 = vld [vmem:[#allocation4 + $0xe8] sm:$0xff]
    %v423 = vld [vmem:[#allocation4 + $0xf0] sm:$0xff]
    %v424 = vld [vmem:[#allocation4 + $0xf8] sm:$0xff]
    %v425 = vld [vmem:[#allocation4 + $0x100] sm:$0xff]
    %v426 = vld [vmem:[#allocation4 + $0x108] sm:$0xff]
    %v427 = vld [vmem:[#allocation4 + $0x110] sm:$0xff]
    %v428 = vld [vmem:[#allocation4 + $0x118] sm:$0xff]
    %v429 = vld [vmem:[#allocation4 + $0x120] sm:$0xff]
    %v430 = vld [vmem:[#allocation4 + $0x128] sm:$0xff]
    %v431 = vld [vmem:[#allocation4 + $0x130] sm:$0xff]
    %v432 = vld [vmem:[#allocation4 + $0x138] sm:$0xff]
    %v433 = vld [vmem:[#allocation4 + $0x140] sm:$0xff]
    %v434 = vld [vmem:[#allocation4 + $0x148] sm:$0xff]
    %v435 = vld [vmem:[#allocation4 + $0x150] sm:$0xff]
    %v436 = vld [vmem:[#allocation4 + $0x158] sm:$0xff]
    %v437 = vld [vmem:[#allocation4 + $0x160] sm:$0xff]
    %v438 = vld [vmem:[#allocation4 + $0x168] sm:$0xff]
    %v439 = vld [vmem:[#allocation4 + $0x170] sm:$0xff]
    %v440 = vld [vmem:[#allocation4 + $0x178] sm:$0xff]
    %v441 = vld [vmem:[%s7] sm:$0x7]
    %v443 = vlaneseq
    %v444 = vshrl.u32 %v443, 7
    %v445 = vsub.s32 0, %v444
    %v446 = vrot.slane %v441, %v445
    %v447 = vlaneseq
    %v448 = vshrl.u32 %v447, 7
    %v449 = vsub.s32 1, %v448
    %v450 = vrot.slane %v441, %v449
    %v451 = vlaneseq
    %v452 = vshrl.u32 %v451, 7
    %v453 = vsub.s32 2, %v452
    %v454 = vrot.slane %v441, %v453
    %458 = vmatprep.subr.mxu0 %v439
    %459 = vmatpush1.msra.mxu0 %v438
    %460 = vmatprep.subr.mxu0 %v436
    %461 = vmatpush1.msra.mxu0 %v435
    %462 = vmatprep.subr.mxu0 %v433
    %463 = vmatpush1.msra.mxu0 %v432
    %464 = vmatprep.subr.mxu0 %v430
    %465 = vmatpush1.msra.mxu0 %v429
    %466 = vmatprep.subr.mxu0 %v427
    %467 = vmatpush1.msra.mxu0 %v426
    %468 = vmatprep.subr.mxu0 %v424
    %469 = vmatpush1.msra.mxu0 %v423
    %470 = vmatprep.subr.mxu0 %v421
    %471 = vmatpush1.msra.mxu0 %v420
    %472 = vmatprep.subr.mxu0 %v418
    %473 = vmatpush1.msra.mxu0 %v417
    %474 = vmatprep.subr.mxu0 %v415
    %475 = vmatpush1.msra.mxu0 %v414
    %476 = vmatprep.subr.mxu0 %v412
    %477 = vmatpush1.msra.mxu0 %v411
    %478 = vmatprep.subr.mxu0 %v409
    %479 = vmatpush1.msra.mxu0 %v408
    %480 = vmatprep.subr.mxu0 %v406
    %481 = vmatpush1.msra.mxu0 %v405
    %482 = vmatprep.subr.mxu0 %v403
    %483 = vmatpush1.msra.mxu0 %v402
    %484 = vmatprep.subr.mxu0 %v400
    %485 = vmatpush1.msra.mxu0 %v399
    %486 = vmatprep.subr.mxu0 %v397
    %487 = vmatpush1.msra.mxu0 %v396
    %488 = vmatprep.subr.mxu0 %v394
    %489 = vmatpush1.msra.mxu0 %v393
    %490 = vmatprep.subr.mxu0 0.0
    %491 = vmatpush2.msra.mxu0 0.0
    %492 = vmatprep.subr.mxu0 0.0
    %493 = vmatpush2.msra.mxu0 0.0
    %494 = vmatprep.subr.mxu0 0.0
    %495 = vmatpush2.msra.mxu0 0.0
    %496 = vmatprep.subr.mxu0 0.0
    %497 = vmatpush2.msra.mxu0 0.0
    %498 = vmatprep.subr.mxu0 0.0
    %499 = vmatpush2.msra.mxu0 0.0
    %500 = vmatprep.subr.mxu0 0.0
    %501 = vmatpush2.msra.mxu0 0.0
    %502 = vmatprep.subr.mxu0 0.0
    %503 = vmatpush2.msra.mxu0 0.0
    %504 = vmatprep.subr.mxu0 0.0
    %505 = vmatpush2.msra.mxu0 0.0
    %506 = vmatprep.subr.mxu0 0.0
    %507 = vmatpush2.msra.mxu0 0.0
    %508 = vmatprep.subr.mxu0 0.0
    %509 = vmatpush2.msra.mxu0 0.0
    %510 = vmatprep.subr.mxu0 0.0
    %511 = vmatpush2.msra.mxu0 0.0
    %512 = vmatprep.subr.mxu0 0.0
    %513 = vmatpush2.msra.mxu0 0.0
    %514 = vmatprep.subr.mxu0 0.0
    %515 = vmatpush2.msra.mxu0 0.0
    %516 = vmatprep.subr.mxu0 0.0
    %517 = vmatpush2.msra.mxu0 0.0
    %518 = vmatprep.subr.mxu0 0.0
    %519 = vmatpush2.msra.mxu0 0.0
    %520 = vmatprep.subr.mxu0 0.0
    %521 = vmatpush2.msra.mxu0 0.0
    %522 = vmatprep.mubr.f32.mxu0 0.0
    %523 = vmatmul.mubr.f32.gmra.mxu0 %v287
    %v524 = vpop.f32.mrf.mxu0
    %v525 = vadd.f32 %v446, %v524
    %v526 = vpop.f32.mrf.mxu0
    %v527 = vadd.f32 %v450, %v526
    %528 = vmatprep.mubr.f32.mxu0 0.0
    %529 = vmatmul.mubr.f32.gmra.mxu0 %v292
    %v530 = vpop.f32.mrf.mxu0
    %v531 = vadd.f32 %v446, %v530
    %v532 = vpop.f32.mrf.mxu0
    %v533 = vadd.f32 %v450, %v532
    %534 = vdwg.mxu0
    %535 = vmatprep.subr.mxu0 0.0
    %536 = vmatpush1.msra.mxu0 %v440
    %537 = vmatprep.subr.mxu0 0.0
    %538 = vmatpush1.msra.mxu0 %v437
    %539 = vmatprep.subr.mxu0 0.0
    %540 = vmatpush1.msra.mxu0 %v434
    %541 = vmatprep.subr.mxu0 0.0
    %542 = vmatpush1.msra.mxu0 %v431
    %543 = vmatprep.subr.mxu0 0.0
    %544 = vmatpush1.msra.mxu0 %v428
    %545 = vmatprep.subr.mxu0 0.0
    %546 = vmatpush1.msra.mxu0 %v425
    %547 = vmatprep.subr.mxu0 0.0
    %548 = vmatpush1.msra.mxu0 %v422
    %549 = vmatprep.subr.mxu0 0.0
    %550 = vmatpush1.msra.mxu0 %v419
    %551 = vmatprep.subr.mxu0 0.0
    %552 = vmatpush1.msra.mxu0 %v416
    %553 = vmatprep.subr.mxu0 0.0
    %554 = vmatpush1.msra.mxu0 %v413
    %555 = vmatprep.subr.mxu0 0.0
    %556 = vmatpush1.msra.mxu0 %v410
    %557 = vmatprep.subr.mxu0 0.0
    %558 = vmatpush1.msra.mxu0 %v407
    %559 = vmatprep.subr.mxu0 0.0
    %560 = vmatpush1.msra.mxu0 %v404
    %561 = vmatprep.subr.mxu0 0.0
    %562 = vmatpush1.msra.mxu0 %v401
    %563 = vmatprep.subr.mxu0 0.0
    %564 = vmatpush1.msra.mxu0 %v398
    %565 = vmatprep.subr.mxu0 0.0
    %566 = vmatpush1.msra.mxu0 %v395
    %567 = vmatprep.subr.mxu0 0.0
    %568 = vmatpush2.msra.mxu0 0.0
    %569 = vmatprep.subr.mxu0 0.0
    %570 = vmatpush2.msra.mxu0 0.0
    %571 = vmatprep.subr.mxu0 0.0
    %572 = vmatpush2.msra.mxu0 0.0
    %573 = vmatprep.subr.mxu0 0.0
    %574 = vmatpush2.msra.mxu0 0.0
    %575 = vmatprep.subr.mxu0 0.0
    %576 = vmatpush2.msra.mxu0 0.0
    %577 = vmatprep.subr.mxu0 0.0
    %578 = vmatpush2.msra.mxu0 0.0
    %579 = vmatprep.subr.mxu0 0.0
    %580 = vmatpush2.msra.mxu0 0.0
    %581 = vmatprep.subr.mxu0 0.0
    %582 = vmatpush2.msra.mxu0 0.0
    %583 = vmatprep.subr.mxu0 0.0
    %584 = vmatpush2.msra.mxu0 0.0
    %585 = vmatprep.subr.mxu0 0.0
    %586 = vmatpush2.msra.mxu0 0.0
    %587 = vmatprep.subr.mxu0 0.0
    %588 = vmatpush2.msra.mxu0 0.0
    %589 = vmatprep.subr.mxu0 0.0
    %590 = vmatpush2.msra.mxu0 0.0
    %591 = vmatprep.subr.mxu0 0.0
    %592 = vmatpush2.msra.mxu0 0.0
    %593 = vmatprep.subr.mxu0 0.0
    %594 = vmatpush2.msra.mxu0 0.0
    %595 = vmatprep.subr.mxu0 0.0
    %596 = vmatpush2.msra.mxu0 0.0
    %597 = vmatprep.subr.mxu0 0.0
    %598 = vmatpush2.msra.mxu0 0.0
    %599 = vmatprep.mubr.f32.mxu0 0.0
    %600 = vmatmul.mubr.f32.gmra.mxu0 %v287
    %v601 = vpop.f32.mrf.mxu0
    %v602 = vadd.f32 %v454, %v601
    %v603 = vpop.f32.mrf.mxu0
    %604 = vmatprep.mubr.f32.mxu0 0.0
    %605 = vmatmul.mubr.f32.gmra.mxu0 %v292
    %v606 = vpop.f32.mrf.mxu0
    %v607 = vadd.f32 %v454, %v606
    %v608 = vpop.f32.mrf.mxu0
    %609 = vdwg.mxu0
    %610 = vmatprep.subr.mxu0 0.0
    %611 = vmatpush1.xpose.msra.mxu0 0.0
    %612 = vmatprep.subr.mxu0 0.0
    %613 = vmatpush1.xpose.msra.mxu0 0.0
    %614 = vmatprep.subr.mxu0 0.0
    %615 = vmatpush1.xpose.msra.mxu0 0.0
    %616 = vmatprep.subr.mxu0 0.0
    %617 = vmatpush1.xpose.msra.mxu0 0.0
    %618 = vmatprep.subr.mxu0 0.0
    %619 = vmatpush1.xpose.msra.mxu0 0.0
    %620 = vmatprep.subr.mxu0 0.0
    %621 = vmatpush1.xpose.msra.mxu0 0.0
    %622 = vmatprep.subr.mxu0 0.0
    %623 = vmatpush1.xpose.msra.mxu0 0.0
    %624 = vmatprep.subr.mxu0 0.0
    %625 = vmatpush1.xpose.msra.mxu0 0.0
    %626 = vmatprep.subr.mxu0 0.0
    %627 = vmatpush1.xpose.msra.mxu0 0.0
    %628 = vmatprep.subr.mxu0 0.0
    %629 = vmatpush1.xpose.msra.mxu0 0.0
    %630 = vmatprep.subr.mxu0 0.0
    %631 = vmatpush1.xpose.msra.mxu0 0.0
    %632 = vmatprep.subr.mxu0 0.0
    %633 = vmatpush1.xpose.msra.mxu0 0.0
    %634 = vmatprep.subr.mxu0 0.0
    %635 = vmatpush1.xpose.msra.mxu0 0.0
    %636 = vmatprep.subr.mxu0 0.0
    %637 = vmatpush1.xpose.msra.mxu0 0.0
    %638 = vmatprep.subr.mxu0 0.0
    %639 = vmatpush1.xpose.msra.mxu0 0.0
    %640 = vmatprep.subr.mxu0 0.0
    %641 = vmatpush1.xpose.msra.mxu0 %v527
    %642 = vmatprep.subr.mxu0 0.0
    %643 = vmatpush2.xpose.msra.mxu0 0.0
    %644 = vmatprep.subr.mxu0 0.0
    %645 = vmatpush2.xpose.msra.mxu0 0.0
    %646 = vmatprep.subr.mxu0 0.0
    %647 = vmatpush2.xpose.msra.mxu0 0.0
    %648 = vmatprep.subr.mxu0 0.0
    %649 = vmatpush2.xpose.msra.mxu0 0.0
    %650 = vmatprep.subr.mxu0 0.0
    %651 = vmatpush2.xpose.msra.mxu0 0.0
    %652 = vmatprep.subr.mxu0 0.0
    %653 = vmatpush2.xpose.msra.mxu0 0.0
    %654 = vmatprep.subr.mxu0 0.0
    %655 = vmatpush2.xpose.msra.mxu0 0.0
    %656 = vmatprep.subr.mxu0 0.0
    %657 = vmatpush2.xpose.msra.mxu0 0.0
    %658 = vmatprep.subr.mxu0 0.0
    %659 = vmatpush2.xpose.msra.mxu0 0.0
    %660 = vmatprep.subr.mxu0 0.0
    %661 = vmatpush2.xpose.msra.mxu0 0.0
    %662 = vmatprep.subr.mxu0 0.0
    %663 = vmatpush2.xpose.msra.mxu0 0.0
    %664 = vmatprep.subr.mxu0 0.0
    %665 = vmatpush2.xpose.msra.mxu0 0.0
    %666 = vmatprep.subr.mxu0 0.0
    %667 = vmatpush2.xpose.msra.mxu0 0.0
    %668 = vmatprep.subr.mxu0 0.0
    %669 = vmatpush2.xpose.msra.mxu0 0.0
    %670 = vmatprep.subr.mxu0 0.0
    %671 = vmatpush2.xpose.msra.mxu0 0.0
    %672 = vmatprep.subr.mxu0 0.0
    %673 = vmatpush2.xpose.msra.mxu0 0.0
    %674 = vmatprep.mubr.f32.mxu0 0.0
    %675 = vmatmul.mubr.f32.gmra.mxu0 %v525
    %v676 = vpop.f32.mrf.mxu0
    %v677 = vadd.f32 0.0, %v676
    %v678 = vpop.f32.mrf.mxu0
    %679 = vdwg.mxu0
    %680 = vmatprep.subr.mxu0 0.0
    %681 = vmatpush1.xpose.msra.mxu0 0.0
    %682 = vmatprep.subr.mxu0 0.0
    %683 = vmatpush1.xpose.msra.mxu0 0.0
    %684 = vmatprep.subr.mxu0 0.0
    %685 = vmatpush1.xpose.msra.mxu0 0.0
    %686 = vmatprep.subr.mxu0 0.0
    %687 = vmatpush1.xpose.msra.mxu0 0.0
    %688 = vmatprep.subr.mxu0 0.0
    %689 = vmatpush1.xpose.msra.mxu0 0.0
    %690 = vmatprep.subr.mxu0 0.0
    %691 = vmatpush1.xpose.msra.mxu0 0.0
    %692 = vmatprep.subr.mxu0 0.0
    %693 = vmatpush1.xpose.msra.mxu0 0.0
    %694 = vmatprep.subr.mxu0 0.0
    %695 = vmatpush1.xpose.msra.mxu0 0.0
    %696 = vmatprep.subr.mxu0 0.0
    %697 = vmatpush1.xpose.msra.mxu0 0.0
    %698 = vmatprep.subr.mxu0 0.0
    %699 = vmatpush1.xpose.msra.mxu0 0.0
    %700 = vmatprep.subr.mxu0 0.0
    %701 = vmatpush1.xpose.msra.mxu0 0.0
    %702 = vmatprep.subr.mxu0 0.0
    %703 = vmatpush1.xpose.msra.mxu0 0.0
    %704 = vmatprep.subr.mxu0 0.0
    %705 = vmatpush1.xpose.msra.mxu0 0.0
    %706 = vmatprep.subr.mxu0 0.0
    %707 = vmatpush1.xpose.msra.mxu0 0.0
    %708 = vmatprep.subr.mxu0 0.0
    %709 = vmatpush1.xpose.msra.mxu0 0.0
    %710 = vmatprep.subr.mxu0 0.0
    %711 = vmatpush1.xpose.msra.mxu0 %v533
    %712 = vmatprep.subr.mxu0 0.0
    %713 = vmatpush2.xpose.msra.mxu0 0.0
    %714 = vmatprep.subr.mxu0 0.0
    %715 = vmatpush2.xpose.msra.mxu0 0.0
    %716 = vmatprep.subr.mxu0 0.0
    %717 = vmatpush2.xpose.msra.mxu0 0.0
    %718 = vmatprep.subr.mxu0 0.0
    %719 = vmatpush2.xpose.msra.mxu0 0.0
    %720 = vmatprep.subr.mxu0 0.0
    %721 = vmatpush2.xpose.msra.mxu0 0.0
    %722 = vmatprep.subr.mxu0 0.0
    %723 = vmatpush2.xpose.msra.mxu0 0.0
    %724 = vmatprep.subr.mxu0 0.0
    %725 = vmatpush2.xpose.msra.mxu0 0.0
    %726 = vmatprep.subr.mxu0 0.0
    %727 = vmatpush2.xpose.msra.mxu0 0.0
    %728 = vmatprep.subr.mxu0 0.0
    %729 = vmatpush2.xpose.msra.mxu0 0.0
    %730 = vmatprep.subr.mxu0 0.0
    %731 = vmatpush2.xpose.msra.mxu0 0.0
    %732 = vmatprep.subr.mxu0 0.0
    %733 = vmatpush2.xpose.msra.mxu0 0.0
    %734 = vmatprep.subr.mxu0 0.0
    %735 = vmatpush2.xpose.msra.mxu0 0.0
    %736 = vmatprep.subr.mxu0 0.0
    %737 = vmatpush2.xpose.msra.mxu0 0.0
    %738 = vmatprep.subr.mxu0 0.0
    %739 = vmatpush2.xpose.msra.mxu0 0.0
    %740 = vmatprep.subr.mxu0 0.0
    %741 = vmatpush2.xpose.msra.mxu0 0.0
    %742 = vmatprep.subr.mxu0 0.0
    %743 = vmatpush2.xpose.msra.mxu0 0.0
    %744 = vmatprep.mubr.f32.mxu0 0.0
    %745 = vmatmul.mubr.f32.gmra.mxu0 %v531
    %v746 = vpop.f32.mrf.mxu0
    %v747 = vadd.f32 0.0, %v746
    %v748 = vpop.f32.mrf.mxu0
    %749 = vdwg.mxu0
    %vm750 = vcmask 64512
    %v751 = vsel %vm750, %v677, -inf
    %752 = vmax.xlane.f32.xlu0 %v751
    %v753 = vpop.xlane.xlu0 %752
    %v754 = vsel %vm750, %v747, -inf
    %755 = vmax.xlane.f32.xlu0 %v754
    %v756 = vpop.xlane.xlu0 %755
    %v757 = vsub.f32 %v677, %v753
    %v758 = vsub.f32 %v747, %v756
    %v759 = vmul.f32 %v757, 1.442695
    %v760 = vpow.pop %v759
    %v761 = vmul.f32 %v758, 1.442695
    %v762 = vpow.pop %v761
    %v763 = vsel %vm750, %v760, 0.0
    %764 = vadd.xlane.f32.xlu0 %v763
    %v765 = vpop.xlane.xlu0 %764
    %v766 = vsel %vm750, %v762, 0.0
    %767 = vadd.xlane.f32.xlu0 %v766
    %v768 = vpop.xlane.xlu0 %767
    %v769 = vrcp.pop %v765
    %v770 = vrcp.pop %v768
    %v771 = vmul.f32 %v760, %v769
    %v772 = vmul.f32 %v762, %v770
    %v774 = vsel %vm750, %v771, 0
    %776 = vmatprep.subr.mxu0 0.0
    %777 = vmatpush1.msra.mxu0 0.0
    %778 = vmatprep.subr.mxu0 0.0
    %779 = vmatpush1.msra.mxu0 0.0
    %780 = vmatprep.subr.mxu0 0.0
    %781 = vmatpush1.msra.mxu0 0.0
    %782 = vmatprep.subr.mxu0 0.0
    %783 = vmatpush1.msra.mxu0 0.0
    %784 = vmatprep.subr.mxu0 0.0
    %785 = vmatpush1.msra.mxu0 0.0
    %786 = vmatprep.subr.mxu0 0.0
    %787 = vmatpush1.msra.mxu0 0.0
    %788 = vmatprep.subr.mxu0 0.0
    %789 = vmatpush1.msra.mxu0 0.0
    %790 = vmatprep.subr.mxu0 0.0
    %791 = vmatpush1.msra.mxu0 0.0
    %792 = vmatprep.subr.mxu0 0.0
    %793 = vmatpush1.msra.mxu0 0.0
    %794 = vmatprep.subr.mxu0 0.0
    %795 = vmatpush1.msra.mxu0 0.0
    %796 = vmatprep.subr.mxu0 0.0
    %797 = vmatpush1.msra.mxu0 0.0
    %798 = vmatprep.subr.mxu0 0.0
    %799 = vmatpush1.msra.mxu0 0.0
    %800 = vmatprep.subr.mxu0 0.0
    %801 = vmatpush1.msra.mxu0 0.0
    %802 = vmatprep.subr.mxu0 0.0
    %803 = vmatpush1.msra.mxu0 0.0
    %804 = vmatprep.subr.mxu0 0.0
    %805 = vmatpush1.msra.mxu0 0.0
    %806 = vmatprep.subr.mxu0 0.0
    %807 = vmatpush1.msra.mxu0 %v602
    %808 = vmatprep.subr.mxu0 0.0
    %809 = vmatpush2.msra.mxu0 0.0
    %810 = vmatprep.subr.mxu0 0.0
    %811 = vmatpush2.msra.mxu0 0.0
    %812 = vmatprep.subr.mxu0 0.0
    %813 = vmatpush2.msra.mxu0 0.0
    %814 = vmatprep.subr.mxu0 0.0
    %815 = vmatpush2.msra.mxu0 0.0
    %816 = vmatprep.subr.mxu0 0.0
    %817 = vmatpush2.msra.mxu0 0.0
    %818 = vmatprep.subr.mxu0 0.0
    %819 = vmatpush2.msra.mxu0 0.0
    %820 = vmatprep.subr.mxu0 0.0
    %821 = vmatpush2.msra.mxu0 0.0
    %822 = vmatprep.subr.mxu0 0.0
    %823 = vmatpush2.msra.mxu0 0.0
    %824 = vmatprep.subr.mxu0 0.0
    %825 = vmatpush2.msra.mxu0 0.0
    %826 = vmatprep.subr.mxu0 0.0
    %827 = vmatpush2.msra.mxu0 0.0
    %828 = vmatprep.subr.mxu0 0.0
    %829 = vmatpush2.msra.mxu0 0.0
    %830 = vmatprep.subr.mxu0 0.0
    %831 = vmatpush2.msra.mxu0 0.0
    %832 = vmatprep.subr.mxu0 0.0
    %833 = vmatpush2.msra.mxu0 0.0
    %834 = vmatprep.subr.mxu0 0.0
    %835 = vmatpush2.msra.mxu0 0.0
    %836 = vmatprep.subr.mxu0 0.0
    %837 = vmatpush2.msra.mxu0 0.0
    %838 = vmatprep.subr.mxu0 0.0
    %839 = vmatpush2.msra.mxu0 0.0
    %840 = vmatprep.mubr.f32.mxu0 0.0
    %841 = vmatmul.mubr.f32.gmra.mxu0 %v774
    %v842 = vpop.f32.mrf.mxu0
    %v843 = vadd.f32 0.0, %v842
    %v844 = vpop.f32.mrf.mxu0
    %845 = vdwg.mxu0
    %v847 = vsel %vm750, %v772, 0
    %849 = vmatprep.subr.mxu0 0.0
    %850 = vmatpush1.msra.mxu0 0.0
    %851 = vmatprep.subr.mxu0 0.0
    %852 = vmatpush1.msra.mxu0 0.0
    %853 = vmatprep.subr.mxu0 0.0
    %854 = vmatpush1.msra.mxu0 0.0
    %855 = vmatprep.subr.mxu0 0.0
    %856 = vmatpush1.msra.mxu0 0.0
    %857 = vmatprep.subr.mxu0 0.0
    %858 = vmatpush1.msra.mxu0 0.0
    %859 = vmatprep.subr.mxu0 0.0
    %860 = vmatpush1.msra.mxu0 0.0
    %861 = vmatprep.subr.mxu0 0.0
    %862 = vmatpush1.msra.mxu0 0.0
    %863 = vmatprep.subr.mxu0 0.0
    %864 = vmatpush1.msra.mxu0 0.0
    %865 = vmatprep.subr.mxu0 0.0
    %866 = vmatpush1.msra.mxu0 0.0
    %867 = vmatprep.subr.mxu0 0.0
    %868 = vmatpush1.msra.mxu0 0.0
    %869 = vmatprep.subr.mxu0 0.0
    %870 = vmatpush1.msra.mxu0 0.0
    %871 = vmatprep.subr.mxu0 0.0
    %872 = vmatpush1.msra.mxu0 0.0
    %873 = vmatprep.subr.mxu0 0.0
    %874 = vmatpush1.msra.mxu0 0.0
    %875 = vmatprep.subr.mxu0 0.0
    %876 = vmatpush1.msra.mxu0 0.0
    %877 = vmatprep.subr.mxu0 0.0
    %878 = vmatpush1.msra.mxu0 0.0
    %879 = vmatprep.subr.mxu0 0.0
    %880 = vmatpush1.msra.mxu0 %v607
    %881 = vmatprep.subr.mxu0 0.0
    %882 = vmatpush2.msra.mxu0 0.0
    %883 = vmatprep.subr.mxu0 0.0
    %884 = vmatpush2.msra.mxu0 0.0
    %885 = vmatprep.subr.mxu0 0.0
    %886 = vmatpush2.msra.mxu0 0.0
    %887 = vmatprep.subr.mxu0 0.0
    %888 = vmatpush2.msra.mxu0 0.0
    %889 = vmatprep.subr.mxu0 0.0
    %890 = vmatpush2.msra.mxu0 0.0
    %891 = vmatprep.subr.mxu0 0.0
    %892 = vmatpush2.msra.mxu0 0.0
    %893 = vmatprep.subr.mxu0 0.0
    %894 = vmatpush2.msra.mxu0 0.0
    %895 = vmatprep.subr.mxu0 0.0
    %896 = vmatpush2.msra.mxu0 0.0
    %897 = vmatprep.subr.mxu0 0.0
    %898 = vmatpush2.msra.mxu0 0.0
    %899 = vmatprep.subr.mxu0 0.0
    %900 = vmatpush2.msra.mxu0 0.0
    %901 = vmatprep.subr.mxu0 0.0
    %902 = vmatpush2.msra.mxu0 0.0
    %903 = vmatprep.subr.mxu0 0.0
    %904 = vmatpush2.msra.mxu0 0.0
    %905 = vmatprep.subr.mxu0 0.0
    %906 = vmatpush2.msra.mxu0 0.0
    %907 = vmatprep.subr.mxu0 0.0
    %908 = vmatpush2.msra.mxu0 0.0
    %909 = vmatprep.subr.mxu0 0.0
    %910 = vmatpush2.msra.mxu0 0.0
    %911 = vmatprep.subr.mxu0 0.0
    %912 = vmatpush2.msra.mxu0 0.0
    %913 = vmatprep.mubr.f32.mxu0 0.0
    %914 = vmatmul.mubr.f32.gmra.mxu0 %v847
    %v915 = vpop.f32.mrf.mxu0
    %v916 = vadd.f32 0.0, %v915
    %v917 = vpop.f32.mrf.mxu0
    %918 = vdwg.mxu0
    %v919 = vld [vmem:[#allocation6] sm:$0xff]
    %v920 = vld [vmem:[#allocation6 + $0x8] sm:$0xff]
    %v921 = vld [vmem:[#allocation6 + $0x10] sm:$0xff]
    %v922 = vld [vmem:[#allocation6 + $0x18] sm:$0xff]
    %v923 = vld [vmem:[#allocation6 + $0x20] sm:$0xff]
    %v924 = vld [vmem:[#allocation6 + $0x28] sm:$0xff]
    %v925 = vld [vmem:[#allocation6 + $0x30] sm:$0xff]
    %v926 = vld [vmem:[#allocation6 + $0x38] sm:$0xff]
    %v927 = vld [vmem:[#allocation6 + $0x40] sm:$0xff]
    %v928 = vld [vmem:[#allocation6 + $0x48] sm:$0xff]
    %v929 = vld [vmem:[#allocation6 + $0x50] sm:$0xff]
    %v930 = vld [vmem:[#allocation6 + $0x58] sm:$0xff]
    %v931 = vld [vmem:[#allocation6 + $0x60] sm:$0xff]
    %v932 = vld [vmem:[#allocation6 + $0x68] sm:$0xff]
    %v933 = vld [vmem:[#allocation6 + $0x70] sm:$0xff]
    %v934 = vld [vmem:[#allocation6 + $0x78] sm:$0xff]
    %935 = vmatprep.subr.mxu0 0.0
    %936 = vmatpush1.msra.mxu0 %v934
    %937 = vmatprep.subr.mxu0 0.0
    %938 = vmatpush1.msra.mxu0 %v933
    %939 = vmatprep.subr.mxu0 0.0
    %940 = vmatpush1.msra.mxu0 %v932
    %941 = vmatprep.subr.mxu0 0.0
    %942 = vmatpush1.msra.mxu0 %v931
    %943 = vmatprep.subr.mxu0 0.0
    %944 = vmatpush1.msra.mxu0 %v930
    %945 = vmatprep.subr.mxu0 0.0
    %946 = vmatpush1.msra.mxu0 %v929
    %947 = vmatprep.subr.mxu0 0.0
    %948 = vmatpush1.msra.mxu0 %v928
    %949 = vmatprep.subr.mxu0 0.0
    %950 = vmatpush1.msra.mxu0 %v927
    %951 = vmatprep.subr.mxu0 0.0
    %952 = vmatpush1.msra.mxu0 %v926
    %953 = vmatprep.subr.mxu0 0.0
    %954 = vmatpush1.msra.mxu0 %v925
    %955 = vmatprep.subr.mxu0 0.0
    %956 = vmatpush1.msra.mxu0 %v924
    %957 = vmatprep.subr.mxu0 0.0
    %958 = vmatpush1.msra.mxu0 %v923
    %959 = vmatprep.subr.mxu0 0.0
    %960 = vmatpush1.msra.mxu0 %v922
    %961 = vmatprep.subr.mxu0 0.0
    %962 = vmatpush1.msra.mxu0 %v921
    %963 = vmatprep.subr.mxu0 0.0
    %964 = vmatpush1.msra.mxu0 %v920
    %965 = vmatprep.subr.mxu0 0.0
    %966 = vmatpush1.msra.mxu0 %v919
    %967 = vmatprep.subr.mxu0 0.0
    %968 = vmatpush2.msra.mxu0 0.0
    %969 = vmatprep.subr.mxu0 0.0
    %970 = vmatpush2.msra.mxu0 0.0
    %971 = vmatprep.subr.mxu0 0.0
    %972 = vmatpush2.msra.mxu0 0.0
    %973 = vmatprep.subr.mxu0 0.0
    %974 = vmatpush2.msra.mxu0 0.0
    %975 = vmatprep.subr.mxu0 0.0
    %976 = vmatpush2.msra.mxu0 0.0
    %977 = vmatprep.subr.mxu0 0.0
    %978 = vmatpush2.msra.mxu0 0.0
    %979 = vmatprep.subr.mxu0 0.0
    %980 = vmatpush2.msra.mxu0 0.0
    %981 = vmatprep.subr.mxu0 0.0
    %982 = vmatpush2.msra.mxu0 0.0
    %983 = vmatprep.subr.mxu0 0.0
    %984 = vmatpush2.msra.mxu0 0.0
    %985 = vmatprep.subr.mxu0 0.0
    %986 = vmatpush2.msra.mxu0 0.0
    %987 = vmatprep.subr.mxu0 0.0
    %988 = vmatpush2.msra.mxu0 0.0
    %989 = vmatprep.subr.mxu0 0.0
    %990 = vmatpush2.msra.mxu0 0.0
    %991 = vmatprep.subr.mxu0 0.0
    %992 = vmatpush2.msra.mxu0 0.0
    %993 = vmatprep.subr.mxu0 0.0
    %994 = vmatpush2.msra.mxu0 0.0
    %995 = vmatprep.subr.mxu0 0.0
    %996 = vmatpush2.msra.mxu0 0.0
    %997 = vmatprep.subr.mxu0 0.0
    %998 = vmatpush2.msra.mxu0 0.0
    %999 = vmatprep.mubr.f32.mxu0 0.0
    %1000 = vmatmul.mubr.f32.gmra.mxu0 %v843
    %v1001 = vpop.f32.mrf.mxu0
    %v1002 = vadd.f32 0.0, %v1001
    %v1003 = vpop.f32.mrf.mxu0
    %1004 = vmatprep.mubr.f32.mxu0 0.0
    %1005 = vmatmul.mubr.f32.gmra.mxu0 %v916
    %v1006 = vpop.f32.mrf.mxu0
    %v1007 = vadd.f32 0.0, %v1006
    %v1008 = vpop.f32.mrf.mxu0
    %1009 = vdwg.mxu0
    %v1010 = vadd.f32 %v287, %v1002
    %v1011 = vadd.f32 %v292, %v1007
    %v1012 = vld [vmem:[%s9] sm:$0x1]
    %v1014 = vlaneseq
    %v1015 = vshrl.u32 %v1014, 7
    %v1016 = vsub.s32 0, %v1015
    %v1017 = vrot.slane %v1012, %v1016
    %v1019 = vadd.f32 %v1010, %v1017
    %v1020 = vadd.f32 %v1011, %v1017
    %v1021 = vld [vmem:[#allocation7] sm:$0xff]
    %v1022 = vld [vmem:[#allocation7 + $0x8] sm:$0xff]
    %v1023 = vld [vmem:[#allocation7 + $0x10] sm:$0xff]
    %v1024 = vld [vmem:[#allocation7 + $0x18] sm:$0xff]
    %v1025 = vld [vmem:[#allocation7 + $0x20] sm:$0xff]
    %v1026 = vld [vmem:[#allocation7 + $0x28] sm:$0xff]
    %v1027 = vld [vmem:[#allocation7 + $0x30] sm:$0xff]
    %v1028 = vld [vmem:[#allocation7 + $0x38] sm:$0xff]
    %v1029 = vld [vmem:[#allocation7 + $0x40] sm:$0xff]
    %v1030 = vld [vmem:[#allocation7 + $0x48] sm:$0xff]
    %v1031 = vld [vmem:[#allocation7 + $0x50] sm:$0xff]
    %v1032 = vld [vmem:[#allocation7 + $0x58] sm:$0xff]
    %v1033 = vld [vmem:[#allocation7 + $0x60] sm:$0xff]
    %v1034 = vld [vmem:[#allocation7 + $0x68] sm:$0xff]
    %v1035 = vld [vmem:[#allocation7 + $0x70] sm:$0xff]
    %v1036 = vld [vmem:[#allocation7 + $0x78] sm:$0xff]
    %v1037 = vld [vmem:[%s11] sm:$0x1]
    %v1039 = vlaneseq
    %v1040 = vshrl.u32 %v1039, 7
    %v1041 = vsub.s32 0, %v1040
    %v1042 = vrot.slane %v1037, %v1041
    %1044 = vmatprep.subr.mxu0 0.0
    %1045 = vmatpush1.msra.mxu0 %v1036
    %1046 = vmatprep.subr.mxu0 0.0
    %1047 = vmatpush1.msra.mxu0 %v1035
    %1048 = vmatprep.subr.mxu0 0.0
    %1049 = vmatpush1.msra.mxu0 %v1034
    %1050 = vmatprep.subr.mxu0 0.0
    %1051 = vmatpush1.msra.mxu0 %v1033
    %1052 = vmatprep.subr.mxu0 0.0
    %1053 = vmatpush1.msra.mxu0 %v1032
    %1054 = vmatprep.subr.mxu0 0.0
    %1055 = vmatpush1.msra.mxu0 %v1031
    %1056 = vmatprep.subr.mxu0 0.0
    %1057 = vmatpush1.msra.mxu0 %v1030
    %1058 = vmatprep.subr.mxu0 0.0
    %1059 = vmatpush1.msra.mxu0 %v1029
    %1060 = vmatprep.subr.mxu0 0.0
    %1061 = vmatpush1.msra.mxu0 %v1028
    %1062 = vmatprep.subr.mxu0 0.0
    %1063 = vmatpush1.msra.mxu0 %v1027
    %1064 = vmatprep.subr.mxu0 0.0
    %1065 = vmatpush1.msra.mxu0 %v1026
    %1066 = vmatprep.subr.mxu0 0.0
    %1067 = vmatpush1.msra.mxu0 %v1025
    %1068 = vmatprep.subr.mxu0 0.0
    %1069 = vmatpush1.msra.mxu0 %v1024
    %1070 = vmatprep.subr.mxu0 0.0
    %1071 = vmatpush1.msra.mxu0 %v1023
    %1072 = vmatprep.subr.mxu0 0.0
    %1073 = vmatpush1.msra.mxu0 %v1022
    %1074 = vmatprep.subr.mxu0 0.0
    %1075 = vmatpush1.msra.mxu0 %v1021
    %1076 = vmatprep.subr.mxu0 0.0
    %1077 = vmatpush2.msra.mxu0 0.0
    %1078 = vmatprep.subr.mxu0 0.0
    %1079 = vmatpush2.msra.mxu0 0.0
    %1080 = vmatprep.subr.mxu0 0.0
    %1081 = vmatpush2.msra.mxu0 0.0
    %1082 = vmatprep.subr.mxu0 0.0
    %1083 = vmatpush2.msra.mxu0 0.0
    %1084 = vmatprep.subr.mxu0 0.0
    %1085 = vmatpush2.msra.mxu0 0.0
    %1086 = vmatprep.subr.mxu0 0.0
    %1087 = vmatpush2.msra.mxu0 0.0
    %1088 = vmatprep.subr.mxu0 0.0
    %1089 = vmatpush2.msra.mxu0 0.0
    %1090 = vmatprep.subr.mxu0 0.0
    %1091 = vmatpush2.msra.mxu0 0.0
    %1092 = vmatprep.subr.mxu0 0.0
    %1093 = vmatpush2.msra.mxu0 0.0
    %1094 = vmatprep.subr.mxu0 0.0
    %1095 = vmatpush2.msra.mxu0 0.0
    %1096 = vmatprep.subr.mxu0 0.0
    %1097 = vmatpush2.msra.mxu0 0.0
    %1098 = vmatprep.subr.mxu0 0.0
    %1099 = vmatpush2.msra.mxu0 0.0
    %1100 = vmatprep.subr.mxu0 0.0
    %1101 = vmatpush2.msra.mxu0 0.0
    %1102 = vmatprep.subr.mxu0 0.0
    %1103 = vmatpush2.msra.mxu0 0.0
    %1104 = vmatprep.subr.mxu0 0.0
    %1105 = vmatpush2.msra.mxu0 0.0
    %1106 = vmatprep.subr.mxu0 0.0
    %1107 = vmatpush2.msra.mxu0 0.0
    %1108 = vmatprep.mubr.f32.mxu0 0.0
    %1109 = vmatmul.mubr.f32.gmra.mxu0 %v385
    %v1110 = vpop.f32.mrf.mxu0
    %v1111 = vadd.f32 %v1042, %v1110
    %v1112 = vpop.f32.mrf.mxu0
    %1113 = vmatprep.mubr.f32.mxu0 0.0
    %1114 = vmatmul.mubr.f32.gmra.mxu0 %v390
    %v1115 = vpop.f32.mrf.mxu0
    %v1116 = vadd.f32 %v1042, %v1115
    %v1117 = vpop.f32.mrf.mxu0
    %1118 = vdwg.mxu0
    %v1119 = vld [vmem:[#allocation9] sm:$0xff]
    %v1120 = vld [vmem:[#allocation9 + $0x8] sm:$0xff]
    %v1121 = vld [vmem:[#allocation9 + $0x10] sm:$0xff]
    %v1122 = vld [vmem:[#allocation9 + $0x18] sm:$0xff]
    %v1123 = vld [vmem:[#allocation9 + $0x20] sm:$0xff]
    %v1124 = vld [vmem:[#allocation9 + $0x28] sm:$0xff]
    %v1125 = vld [vmem:[#allocation9 + $0x30] sm:$0xff]
    %v1126 = vld [vmem:[#allocation9 + $0x38] sm:$0xff]
    %v1127 = vld [vmem:[#allocation9 + $0x40] sm:$0xff]
    %v1128 = vld [vmem:[#allocation9 + $0x48] sm:$0xff]
    %v1129 = vld [vmem:[#allocation9 + $0x50] sm:$0xff]
    %v1130 = vld [vmem:[#allocation9 + $0x58] sm:$0xff]
    %v1131 = vld [vmem:[#allocation9 + $0x60] sm:$0xff]
    %v1132 = vld [vmem:[#allocation9 + $0x68] sm:$0xff]
    %v1133 = vld [vmem:[#allocation9 + $0x70] sm:$0xff]
    %v1134 = vld [vmem:[#allocation9 + $0x78] sm:$0xff]
    %v1135 = vld [vmem:[#allocation9 + $0x80] sm:$0xff]
    %v1136 = vld [vmem:[#allocation9 + $0x88] sm:$0xff]
    %v1137 = vld [vmem:[#allocation9 + $0x90] sm:$0xff]
    %v1138 = vld [vmem:[#allocation9 + $0x98] sm:$0xff]
    %v1139 = vld [vmem:[#allocation9 + $0xa0] sm:$0xff]
    %v1140 = vld [vmem:[#allocation9 + $0xa8] sm:$0xff]
    %v1141 = vld [vmem:[#allocation9 + $0xb0] sm:$0xff]
    %v1142 = vld [vmem:[#allocation9 + $0xb8] sm:$0xff]
    %v1143 = vld [vmem:[#allocation9 + $0xc0] sm:$0xff]
    %v1144 = vld [vmem:[#allocation9 + $0xc8] sm:$0xff]
    %v1145 = vld [vmem:[#allocation9 + $0xd0] sm:$0xff]
    %v1146 = vld [vmem:[#allocation9 + $0xd8] sm:$0xff]
    %v1147 = vld [vmem:[#allocation9 + $0xe0] sm:$0xff]
    %v1148 = vld [vmem:[#allocation9 + $0xe8] sm:$0xff]
    %v1149 = vld [vmem:[#allocation9 + $0xf0] sm:$0xff]
    %v1150 = vld [vmem:[#allocation9 + $0xf8] sm:$0xff]
    %v1151 = vld [vmem:[%s13] sm:$0x3]
    %v1153 = vlaneseq
    %v1154 = vshrl.u32 %v1153, 7
    %v1155 = vsub.s32 0, %v1154
    %v1156 = vrot.slane %v1151, %v1155
    %v1157 = vlaneseq
    %v1158 = vshrl.u32 %v1157, 7
    %v1159 = vsub.s32 1, %v1158
    %v1160 = vrot.slane %v1151, %v1159
    %1163 = vmatprep.subr.mxu0 %v1150
    %1164 = vmatpush1.msra.mxu0 %v1149
    %1165 = vmatprep.subr.mxu0 %v1148
    %1166 = vmatpush1.msra.mxu0 %v1147
    %1167 = vmatprep.subr.mxu0 %v1146
    %1168 = vmatpush1.msra.mxu0 %v1145
    %1169 = vmatprep.subr.mxu0 %v1144
    %1170 = vmatpush1.msra.mxu0 %v1143
    %1171 = vmatprep.subr.mxu0 %v1142
    %1172 = vmatpush1.msra.mxu0 %v1141
    %1173 = vmatprep.subr.mxu0 %v1140
    %1174 = vmatpush1.msra.mxu0 %v1139
    %1175 = vmatprep.subr.mxu0 %v1138
    %1176 = vmatpush1.msra.mxu0 %v1137
    %1177 = vmatprep.subr.mxu0 %v1136
    %1178 = vmatpush1.msra.mxu0 %v1135
    %1179 = vmatprep.subr.mxu0 %v1134
    %1180 = vmatpush1.msra.mxu0 %v1133
    %1181 = vmatprep.subr.mxu0 %v1132
    %1182 = vmatpush1.msra.mxu0 %v1131
    %1183 = vmatprep.subr.mxu0 %v1130
    %1184 = vmatpush1.msra.mxu0 %v1129
    %1185 = vmatprep.subr.mxu0 %v1128
    %1186 = vmatpush1.msra.mxu0 %v1127
    %1187 = vmatprep.subr.mxu0 %v1126
    %1188 = vmatpush1.msra.mxu0 %v1125
    %1189 = vmatprep.subr.mxu0 %v1124
    %1190 = vmatpush1.msra.mxu0 %v1123
    %1191 = vmatprep.subr.mxu0 %v1122
    %1192 = vmatpush1.msra.mxu0 %v1121
    %1193 = vmatprep.subr.mxu0 %v1120
    %1194 = vmatpush1.msra.mxu0 %v1119
    %1195 = vmatprep.subr.mxu0 0.0
    %1196 = vmatpush2.msra.mxu0 0.0
    %1197 = vmatprep.subr.mxu0 0.0
    %1198 = vmatpush2.msra.mxu0 0.0
    %1199 = vmatprep.subr.mxu0 0.0
    %1200 = vmatpush2.msra.mxu0 0.0
    %1201 = vmatprep.subr.mxu0 0.0
    %1202 = vmatpush2.msra.mxu0 0.0
    %1203 = vmatprep.subr.mxu0 0.0
    %1204 = vmatpush2.msra.mxu0 0.0
    %1205 = vmatprep.subr.mxu0 0.0
    %1206 = vmatpush2.msra.mxu0 0.0
    %1207 = vmatprep.subr.mxu0 0.0
    %1208 = vmatpush2.msra.mxu0 0.0
    %1209 = vmatprep.subr.mxu0 0.0
    %1210 = vmatpush2.msra.mxu0 0.0
    %1211 = vmatprep.subr.mxu0 0.0
    %1212 = vmatpush2.msra.mxu0 0.0
    %1213 = vmatprep.subr.mxu0 0.0
    %1214 = vmatpush2.msra.mxu0 0.0
    %1215 = vmatprep.subr.mxu0 0.0
    %1216 = vmatpush2.msra.mxu0 0.0
    %1217 = vmatprep.subr.mxu0 0.0
    %1218 = vmatpush2.msra.mxu0 0.0
    %1219 = vmatprep.subr.mxu0 0.0
    %1220 = vmatpush2.msra.mxu0 0.0
    %1221 = vmatprep.subr.mxu0 0.0
    %1222 = vmatpush2.msra.mxu0 0.0
    %1223 = vmatprep.subr.mxu0 0.0
    %1224 = vmatpush2.msra.mxu0 0.0
    %1225 = vmatprep.subr.mxu0 0.0
    %1226 = vmatpush2.msra.mxu0 0.0
    %1227 = vmatprep.mubr.f32.mxu0 0.0
    %1228 = vmatmul.mubr.f32.gmra.mxu0 %v1019
    %v1229 = vpop.f32.mrf.mxu0
    %v1230 = vadd.f32 %v1156, %v1229
    %v1231 = vpop.f32.mrf.mxu0
    %v1232 = vadd.f32 %v1160, %v1231
    %1233 = vmatprep.mubr.f32.mxu0 0.0
    %1234 = vmatmul.mubr.f32.gmra.mxu0 %v1020
    %v1235 = vpop.f32.mrf.mxu0
    %v1236 = vadd.f32 %v1156, %v1235
    %v1237 = vpop.f32.mrf.mxu0
    %v1238 = vadd.f32 %v1160, %v1237
    %1239 = vdwg.mxu0
    %1240 = vmatprep.subr.mxu0 0.0
    %1241 = vmatpush1.xpose.msra.mxu0 0.0
    %1242 = vmatprep.subr.mxu0 0.0
    %1243 = vmatpush1.xpose.msra.mxu0 0.0
    %1244 = vmatprep.subr.mxu0 0.0
    %1245 = vmatpush1.xpose.msra.mxu0 0.0
    %1246 = vmatprep.subr.mxu0 0.0
    %1247 = vmatpush1.xpose.msra.mxu0 0.0
    %1248 = vmatprep.subr.mxu0 0.0
    %1249 = vmatpush1.xpose.msra.mxu0 0.0
    %1250 = vmatprep.subr.mxu0 0.0
    %1251 = vmatpush1.xpose.msra.mxu0 0.0
    %1252 = vmatprep.subr.mxu0 0.0
    %1253 = vmatpush1.xpose.msra.mxu0 0.0
    %1254 = vmatprep.subr.mxu0 0.0
    %1255 = vmatpush1.xpose.msra.mxu0 0.0
    %1256 = vmatprep.subr.mxu0 0.0
    %1257 = vmatpush1.xpose.msra.mxu0 0.0
    %1258 = vmatprep.subr.mxu0 0.0
    %1259 = vmatpush1.xpose.msra.mxu0 0.0
    %1260 = vmatprep.subr.mxu0 0.0
    %1261 = vmatpush1.xpose.msra.mxu0 0.0
    %1262 = vmatprep.subr.mxu0 0.0
    %1263 = vmatpush1.xpose.msra.mxu0 0.0
    %1264 = vmatprep.subr.mxu0 0.0
    %1265 = vmatpush1.xpose.msra.mxu0 0.0
    %1266 = vmatprep.subr.mxu0 0.0
    %1267 = vmatpush1.xpose.msra.mxu0 0.0
    %1268 = vmatprep.subr.mxu0 0.0
    %1269 = vmatpush1.xpose.msra.mxu0 0.0
    %1270 = vmatprep.subr.mxu0 0.0
    %1271 = vmatpush1.xpose.msra.mxu0 %v1230
    %1272 = vmatprep.subr.mxu0 0.0
    %1273 = vmatpush2.xpose.msra.mxu0 0.0
    %1274 = vmatprep.subr.mxu0 0.0
    %1275 = vmatpush2.xpose.msra.mxu0 0.0
    %1276 = vmatprep.subr.mxu0 0.0
    %1277 = vmatpush2.xpose.msra.mxu0 0.0
    %1278 = vmatprep.subr.mxu0 0.0
    %1279 = vmatpush2.xpose.msra.mxu0 0.0
    %1280 = vmatprep.subr.mxu0 0.0
    %1281 = vmatpush2.xpose.msra.mxu0 0.0
    %1282 = vmatprep.subr.mxu0 0.0
    %1283 = vmatpush2.xpose.msra.mxu0 0.0
    %1284 = vmatprep.subr.mxu0 0.0
    %1285 = vmatpush2.xpose.msra.mxu0 0.0
    %1286 = vmatprep.subr.mxu0 0.0
    %1287 = vmatpush2.xpose.msra.mxu0 0.0
    %1288 = vmatprep.subr.mxu0 0.0
    %1289 = vmatpush2.xpose.msra.mxu0 0.0
    %1290 = vmatprep.subr.mxu0 0.0
    %1291 = vmatpush2.xpose.msra.mxu0 0.0
    %1292 = vmatprep.subr.mxu0 0.0
    %1293 = vmatpush2.xpose.msra.mxu0 0.0
    %1294 = vmatprep.subr.mxu0 0.0
    %1295 = vmatpush2.xpose.msra.mxu0 0.0
    %1296 = vmatprep.subr.mxu0 0.0
    %1297 = vmatpush2.xpose.msra.mxu0 0.0
    %1298 = vmatprep.subr.mxu0 0.0
    %1299 = vmatpush2.xpose.msra.mxu0 0.0
    %1300 = vmatprep.subr.mxu0 0.0
    %1301 = vmatpush2.xpose.msra.mxu0 0.0
    %1302 = vmatprep.subr.mxu0 0.0
    %1303 = vmatpush2.xpose.msra.mxu0 0.0
    %1304 = vmatprep.mubr.f32.mxu0 0.0
    %1305 = vmatmul.mubr.f32.gmra.mxu0 %v1111
    %v1306 = vpop.f32.mrf.mxu0
    %v1307 = vadd.f32 0.0, %v1306
    %v1308 = vpop.f32.mrf.mxu0
    %1309 = vdwg.mxu0
    %1310 = vmatprep.subr.mxu0 0.0
    %1311 = vmatpush1.xpose.msra.mxu0 0.0
    %1312 = vmatprep.subr.mxu0 0.0
    %1313 = vmatpush1.xpose.msra.mxu0 0.0
    %1314 = vmatprep.subr.mxu0 0.0
    %1315 = vmatpush1.xpose.msra.mxu0 0.0
    %1316 = vmatprep.subr.mxu0 0.0
    %1317 = vmatpush1.xpose.msra.mxu0 0.0
    %1318 = vmatprep.subr.mxu0 0.0
    %1319 = vmatpush1.xpose.msra.mxu0 0.0
    %1320 = vmatprep.subr.mxu0 0.0
    %1321 = vmatpush1.xpose.msra.mxu0 0.0
    %1322 = vmatprep.subr.mxu0 0.0
    %1323 = vmatpush1.xpose.msra.mxu0 0.0
    %1324 = vmatprep.subr.mxu0 0.0
    %1325 = vmatpush1.xpose.msra.mxu0 0.0
    %1326 = vmatprep.subr.mxu0 0.0
    %1327 = vmatpush1.xpose.msra.mxu0 0.0
    %1328 = vmatprep.subr.mxu0 0.0
    %1329 = vmatpush1.xpose.msra.mxu0 0.0
    %1330 = vmatprep.subr.mxu0 0.0
    %1331 = vmatpush1.xpose.msra.mxu0 0.0
    %1332 = vmatprep.subr.mxu0 0.0
    %1333 = vmatpush1.xpose.msra.mxu0 0.0
    %1334 = vmatprep.subr.mxu0 0.0
    %1335 = vmatpush1.xpose.msra.mxu0 0.0
    %1336 = vmatprep.subr.mxu0 0.0
    %1337 = vmatpush1.xpose.msra.mxu0 0.0
    %1338 = vmatprep.subr.mxu0 0.0
    %1339 = vmatpush1.xpose.msra.mxu0 0.0
    %1340 = vmatprep.subr.mxu0 0.0
    %1341 = vmatpush1.xpose.msra.mxu0 %v1236
    %1342 = vmatprep.subr.mxu0 0.0
    %1343 = vmatpush2.xpose.msra.mxu0 0.0
    %1344 = vmatprep.subr.mxu0 0.0
    %1345 = vmatpush2.xpose.msra.mxu0 0.0
    %1346 = vmatprep.subr.mxu0 0.0
    %1347 = vmatpush2.xpose.msra.mxu0 0.0
    %1348 = vmatprep.subr.mxu0 0.0
    %1349 = vmatpush2.xpose.msra.mxu0 0.0
    %1350 = vmatprep.subr.mxu0 0.0
    %1351 = vmatpush2.xpose.msra.mxu0 0.0
    %1352 = vmatprep.subr.mxu0 0.0
    %1353 = vmatpush2.xpose.msra.mxu0 0.0
    %1354 = vmatprep.subr.mxu0 0.0
    %1355 = vmatpush2.xpose.msra.mxu0 0.0
    %1356 = vmatprep.subr.mxu0 0.0
    %1357 = vmatpush2.xpose.msra.mxu0 0.0
    %1358 = vmatprep.subr.mxu0 0.0
    %1359 = vmatpush2.xpose.msra.mxu0 0.0
    %1360 = vmatprep.subr.mxu0 0.0
    %1361 = vmatpush2.xpose.msra.mxu0 0.0
    %1362 = vmatprep.subr.mxu0 0.0
    %1363 = vmatpush2.xpose.msra.mxu0 0.0
    %1364 = vmatprep.subr.mxu0 0.0
    %1365 = vmatpush2.xpose.msra.mxu0 0.0
    %1366 = vmatprep.subr.mxu0 0.0
    %1367 = vmatpush2.xpose.msra.mxu0 0.0
    %1368 = vmatprep.subr.mxu0 0.0
    %1369 = vmatpush2.xpose.msra.mxu0 0.0
    %1370 = vmatprep.subr.mxu0 0.0
    %1371 = vmatpush2.xpose.msra.mxu0 0.0
    %1372 = vmatprep.subr.mxu0 0.0
    %1373 = vmatpush2.xpose.msra.mxu0 0.0
    %1374 = vmatprep.mubr.f32.mxu0 0.0
    %1375 = vmatmul.mubr.f32.gmra.mxu0 %v1116
    %v1376 = vpop.f32.mrf.mxu0
    %v1377 = vadd.f32 0.0, %v1376
    %v1378 = vpop.f32.mrf.mxu0
    %1379 = vdwg.mxu0
    %v1380 = vsel %vm750, %v1307, -inf
    %1381 = vmax.xlane.f32.xlu0 %v1380
    %v1382 = vpop.xlane.xlu0 %1381
    %v1383 = vsel %vm750, %v1377, -inf
    %1384 = vmax.xlane.f32.xlu0 %v1383
    %v1385 = vpop.xlane.xlu0 %1384
    %v1386 = vsub.f32 %v1307, %v1382
    %v1387 = vsub.f32 %v1377, %v1385
    %v1388 = vmul.f32 %v1386, 1.442695
    %v1389 = vpow.pop %v1388
    %v1390 = vmul.f32 %v1387, 1.442695
    %v1391 = vpow.pop %v1390
    %v1392 = vsel %vm750, %v1389, 0.0
    %1393 = vadd.xlane.f32.xlu0 %v1392
    %v1394 = vpop.xlane.xlu0 %1393
    %v1395 = vsel %vm750, %v1391, 0.0
    %1396 = vadd.xlane.f32.xlu0 %v1395
    %v1397 = vpop.xlane.xlu0 %1396
    %v1398 = vrcp.pop %v1394
    %v1399 = vrcp.pop %v1397
    %v1400 = vmul.f32 %v1389, %v1398
    %v1401 = vmul.f32 %v1391, %v1399
    %v1403 = vsel %vm750, %v1400, 0
    %1405 = vmatprep.subr.mxu0 0.0
    %1406 = vmatpush1.msra.mxu0 0.0
    %1407 = vmatprep.subr.mxu0 0.0
    %1408 = vmatpush1.msra.mxu0 0.0
    %1409 = vmatprep.subr.mxu0 0.0
    %1410 = vmatpush1.msra.mxu0 0.0
    %1411 = vmatprep.subr.mxu0 0.0
    %1412 = vmatpush1.msra.mxu0 0.0
    %1413 = vmatprep.subr.mxu0 0.0
    %1414 = vmatpush1.msra.mxu0 0.0
    %1415 = vmatprep.subr.mxu0 0.0
    %1416 = vmatpush1.msra.mxu0 0.0
    %1417 = vmatprep.subr.mxu0 0.0
    %1418 = vmatpush1.msra.mxu0 0.0
    %1419 = vmatprep.subr.mxu0 0.0
    %1420 = vmatpush1.msra.mxu0 0.0
    %1421 = vmatprep.subr.mxu0 0.0
    %1422 = vmatpush1.msra.mxu0 0.0
    %1423 = vmatprep.subr.mxu0 0.0
    %1424 = vmatpush1.msra.mxu0 0.0
    %1425 = vmatprep.subr.mxu0 0.0
    %1426 = vmatpush1.msra.mxu0 0.0
    %1427 = vmatprep.subr.mxu0 0.0
    %1428 = vmatpush1.msra.mxu0 0.0
    %1429 = vmatprep.subr.mxu0 0.0
    %1430 = vmatpush1.msra.mxu0 0.0
    %1431 = vmatprep.subr.mxu0 0.0
    %1432 = vmatpush1.msra.mxu0 0.0
    %1433 = vmatprep.subr.mxu0 0.0
    %1434 = vmatpush1.msra.mxu0 0.0
    %1435 = vmatprep.subr.mxu0 0.0
    %1436 = vmatpush1.msra.mxu0 %v1232
    %1437 = vmatprep.subr.mxu0 0.0
    %1438 = vmatpush2.msra.mxu0 0.0
    %1439 = vmatprep.subr.mxu0 0.0
    %1440 = vmatpush2.msra.mxu0 0.0
    %1441 = vmatprep.subr.mxu0 0.0
    %1442 = vmatpush2.msra.mxu0 0.0
    %1443 = vmatprep.subr.mxu0 0.0
    %1444 = vmatpush2.msra.mxu0 0.0
    %1445 = vmatprep.subr.mxu0 0.0
    %1446 = vmatpush2.msra.mxu0 0.0
    %1447 = vmatprep.subr.mxu0 0.0
    %1448 = vmatpush2.msra.mxu0 0.0
    %1449 = vmatprep.subr.mxu0 0.0
    %1450 = vmatpush2.msra.mxu0 0.0
    %1451 = vmatprep.subr.mxu0 0.0
    %1452 = vmatpush2.msra.mxu0 0.0
    %1453 = vmatprep.subr.mxu0 0.0
    %1454 = vmatpush2.msra.mxu0 0.0
    %1455 = vmatprep.subr.mxu0 0.0
    %1456 = vmatpush2.msra.mxu0 0.0
    %1457 = vmatprep.subr.mxu0 0.0
    %1458 = vmatpush2.msra.mxu0 0.0
    %1459 = vmatprep.subr.mxu0 0.0
    %1460 = vmatpush2.msra.mxu0 0.0
    %1461 = vmatprep.subr.mxu0 0.0
    %1462 = vmatpush2.msra.mxu0 0.0
    %1463 = vmatprep.subr.mxu0 0.0
    %1464 = vmatpush2.msra.mxu0 0.0
    %1465 = vmatprep.subr.mxu0 0.0
    %1466 = vmatpush2.msra.mxu0 0.0
    %1467 = vmatprep.subr.mxu0 0.0
    %1468 = vmatpush2.msra.mxu0 0.0
    %1469 = vmatprep.mubr.f32.mxu0 0.0
    %1470 = vmatmul.mubr.f32.gmra.mxu0 %v1403
    %v1471 = vpop.f32.mrf.mxu0
    %v1472 = vadd.f32 0.0, %v1471
    %v1473 = vpop.f32.mrf.mxu0
    %1474 = vdwg.mxu0
    %v1476 = vsel %vm750, %v1401, 0
    %1478 = vmatprep.subr.mxu0 0.0
    %1479 = vmatpush1.msra.mxu0 0.0
    %1480 = vmatprep.subr.mxu0 0.0
    %1481 = vmatpush1.msra.mxu0 0.0
    %1482 = vmatprep.subr.mxu0 0.0
    %1483 = vmatpush1.msra.mxu0 0.0
    %1484 = vmatprep.subr.mxu0 0.0
    %1485 = vmatpush1.msra.mxu0 0.0
    %1486 = vmatprep.subr.mxu0 0.0
    %1487 = vmatpush1.msra.mxu0 0.0
    %1488 = vmatprep.subr.mxu0 0.0
    %1489 = vmatpush1.msra.mxu0 0.0
    %1490 = vmatprep.subr.mxu0 0.0
    %1491 = vmatpush1.msra.mxu0 0.0
    %1492 = vmatprep.subr.mxu0 0.0
    %1493 = vmatpush1.msra.mxu0 0.0
    %1494 = vmatprep.subr.mxu0 0.0
    %1495 = vmatpush1.msra.mxu0 0.0
    %1496 = vmatprep.subr.mxu0 0.0
    %1497 = vmatpush1.msra.mxu0 0.0
    %1498 = vmatprep.subr.mxu0 0.0
    %1499 = vmatpush1.msra.mxu0 0.0
    %1500 = vmatprep.subr.mxu0 0.0
    %1501 = vmatpush1.msra.mxu0 0.0
    %1502 = vmatprep.subr.mxu0 0.0
    %1503 = vmatpush1.msra.mxu0 0.0
    %1504 = vmatprep.subr.mxu0 0.0
    %1505 = vmatpush1.msra.mxu0 0.0
    %1506 = vmatprep.subr.mxu0 0.0
    %1507 = vmatpush1.msra.mxu0 0.0
    %1508 = vmatprep.subr.mxu0 0.0
    %1509 = vmatpush1.msra.mxu0 %v1238
    %1510 = vmatprep.subr.mxu0 0.0
    %1511 = vmatpush2.msra.mxu0 0.0
    %1512 = vmatprep.subr.mxu0 0.0
    %1513 = vmatpush2.msra.mxu0 0.0
    %1514 = vmatprep.subr.mxu0 0.0
    %1515 = vmatpush2.msra.mxu0 0.0
    %1516 = vmatprep.subr.mxu0 0.0
    %1517 = vmatpush2.msra.mxu0 0.0
    %1518 = vmatprep.subr.mxu0 0.0
    %1519 = vmatpush2.msra.mxu0 0.0
    %1520 = vmatprep.subr.mxu0 0.0
    %1521 = vmatpush2.msra.mxu0 0.0
    %1522 = vmatprep.subr.mxu0 0.0
    %1523 = vmatpush2.msra.mxu0 0.0
    %1524 = vmatprep.subr.mxu0 0.0
    %1525 = vmatpush2.msra.mxu0 0.0
    %1526 = vmatprep.subr.mxu0 0.0
    %1527 = vmatpush2.msra.mxu0 0.0
    %1528 = vmatprep.subr.mxu0 0.0
    %1529 = vmatpush2.msra.mxu0 0.0
    %1530 = vmatprep.subr.mxu0 0.0
    %1531 = vmatpush2.msra.mxu0 0.0
    %1532 = vmatprep.subr.mxu0 0.0
    %1533 = vmatpush2.msra.mxu0 0.0
    %1534 = vmatprep.subr.mxu0 0.0
    %1535 = vmatpush2.msra.mxu0 0.0
    %1536 = vmatprep.subr.mxu0 0.0
    %1537 = vmatpush2.msra.mxu0 0.0
    %1538 = vmatprep.subr.mxu0 0.0
    %1539 = vmatpush2.msra.mxu0 0.0
    %1540 = vmatprep.subr.mxu0 0.0
    %1541 = vmatpush2.msra.mxu0 0.0
    %1542 = vmatprep.mubr.f32.mxu0 0.0
    %1543 = vmatmul.mubr.f32.gmra.mxu0 %v1476
    %v1544 = vpop.f32.mrf.mxu0
    %v1545 = vadd.f32 0.0, %v1544
    %v1546 = vpop.f32.mrf.mxu0
    %1547 = vdwg.mxu0
    %v1548 = vld [vmem:[#allocation10] sm:$0xff]
    %v1549 = vld [vmem:[#allocation10 + $0x8] sm:$0xff]
    %v1550 = vld [vmem:[#allocation10 + $0x10] sm:$0xff]
    %v1551 = vld [vmem:[#allocation10 + $0x18] sm:$0xff]
    %v1552 = vld [vmem:[#allocation10 + $0x20] sm:$0xff]
    %v1553 = vld [vmem:[#allocation10 + $0x28] sm:$0xff]
    %v1554 = vld [vmem:[#allocation10 + $0x30] sm:$0xff]
    %v1555 = vld [vmem:[#allocation10 + $0x38] sm:$0xff]
    %v1556 = vld [vmem:[#allocation10 + $0x40] sm:$0xff]
    %v1557 = vld [vmem:[#allocation10 + $0x48] sm:$0xff]
    %v1558 = vld [vmem:[#allocation10 + $0x50] sm:$0xff]
    %v1559 = vld [vmem:[#allocation10 + $0x58] sm:$0xff]
    %v1560 = vld [vmem:[#allocation10 + $0x60] sm:$0xff]
    %v1561 = vld [vmem:[#allocation10 + $0x68] sm:$0xff]
    %v1562 = vld [vmem:[#allocation10 + $0x70] sm:$0xff]
    %v1563 = vld [vmem:[#allocation10 + $0x78] sm:$0xff]
    %1564 = vmatprep.subr.mxu0 0.0
    %1565 = vmatpush1.msra.mxu0 %v1563
    %1566 = vmatprep.subr.mxu0 0.0
    %1567 = vmatpush1.msra.mxu0 %v1562
    %1568 = vmatprep.subr.mxu0 0.0
    %1569 = vmatpush1.msra.mxu0 %v1561
    %1570 = vmatprep.subr.mxu0 0.0
    %1571 = vmatpush1.msra.mxu0 %v1560
    %1572 = vmatprep.subr.mxu0 0.0
    %1573 = vmatpush1.msra.mxu0 %v1559
    %1574 = vmatprep.subr.mxu0 0.0
    %1575 = vmatpush1.msra.mxu0 %v1558
    %1576 = vmatprep.subr.mxu0 0.0
    %1577 = vmatpush1.msra.mxu0 %v1557
    %1578 = vmatprep.subr.mxu0 0.0
    %1579 = vmatpush1.msra.mxu0 %v1556
    %1580 = vmatprep.subr.mxu0 0.0
    %1581 = vmatpush1.msra.mxu0 %v1555
    %1582 = vmatprep.subr.mxu0 0.0
    %1583 = vmatpush1.msra.mxu0 %v1554
    %1584 = vmatprep.subr.mxu0 0.0
    %1585 = vmatpush1.msra.mxu0 %v1553
    %1586 = vmatprep.subr.mxu0 0.0
    %1587 = vmatpush1.msra.mxu0 %v1552
    %1588 = vmatprep.subr.mxu0 0.0
    %1589 = vmatpush1.msra.mxu0 %v1551
    %1590 = vmatprep.subr.mxu0 0.0
    %1591 = vmatpush1.msra.mxu0 %v1550
    %1592 = vmatprep.subr.mxu0 0.0
    %1593 = vmatpush1.msra.mxu0 %v1549
    %1594 = vmatprep.subr.mxu0 0.0
    %1595 = vmatpush1.msra.mxu0 %v1548
    %1596 = vmatprep.subr.mxu0 0.0
    %1597 = vmatpush2.msra.mxu0 0.0
    %1598 = vmatprep.subr.mxu0 0.0
    %1599 = vmatpush2.msra.mxu0 0.0
    %1600 = vmatprep.subr.mxu0 0.0
    %1601 = vmatpush2.msra.mxu0 0.0
    %1602 = vmatprep.subr.mxu0 0.0
    %1603 = vmatpush2.msra.mxu0 0.0
    %1604 = vmatprep.subr.mxu0 0.0
    %1605 = vmatpush2.msra.mxu0 0.0
    %1606 = vmatprep.subr.mxu0 0.0
    %1607 = vmatpush2.msra.mxu0 0.0
    %1608 = vmatprep.subr.mxu0 0.0
    %1609 = vmatpush2.msra.mxu0 0.0
    %1610 = vmatprep.subr.mxu0 0.0
    %1611 = vmatpush2.msra.mxu0 0.0
    %1612 = vmatprep.subr.mxu0 0.0
    %1613 = vmatpush2.msra.mxu0 0.0
    %1614 = vmatprep.subr.mxu0 0.0
    %1615 = vmatpush2.msra.mxu0 0.0
    %1616 = vmatprep.subr.mxu0 0.0
    %1617 = vmatpush2.msra.mxu0 0.0
    %1618 = vmatprep.subr.mxu0 0.0
    %1619 = vmatpush2.msra.mxu0 0.0
    %1620 = vmatprep.subr.mxu0 0.0
    %1621 = vmatpush2.msra.mxu0 0.0
    %1622 = vmatprep.subr.mxu0 0.0
    %1623 = vmatpush2.msra.mxu0 0.0
    %1624 = vmatprep.subr.mxu0 0.0
    %1625 = vmatpush2.msra.mxu0 0.0
    %1626 = vmatprep.subr.mxu0 0.0
    %1627 = vmatpush2.msra.mxu0 0.0
    %1628 = vmatprep.mubr.f32.mxu0 0.0
    %1629 = vmatmul.mubr.f32.gmra.mxu0 %v1472
    %v1630 = vpop.f32.mrf.mxu0
    %v1631 = vadd.f32 0.0, %v1630
    %v1632 = vpop.f32.mrf.mxu0
    %1633 = vmatprep.mubr.f32.mxu0 0.0
    %1634 = vmatmul.mubr.f32.gmra.mxu0 %v1545
    %v1635 = vpop.f32.mrf.mxu0
    %v1636 = vadd.f32 0.0, %v1635
    %v1637 = vpop.f32.mrf.mxu0
    %1638 = vdwg.mxu0
    %v1639 = vadd.f32 %v385, %v1631
    %v1640 = vadd.f32 %v390, %v1636
    %v1641 = vld [vmem:[%s15] sm:$0x1]
    %v1643 = vlaneseq
    %v1644 = vshrl.u32 %v1643, 7
    %v1645 = vsub.s32 0, %v1644
    %v1646 = vrot.slane %v1641, %v1645
    %v1648 = vadd.f32 %v1639, %v1646
    %v1649 = vadd.f32 %v1640, %v1646
    %v1650 = vld [vmem:[#allocation12] sm:$0xff]
    %v1651 = vld [vmem:[#allocation12 + $0x8] sm:$0xff]
    %v1652 = vld [vmem:[#allocation12 + $0x10] sm:$0xff]
    %v1653 = vld [vmem:[#allocation12 + $0x18] sm:$0xff]
    %v1654 = vld [vmem:[#allocation12 + $0x20] sm:$0xff]
    %v1655 = vld [vmem:[#allocation12 + $0x28] sm:$0xff]
    %v1656 = vld [vmem:[#allocation12 + $0x30] sm:$0xff]
    %v1657 = vld [vmem:[#allocation12 + $0x38] sm:$0xff]
    %v1658 = vld [vmem:[#allocation12 + $0x40] sm:$0xff]
    %v1659 = vld [vmem:[#allocation12 + $0x48] sm:$0xff]
    %v1660 = vld [vmem:[#allocation12 + $0x50] sm:$0xff]
    %v1661 = vld [vmem:[#allocation12 + $0x58] sm:$0xff]
    %v1662 = vld [vmem:[#allocation12 + $0x60] sm:$0xff]
    %v1663 = vld [vmem:[#allocation12 + $0x68] sm:$0xff]
    %v1664 = vld [vmem:[#allocation12 + $0x70] sm:$0xff]
    %v1665 = vld [vmem:[#allocation12 + $0x78] sm:$0xff]
    %v1666 = vld [vmem:[%s17] sm:$0x1]
    %v1668 = vlaneseq
    %v1669 = vshrl.u32 %v1668, 7
    %v1670 = vsub.s32 0, %v1669
    %v1671 = vrot.slane %v1666, %v1670
    %1673 = vmatprep.subr.mxu0 0.0
    %1674 = vmatpush1.msra.mxu0 %v1665
    %1675 = vmatprep.subr.mxu0 0.0
    %1676 = vmatpush1.msra.mxu0 %v1664
    %1677 = vmatprep.subr.mxu0 0.0
    %1678 = vmatpush1.msra.mxu0 %v1663
    %1679 = vmatprep.subr.mxu0 0.0
    %1680 = vmatpush1.msra.mxu0 %v1662
    %1681 = vmatprep.subr.mxu0 0.0
    %1682 = vmatpush1.msra.mxu0 %v1661
    %1683 = vmatprep.subr.mxu0 0.0
    %1684 = vmatpush1.msra.mxu0 %v1660
    %1685 = vmatprep.subr.mxu0 0.0
    %1686 = vmatpush1.msra.mxu0 %v1659
    %1687 = vmatprep.subr.mxu0 0.0
    %1688 = vmatpush1.msra.mxu0 %v1658
    %1689 = vmatprep.subr.mxu0 0.0
    %1690 = vmatpush1.msra.mxu0 %v1657
    %1691 = vmatprep.subr.mxu0 0.0
    %1692 = vmatpush1.msra.mxu0 %v1656
    %1693 = vmatprep.subr.mxu0 0.0
    %1694 = vmatpush1.msra.mxu0 %v1655
    %1695 = vmatprep.subr.mxu0 0.0
    %1696 = vmatpush1.msra.mxu0 %v1654
    %1697 = vmatprep.subr.mxu0 0.0
    %1698 = vmatpush1.msra.mxu0 %v1653
    %1699 = vmatprep.subr.mxu0 0.0
    %1700 = vmatpush1.msra.mxu0 %v1652
    %1701 = vmatprep.subr.mxu0 0.0
    %1702 = vmatpush1.msra.mxu0 %v1651
    %1703 = vmatprep.subr.mxu0 0.0
    %1704 = vmatpush1.msra.mxu0 %v1650
    %1705 = vmatprep.subr.mxu0 0.0
    %1706 = vmatpush2.msra.mxu0 0.0
    %1707 = vmatprep.subr.mxu0 0.0
    %1708 = vmatpush2.msra.mxu0 0.0
    %1709 = vmatprep.subr.mxu0 0.0
    %1710 = vmatpush2.msra.mxu0 0.0
    %1711 = vmatprep.subr.mxu0 0.0
    %1712 = vmatpush2.msra.mxu0 0.0
    %1713 = vmatprep.subr.mxu0 0.0
    %1714 = vmatpush2.msra.mxu0 0.0
    %1715 = vmatprep.subr.mxu0 0.0
    %1716 = vmatpush2.msra.mxu0 0.0
    %1717 = vmatprep.subr.mxu0 0.0
    %1718 = vmatpush2.msra.mxu0 0.0
    %1719 = vmatprep.subr.mxu0 0.0
    %1720 = vmatpush2.msra.mxu0 0.0
    %1721 = vmatprep.subr.mxu0 0.0
    %1722 = vmatpush2.msra.mxu0 0.0
    %1723 = vmatprep.subr.mxu0 0.0
    %1724 = vmatpush2.msra.mxu0 0.0
    %1725 = vmatprep.subr.mxu0 0.0
    %1726 = vmatpush2.msra.mxu0 0.0
    %1727 = vmatprep.subr.mxu0 0.0
    %1728 = vmatpush2.msra.mxu0 0.0
    %1729 = vmatprep.subr.mxu0 0.0
    %1730 = vmatpush2.msra.mxu0 0.0
    %1731 = vmatprep.subr.mxu0 0.0
    %1732 = vmatpush2.msra.mxu0 0.0
    %1733 = vmatprep.subr.mxu0 0.0
    %1734 = vmatpush2.msra.mxu0 0.0
    %1735 = vmatprep.subr.mxu0 0.0
    %1736 = vmatpush2.msra.mxu0 0.0
    %1737 = vmatprep.mubr.f32.mxu0 0.0
    %1738 = vmatmul.mubr.f32.gmra.mxu0 %v1648
    %v1739 = vpop.f32.mrf.mxu0
    %v1740 = vadd.f32 %v1671, %v1739
    %v1741 = vpop.f32.mrf.mxu0
    %1742 = vmatprep.mubr.f32.mxu0 0.0
    %1743 = vmatmul.mubr.f32.gmra.mxu0 %v1649
    %v1744 = vpop.f32.mrf.mxu0
    %v1745 = vadd.f32 %v1671, %v1744
    %v1746 = vpop.f32.mrf.mxu0
    %1747 = vdwg.mxu0
    %v1748 = vmax.f32 %v1740, 0.0
    %v1749 = vmax.f32 %v1745, 0.0
    %v1750 = vld [vmem:[#allocation13] sm:$0xff]
    %v1751 = vld [vmem:[#allocation13 + $0x8] sm:$0xff]
    %v1752 = vld [vmem:[#allocation13 + $0x10] sm:$0xff]
    %v1753 = vld [vmem:[#allocation13 + $0x18] sm:$0xff]
    %v1754 = vld [vmem:[#allocation13 + $0x20] sm:$0xff]
    %v1755 = vld [vmem:[#allocation13 + $0x28] sm:$0xff]
    %v1756 = vld [vmem:[#allocation13 + $0x30] sm:$0xff]
    %v1757 = vld [vmem:[#allocation13 + $0x38] sm:$0xff]
    %v1758 = vld [vmem:[#allocation13 + $0x40] sm:$0xff]
    %v1759 = vld [vmem:[#allocation13 + $0x48] sm:$0xff]
    %v1760 = vld [vmem:[#allocation13 + $0x50] sm:$0xff]
    %v1761 = vld [vmem:[#allocation13 + $0x58] sm:$0xff]
    %v1762 = vld [vmem:[#allocation13 + $0x60] sm:$0xff]
    %v1763 = vld [vmem:[#allocation13 + $0x68] sm:$0xff]
    %v1764 = vld [vmem:[#allocation13 + $0x70] sm:$0xff]
    %v1765 = vld [vmem:[#allocation13 + $0x78] sm:$0xff]
    %1766 = vmatprep.subr.mxu0 0.0
    %1767 = vmatpush1.msra.mxu0 %v1765
    %1768 = vmatprep.subr.mxu0 0.0
    %1769 = vmatpush1.msra.mxu0 %v1764
    %1770 = vmatprep.subr.mxu0 0.0
    %1771 = vmatpush1.msra.mxu0 %v1763
    %1772 = vmatprep.subr.mxu0 0.0
    %1773 = vmatpush1.msra.mxu0 %v1762
    %1774 = vmatprep.subr.mxu0 0.0
    %1775 = vmatpush1.msra.mxu0 %v1761
    %1776 = vmatprep.subr.mxu0 0.0
    %1777 = vmatpush1.msra.mxu0 %v1760
    %1778 = vmatprep.subr.mxu0 0.0
    %1779 = vmatpush1.msra.mxu0 %v1759
    %1780 = vmatprep.subr.mxu0 0.0
    %1781 = vmatpush1.msra.mxu0 %v1758
    %1782 = vmatprep.subr.mxu0 0.0
    %1783 = vmatpush1.msra.mxu0 %v1757
    %1784 = vmatprep.subr.mxu0 0.0
    %1785 = vmatpush1.msra.mxu0 %v1756
    %1786 = vmatprep.subr.mxu0 0.0
    %1787 = vmatpush1.msra.mxu0 %v1755
    %1788 = vmatprep.subr.mxu0 0.0
    %1789 = vmatpush1.msra.mxu0 %v1754
    %1790 = vmatprep.subr.mxu0 0.0
    %1791 = vmatpush1.msra.mxu0 %v1753
    %1792 = vmatprep.subr.mxu0 0.0
    %1793 = vmatpush1.msra.mxu0 %v1752
    %1794 = vmatprep.subr.mxu0 0.0
    %1795 = vmatpush1.msra.mxu0 %v1751
    %1796 = vmatprep.subr.mxu0 0.0
    %1797 = vmatpush1.msra.mxu0 %v1750
    %1798 = vmatprep.subr.mxu0 0.0
    %1799 = vmatpush2.msra.mxu0 0.0
    %1800 = vmatprep.subr.mxu0 0.0
    %1801 = vmatpush2.msra.mxu0 0.0
    %1802 = vmatprep.subr.mxu0 0.0
    %1803 = vmatpush2.msra.mxu0 0.0
    %1804 = vmatprep.subr.mxu0 0.0
    %1805 = vmatpush2.msra.mxu0 0.0
    %1806 = vmatprep.subr.mxu0 0.0
    %1807 = vmatpush2.msra.mxu0 0.0
    %1808 = vmatprep.subr.mxu0 0.0
    %1809 = vmatpush2.msra.mxu0 0.0
    %1810 = vmatprep.subr.mxu0 0.0
    %1811 = vmatpush2.msra.mxu0 0.0
    %1812 = vmatprep.subr.mxu0 0.0
    %1813 = vmatpush2.msra.mxu0 0.0
    %1814 = vmatprep.subr.mxu0 0.0
    %1815 = vmatpush2.msra.mxu0 0.0
    %1816 = vmatprep.subr.mxu0 0.0
    %1817 = vmatpush2.msra.mxu0 0.0
    %1818 = vmatprep.subr.mxu0 0.0
    %1819 = vmatpush2.msra.mxu0 0.0
    %1820 = vmatprep.subr.mxu0 0.0
    %1821 = vmatpush2.msra.mxu0 0.0
    %1822 = vmatprep.subr.mxu0 0.0
    %1823 = vmatpush2.msra.mxu0 0.0
    %1824 = vmatprep.subr.mxu0 0.0
    %1825 = vmatpush2.msra.mxu0 0.0
    %1826 = vmatprep.subr.mxu0 0.0
    %1827 = vmatpush2.msra.mxu0 0.0
    %1828 = vmatprep.subr.mxu0 0.0
    %1829 = vmatpush2.msra.mxu0 0.0
    %1830 = vmatprep.mubr.f32.mxu0 0.0
    %1831 = vmatmul.mubr.f32.gmra.mxu0 %v1748
    %v1832 = vpop.f32.mrf.mxu0
    %v1833 = vadd.f32 0.0, %v1832
    %v1834 = vpop.f32.mrf.mxu0
    %1835 = vmatprep.mubr.f32.mxu0 0.0
    %1836 = vmatmul.mubr.f32.gmra.mxu0 %v1749
    %v1837 = vpop.f32.mrf.mxu0
    %v1838 = vadd.f32 0.0, %v1837
    %v1839 = vpop.f32.mrf.mxu0
    %1840 = vdwg.mxu0
    %v1841 = vadd.f32 %v1648, %v1833
    %v1842 = vadd.f32 %v1649, %v1838
    %v1843 = vld [vmem:[%s19] sm:$0x1]
    %v1845 = vlaneseq
    %v1846 = vshrl.u32 %v1845, 7
    %v1847 = vsub.s32 0, %v1846
    %v1848 = vrot.slane %v1843, %v1847
    %v1850 = vadd.f32 %v1841, %v1848
    %v1851 = vadd.f32 %v1842, %v1848
    %v1852 = vld [vmem:[#allocation15] sm:$0xff]
    %v1853 = vld [vmem:[#allocation15 + $0x8] sm:$0xff]
    %v1854 = vld [vmem:[#allocation15 + $0x10] sm:$0xff]
    %v1855 = vld [vmem:[#allocation15 + $0x18] sm:$0xff]
    %v1856 = vld [vmem:[#allocation15 + $0x20] sm:$0xff]
    %v1857 = vld [vmem:[#allocation15 + $0x28] sm:$0xff]
    %v1858 = vld [vmem:[#allocation15 + $0x30] sm:$0xff]
    %v1859 = vld [vmem:[#allocation15 + $0x38] sm:$0xff]
    %v1860 = vld [vmem:[#allocation15 + $0x40] sm:$0xff]
    %v1861 = vld [vmem:[#allocation15 + $0x48] sm:$0xff]
    %v1862 = vld [vmem:[#allocation15 + $0x50] sm:$0xff]
    %v1863 = vld [vmem:[#allocation15 + $0x58] sm:$0xff]
    %v1864 = vld [vmem:[#allocation15 + $0x60] sm:$0xff]
    %v1865 = vld [vmem:[#allocation15 + $0x68] sm:$0xff]
    %v1866 = vld [vmem:[#allocation15 + $0x70] sm:$0xff]
    %v1867 = vld [vmem:[#allocation15 + $0x78] sm:$0xff]
    %v1868 = vld [vmem:[%s21] sm:$0x1]
    %v1870 = vlaneseq
    %v1871 = vshrl.u32 %v1870, 7
    %v1872 = vsub.s32 0, %v1871
    %v1873 = vrot.slane %v1868, %v1872
    %1875 = vmatprep.subr.mxu0 0.0
    %1876 = vmatpush1.msra.mxu0 %v1867
    %1877 = vmatprep.subr.mxu0 0.0
    %1878 = vmatpush1.msra.mxu0 %v1866
    %1879 = vmatprep.subr.mxu0 0.0
    %1880 = vmatpush1.msra.mxu0 %v1865
    %1881 = vmatprep.subr.mxu0 0.0
    %1882 = vmatpush1.msra.mxu0 %v1864
    %1883 = vmatprep.subr.mxu0 0.0
    %1884 = vmatpush1.msra.mxu0 %v1863
    %1885 = vmatprep.subr.mxu0 0.0
    %1886 = vmatpush1.msra.mxu0 %v1862
    %1887 = vmatprep.subr.mxu0 0.0
    %1888 = vmatpush1.msra.mxu0 %v1861
    %1889 = vmatprep.subr.mxu0 0.0
    %1890 = vmatpush1.msra.mxu0 %v1860
    %1891 = vmatprep.subr.mxu0 0.0
    %1892 = vmatpush1.msra.mxu0 %v1859
    %1893 = vmatprep.subr.mxu0 0.0
    %1894 = vmatpush1.msra.mxu0 %v1858
    %1895 = vmatprep.subr.mxu0 0.0
    %1896 = vmatpush1.msra.mxu0 %v1857
    %1897 = vmatprep.subr.mxu0 0.0
    %1898 = vmatpush1.msra.mxu0 %v1856
    %1899 = vmatprep.subr.mxu0 0.0
    %1900 = vmatpush1.msra.mxu0 %v1855
    %1901 = vmatprep.subr.mxu0 0.0
    %1902 = vmatpush1.msra.mxu0 %v1854
    %1903 = vmatprep.subr.mxu0 0.0
    %1904 = vmatpush1.msra.mxu0 %v1853
    %1905 = vmatprep.subr.mxu0 0.0
    %1906 = vmatpush1.msra.mxu0 %v1852
    %1907 = vmatprep.subr.mxu0 0.0
    %1908 = vmatpush2.msra.mxu0 0.0
    %1909 = vmatprep.subr.mxu0 0.0
    %1910 = vmatpush2.msra.mxu0 0.0
    %1911 = vmatprep.subr.mxu0 0.0
    %1912 = vmatpush2.msra.mxu0 0.0
    %1913 = vmatprep.subr.mxu0 0.0
    %1914 = vmatpush2.msra.mxu0 0.0
    %1915 = vmatprep.subr.mxu0 0.0
    %1916 = vmatpush2.msra.mxu0 0.0
    %1917 = vmatprep.subr.mxu0 0.0
    %1918 = vmatpush2.msra.mxu0 0.0
    %1919 = vmatprep.subr.mxu0 0.0
    %1920 = vmatpush2.msra.mxu0 0.0
    %1921 = vmatprep.subr.mxu0 0.0
    %1922 = vmatpush2.msra.mxu0 0.0
    %1923 = vmatprep.subr.mxu0 0.0
    %1924 = vmatpush2.msra.mxu0 0.0
    %1925 = vmatprep.subr.mxu0 0.0
    %1926 = vmatpush2.msra.mxu0 0.0
    %1927 = vmatprep.subr.mxu0 0.0
    %1928 = vmatpush2.msra.mxu0 0.0
    %1929 = vmatprep.subr.mxu0 0.0
    %1930 = vmatpush2.msra.mxu0 0.0
    %1931 = vmatprep.subr.mxu0 0.0
    %1932 = vmatpush2.msra.mxu0 0.0
    %1933 = vmatprep.subr.mxu0 0.0
    %1934 = vmatpush2.msra.mxu0 0.0
    %1935 = vmatprep.subr.mxu0 0.0
    %1936 = vmatpush2.msra.mxu0 0.0
    %1937 = vmatprep.subr.mxu0 0.0
    %1938 = vmatpush2.msra.mxu0 0.0
    %1939 = vmatprep.mubr.f32.mxu0 0.0
    %1940 = vmatmul.mubr.f32.gmra.mxu0 %v1850
    %v1941 = vpop.f32.mrf.mxu0
    %v1942 = vadd.f32 %v1873, %v1941
    %v1943 = vpop.f32.mrf.mxu0
    %1944 = vmatprep.mubr.f32.mxu0 0.0
    %1945 = vmatmul.mubr.f32.gmra.mxu0 %v1851
    %v1946 = vpop.f32.mrf.mxu0
    %v1947 = vadd.f32 %v1873, %v1946
    %v1948 = vpop.f32.mrf.mxu0
    %1949 = vdwg.mxu0
    %v1950 = vlaneseq
    %v1951 = vand.u32 %v1950, 127
    %vm1952 = vcmp.ge.s32.totalorder %v1951, 4
    %vm1953 = vcmp.lt.s32.totalorder %v1951, 8
    %vm1954 = vmand %vm1952, %vm1953
    %vm1955 = vcmp.gt.f32.partialorder %v1942, 20.0
    %vm1956 = vcmp.gt.f32.partialorder %v1947, 20.0
    %v1957 = vmin.f32 %v1942, 20.0
    %v1958 = vmin.f32 %v1947, 20.0
    %v1959 = vmul.f32 %v1957, 1.442695
    %v1960 = vpow.pop %v1959
    %v1961 = vmul.f32 %v1958, 1.442695
    %v1962 = vpow.pop %v1961
    %v1963 = vadd.f32 %v1960, 1.0
    %v1964 = vlog2.pop %v1963
    %v1965 = vmul.f32 %v1964, 0.6931472
    %v1966 = vmul.f32 -0.5, %v1960
    %v1967 = vadd.f32 %v1966, 1.0
    %v1968 = vmul.f32 %v1967, %v1960
    %v1969 = vand.u32 2147483647, %v1960
    %vm1970 = vcmp.lt.f32.partialorder %v1969, 0.0004427343
    %v1971 = vsel %vm1970, %v1968, %v1965
    %v1972 = vadd.f32 %v1962, 1.0
    %v1973 = vlog2.pop %v1972
    %v1974 = vmul.f32 %v1973, 0.6931472
    %v1975 = vmul.f32 -0.5, %v1962
    %v1976 = vadd.f32 %v1975, 1.0
    %v1977 = vmul.f32 %v1976, %v1962
    %v1978 = vand.u32 2147483647, %v1962
    %vm1979 = vcmp.lt.f32.partialorder %v1978, 0.0004427343
    %v1980 = vsel %vm1979, %v1977, %v1974
    %v1981 = vsel %vm1955, %v1942, %v1971
    %v1982 = vsel %vm1956, %v1947, %v1980
    %v1983 = vadd.f32 %v1981, 1e-06
    %v1984 = vadd.f32 %v1982, 1e-06
    %v1985 = vsel %vm1954, %v1983, %v1942
    %v1986 = vsel %vm1954, %v1984, %v1947
    %1987 = vst [vmem:[%s22] sm:$0xff] %v1985
    %1988 = vst [vmem:[%s22 + $0x8] sm:$0xff] %v1986
    // Predicated region
    $region126: #{model_forward.2} parent=1 // pred_check
      _
    $region127: #{model_forward.2} parent=1 // pred_check_branch
      %1990 = sbr.rel (0) target = $region129
    $region128: #{model_forward.2} parent=1 // pred_region
      _
    $region129: #{model_forward.2} parent=1 // pred_fallthru
      _
    // Predicated region
    $region130: #{model_forward.2} parent=1 // pred_check
      _
    $region131: #{model_forward.2} parent=1 // pred_check_branch
      %1992 = sbr.rel (0) target = $region133
    $region132: #{model_forward.2} parent=1 // pred_region
      _
    $region133: #{model_forward.2} parent=1 // pred_fallthru
      _
    %1993 = vsyncpa [#allocation3], 1
    %1994 = vsyncpa [#allocation5], 1
    %1995 = vsyncpa [#allocation8], 1
    %1996 = vsyncpa [#allocation11], 1
    %1997 = vsyncpa [#allocation14], 1

</llo_original>
